<compile_context>
chip_gen: v7x
topology: tpu7x:2x2x1
jax: 0.10.0
libtpu: 0.0.40
codegen_flags: <defaults>
</compile_context>

<pallas_src>
import functools

import numpy as np
import jax
import jax.numpy as jnp
from jax.experimental import pallas as pl
from jax.experimental.pallas import tpu as pltpu


# ------------------------------ Pallas kernel --------------------------------
def _conv_bn_act_kernel(x_ref, w_ref, b_ref, o_ref, *, Ho, Wo, K, stride, act):
    """Fused KxK conv (pre-padded NHWC input, groups=1, BN scale folded into
    weights) + per-channel bias + activation.  One image per grid step.
    Output is stored transposed as (Cout, Ho*Wo) -> lane-dense NCHW layout."""
    x = x_ref[0]            # (Hp, Wp, Cin)  halo-padded NHWC tile
    w = w_ref[...]          # (K*K, Cin, Cout)  BN scale already folded in
    cin = x.shape[-1]
    cout = w.shape[-1]

    acc = jnp.zeros((Ho * Wo, cout), jnp.float32)
    for ky in range(K):
        for kx in range(K):
            if stride == 1:
                patch = x[ky:ky + Ho, kx:kx + Wo, :]
            else:  # compute only the strided output positions (no waste)
                patch = x[ky:ky + stride * (Ho - 1) + 1:stride,
                          kx:kx + stride * (Wo - 1) + 1:stride, :]
            acc = acc + jnp.dot(patch.reshape(Ho * Wo, cin).astype(jnp.float32),
                                w[ky * K + kx].astype(jnp.float32),
                                preferred_element_type=jnp.float32)

    # Folded-BN bias + SiLU epilogue, all in f32 (EUP handles the sigmoid).
    acc = acc + b_ref[...]                       # (1, Cout) sublane-broadcast
    if act == "silu":
        acc = acc * jax.nn.sigmoid(acc)

    # (Ho*Wo, Cout) -> (Cout, Ho*Wo): one XLU transpose so the HBM store is
    # lane-dense and already in (flattened) NCHW order.
    o_ref[0] = acc.T.astype(o_ref.dtype)


# ------------------------------ wrapper ---------------------------------------
def conv_norm_act(x_nchw, w_oihw, bn_gamma, bn_beta, bn_mean, bn_var,
                  *, stride=1, eps=1e-5, act="silu"):
    """ConvNormAct forward: Conv2d(K, stride, pad=(K-1)//2, bias=False) ->
    BatchNorm2d(eval) -> SiLU.  Input/output are NCHW (PyTorch convention)."""
    B, Cin, H, W = x_nchw.shape
    Cout, Cin2, K, K2 = w_oihw.shape
    assert Cin == Cin2 and K == K2
    pad = (K - 1) // 2
    Ho = (H + 2 * pad - K) // stride + 1
    Wo = (W + 2 * pad - K) // stride + 1

    # Fold eval-mode BatchNorm: scale goes into the weights, bias stays.
    scale = bn_gamma * jax.lax.rsqrt(bn_var + eps)            # (Cout,)
    bias = bn_beta - bn_mean * scale                          # (Cout,)
    w_folded = (w_oihw.astype(jnp.float32)
                * scale.astype(jnp.float32)[:, None, None, None])

    # NCHW -> NHWC (channels on the lane axis), halo-pad once.
    x = jnp.transpose(x_nchw, (0, 2, 3, 1))
    x = jnp.pad(x, ((0, 0), (pad, pad), (pad, pad), (0, 0)))
    Hp, Wp = H + 2 * pad, W + 2 * pad

    # (Cout, Cin, K, K) -> (K*K, Cin, Cout), tap order (ky, kx).
    w = jnp.transpose(w_folded, (2, 3, 1, 0)).reshape(K * K, Cin, Cout)

    out_flat = pl.pallas_call(
        functools.partial(_conv_bn_act_kernel,
                          Ho=Ho, Wo=Wo, K=K, stride=stride, act=act),
        out_shape=jax.ShapeDtypeStruct((B, Cout, Ho * Wo), x_nchw.dtype),
        grid=(B,),
        in_specs=[
            pl.BlockSpec((1, Hp, Wp, Cin), lambda b: (b, 0, 0, 0)),
            pl.BlockSpec((K * K, Cin, Cout), lambda b: (0, 0, 0)),
            pl.BlockSpec((1, Cout), lambda b: (0, 0)),
        ],
        out_specs=pl.BlockSpec((1, Cout, Ho * Wo), lambda b: (b, 0, 0)),
        compiler_params=pltpu.CompilerParams(
            dimension_semantics=("parallel",)),   # megacore split on v7x
    )(x, w, bias.reshape(1, Cout).astype(jnp.float32))

    # Free metadata reshape: the kernel already produced NCHW-ordered data.
    return out_flat.reshape(B, Cout, Ho, Wo)


# ------------------------------ pure-JAX reference ----------------------------
def _reference(x_nchw, w_oihw, gamma, beta, mean, var, *, stride=1, eps=1e-5):
    x = jnp.transpose(x_nchw, (0, 2, 3, 1))
    Cout, Cin, K, _ = w_oihw.shape
    pad = (K - 1) // 2
    xp = jnp.pad(x, ((0, 0), (pad, pad), (pad, pad), (0, 0)))
    B, H, W, _ = x.shape
    Ho = (H + 2 * pad - K) // stride + 1
    Wo = (W + 2 * pad - K) // stride + 1
    w = jnp.transpose(w_oihw, (2, 3, 1, 0))       # (K, K, Cin, Cout)
    acc = jnp.zeros((B, Ho, Wo, Cout), jnp.float32)
    for ky in range(K):
        for kx in range(K):
            patch = xp[:, ky:ky + stride * (Ho - 1) + 1:stride,
                       kx:kx + stride * (Wo - 1) + 1:stride, :]
            acc = acc + jnp.einsum("bhwc,co->bhwo", patch, w[ky, kx],
                                   precision=jax.lax.Precision.HIGHEST)
    scale = gamma * jax.lax.rsqrt(var + eps)
    bias = beta - mean * scale
    acc = acc * scale + bias
    acc = acc * jax.nn.sigmoid(acc)
    return jnp.transpose(acc, (0, 3, 1, 2))


# ---------------------------------- main ---------------------------------------
if __name__ == "__main__":
    key = jax.random.PRNGKey(0)
    k_x, k_w, k_g, k_b = jax.random.split(key, 4)

    B, CIN, H, W = 2, 4, 16, 16
    COUT, K = 32, 3

    x = jax.random.normal(k_x, (B, CIN, H, W), jnp.float32)
    w = jax.random.normal(k_w, (COUT, CIN, K, K), jnp.float32) / np.sqrt(CIN * K * K)
    # BN params: PyTorch-style fresh running stats (mean=0, var=1) with slightly
    # perturbed affine params so the folded scale/bias path is exercised.
    gamma = 1.0 + 0.1 * jax.random.normal(k_g, (COUT,), jnp.float32)
    beta = 0.1 * jax.random.normal(k_b, (COUT,), jnp.float32)
    mean = jnp.zeros((COUT,), jnp.float32)
    var = jnp.ones((COUT,), jnp.float32)

    fwd = jax.jit(functools.partial(conv_norm_act, stride=1))
    out = jax.block_until_ready(fwd(x, w, gamma, beta, mean, var))

    assert out.shape == (B, COUT, H, W), out.shape
    assert bool(jnp.all(jnp.isfinite(out)))

    ref = _reference(x, w, gamma, beta, mean, var, stride=1)
    max_err = float(jnp.max(jnp.abs(out - ref)))
    assert max_err < 1e-2, f"max abs err {max_err}"

    print("KERNEL_OK")
</pallas_src>

<mosaic_0001>
module attributes {stable_mosaic.version = 11 : i64} {
  func.func @_conv_bn_act_kernel(%arg0: i32, %arg1: memref<1x18x18x4xf32, #tpu.memory_space<vmem>>, %arg2: memref<9x4x32xf32, #tpu.memory_space<vmem>>, %arg3: memref<1x32xf32, #tpu.memory_space<vmem>>, %arg4: memref<1x32x256xf32, #tpu.memory_space<vmem>>) attributes {dimension_semantics = [#tpu.dimension_semantics<parallel>], iteration_bounds = array<i64: 2>, scalar_prefetch = 0 : i64, scratch_operands = 0 : i64, tpu.core_type = #tpu.core_type<tc>, window_params = [{transform_indices = @transform_0, window_bounds = array<i64: 1, 18, 18, 4>}, {pipeline_mode = #tpu.pipeline_mode<synchronous>, transform_indices = @transform_1, window_bounds = array<i64: 9, 4, 32>}, {pipeline_mode = #tpu.pipeline_mode<synchronous>, transform_indices = @transform_2, window_bounds = array<i64: 1, 32>}, {transform_indices = @transform_3, window_bounds = array<i64: 1, 32, 256>}]} {
    %c0 = arith.constant 0 : index
    %c0_0 = arith.constant 0 : index
    %c0_1 = arith.constant 0 : index
    %c0_2 = arith.constant 0 : index
    %0 = vector.load %arg1[%c0, %c0_0, %c0_1, %c0_2] : memref<1x18x18x4xf32, #tpu.memory_space<vmem>>, vector<1x18x18x4xf32>
    %1 = vector.shape_cast %0 : vector<1x18x18x4xf32> to vector<18x18x4xf32>
    %c0_3 = arith.constant 0 : index
    %c0_4 = arith.constant 0 : index
    %c0_5 = arith.constant 0 : index
    %2 = vector.load %arg2[%c0_3, %c0_4, %c0_5] : memref<9x4x32xf32, #tpu.memory_space<vmem>>, vector<9x4x32xf32>
    %cst = arith.constant 0.000000e+00 : f32
    %3 = vector.broadcast %cst : f32 to vector<256x32xf32>
    %4 = vector.extract_strided_slice %1 {offsets = [0, 0, 0], sizes = [16, 16, 4], strides = [1, 1, 1]} : vector<18x18x4xf32> to vector<16x16x4xf32>
    %5 = vector.shape_cast %4 : vector<16x16x4xf32> to vector<256x4xf32>
    %6 = vector.extract_strided_slice %2 {offsets = [0, 0, 0], sizes = [1, 4, 32], strides = [1, 1, 1]} : vector<9x4x32xf32> to vector<1x4x32xf32>
    %7 = vector.shape_cast %6 : vector<1x4x32xf32> to vector<4x32xf32>
    %cst_6 = arith.constant dense<0.000000e+00> : vector<256x32xf32>
    %8 = tpu.matmul %5, %7, %cst_6 {dimension_numbers = #tpu.dot_dimension_numbers<[1], [0], [0], [1], [0, 0, 1, 1], [], []>} : vector<256x4xf32>, vector<4x32xf32>, vector<256x32xf32> -> vector<256x32xf32>
    %9 = arith.addf %3, %8 : vector<256x32xf32>
    %10 = vector.extract_strided_slice %1 {offsets = [0, 1, 0], sizes = [16, 16, 4], strides = [1, 1, 1]} : vector<18x18x4xf32> to vector<16x16x4xf32>
    %11 = vector.shape_cast %10 : vector<16x16x4xf32> to vector<256x4xf32>
    %12 = vector.extract_strided_slice %2 {offsets = [1, 0, 0], sizes = [1, 4, 32], strides = [1, 1, 1]} : vector<9x4x32xf32> to vector<1x4x32xf32>
    %13 = vector.shape_cast %12 : vector<1x4x32xf32> to vector<4x32xf32>
    %cst_7 = arith.constant dense<0.000000e+00> : vector<256x32xf32>
    %14 = tpu.matmul %11, %13, %cst_7 {dimension_numbers = #tpu.dot_dimension_numbers<[1], [0], [0], [1], [0, 0, 1, 1], [], []>} : vector<256x4xf32>, vector<4x32xf32>, vector<256x32xf32> -> vector<256x32xf32>
    %15 = arith.addf %9, %14 : vector<256x32xf32>
    %16 = vector.extract_strided_slice %1 {offsets = [0, 2, 0], sizes = [16, 16, 4], strides = [1, 1, 1]} : vector<18x18x4xf32> to vector<16x16x4xf32>
    %17 = vector.shape_cast %16 : vector<16x16x4xf32> to vector<256x4xf32>
    %18 = vector.extract_strided_slice %2 {offsets = [2, 0, 0], sizes = [1, 4, 32], strides = [1, 1, 1]} : vector<9x4x32xf32> to vector<1x4x32xf32>
    %19 = vector.shape_cast %18 : vector<1x4x32xf32> to vector<4x32xf32>
    %cst_8 = arith.constant dense<0.000000e+00> : vector<256x32xf32>
    %20 = tpu.matmul %17, %19, %cst_8 {dimension_numbers = #tpu.dot_dimension_numbers<[1], [0], [0], [1], [0, 0, 1, 1], [], []>} : vector<256x4xf32>, vector<4x32xf32>, vector<256x32xf32> -> vector<256x32xf32>
    %21 = arith.addf %15, %20 : vector<256x32xf32>
    %22 = vector.extract_strided_slice %1 {offsets = [1, 0, 0], sizes = [16, 16, 4], strides = [1, 1, 1]} : vector<18x18x4xf32> to vector<16x16x4xf32>
    %23 = vector.shape_cast %22 : vector<16x16x4xf32> to vector<256x4xf32>
    %24 = vector.extract_strided_slice %2 {offsets = [3, 0, 0], sizes = [1, 4, 32], strides = [1, 1, 1]} : vector<9x4x32xf32> to vector<1x4x32xf32>
    %25 = vector.shape_cast %24 : vector<1x4x32xf32> to vector<4x32xf32>
    %cst_9 = arith.constant dense<0.000000e+00> : vector<256x32xf32>
    %26 = tpu.matmul %23, %25, %cst_9 {dimension_numbers = #tpu.dot_dimension_numbers<[1], [0], [0], [1], [0, 0, 1, 1], [], []>} : vector<256x4xf32>, vector<4x32xf32>, vector<256x32xf32> -> vector<256x32xf32>
    %27 = arith.addf %21, %26 : vector<256x32xf32>
    %28 = vector.extract_strided_slice %1 {offsets = [1, 1, 0], sizes = [16, 16, 4], strides = [1, 1, 1]} : vector<18x18x4xf32> to vector<16x16x4xf32>
    %29 = vector.shape_cast %28 : vector<16x16x4xf32> to vector<256x4xf32>
    %30 = vector.extract_strided_slice %2 {offsets = [4, 0, 0], sizes = [1, 4, 32], strides = [1, 1, 1]} : vector<9x4x32xf32> to vector<1x4x32xf32>
    %31 = vector.shape_cast %30 : vector<1x4x32xf32> to vector<4x32xf32>
    %cst_10 = arith.constant dense<0.000000e+00> : vector<256x32xf32>
    %32 = tpu.matmul %29, %31, %cst_10 {dimension_numbers = #tpu.dot_dimension_numbers<[1], [0], [0], [1], [0, 0, 1, 1], [], []>} : vector<256x4xf32>, vector<4x32xf32>, vector<256x32xf32> -> vector<256x32xf32>
    %33 = arith.addf %27, %32 : vector<256x32xf32>
    %34 = vector.extract_strided_slice %1 {offsets = [1, 2, 0], sizes = [16, 16, 4], strides = [1, 1, 1]} : vector<18x18x4xf32> to vector<16x16x4xf32>
    %35 = vector.shape_cast %34 : vector<16x16x4xf32> to vector<256x4xf32>
    %36 = vector.extract_strided_slice %2 {offsets = [5, 0, 0], sizes = [1, 4, 32], strides = [1, 1, 1]} : vector<9x4x32xf32> to vector<1x4x32xf32>
    %37 = vector.shape_cast %36 : vector<1x4x32xf32> to vector<4x32xf32>
    %cst_11 = arith.constant dense<0.000000e+00> : vector<256x32xf32>
    %38 = tpu.matmul %35, %37, %cst_11 {dimension_numbers = #tpu.dot_dimension_numbers<[1], [0], [0], [1], [0, 0, 1, 1], [], []>} : vector<256x4xf32>, vector<4x32xf32>, vector<256x32xf32> -> vector<256x32xf32>
    %39 = arith.addf %33, %38 : vector<256x32xf32>
    %40 = vector.extract_strided_slice %1 {offsets = [2, 0, 0], sizes = [16, 16, 4], strides = [1, 1, 1]} : vector<18x18x4xf32> to vector<16x16x4xf32>
    %41 = vector.shape_cast %40 : vector<16x16x4xf32> to vector<256x4xf32>
    %42 = vector.extract_strided_slice %2 {offsets = [6, 0, 0], sizes = [1, 4, 32], strides = [1, 1, 1]} : vector<9x4x32xf32> to vector<1x4x32xf32>
    %43 = vector.shape_cast %42 : vector<1x4x32xf32> to vector<4x32xf32>
    %cst_12 = arith.constant dense<0.000000e+00> : vector<256x32xf32>
    %44 = tpu.matmul %41, %43, %cst_12 {dimension_numbers = #tpu.dot_dimension_numbers<[1], [0], [0], [1], [0, 0, 1, 1], [], []>} : vector<256x4xf32>, vector<4x32xf32>, vector<256x32xf32> -> vector<256x32xf32>
    %45 = arith.addf %39, %44 : vector<256x32xf32>
    %46 = vector.extract_strided_slice %1 {offsets = [2, 1, 0], sizes = [16, 16, 4], strides = [1, 1, 1]} : vector<18x18x4xf32> to vector<16x16x4xf32>
    %47 = vector.shape_cast %46 : vector<16x16x4xf32> to vector<256x4xf32>
    %48 = vector.extract_strided_slice %2 {offsets = [7, 0, 0], sizes = [1, 4, 32], strides = [1, 1, 1]} : vector<9x4x32xf32> to vector<1x4x32xf32>
    %49 = vector.shape_cast %48 : vector<1x4x32xf32> to vector<4x32xf32>
    %cst_13 = arith.constant dense<0.000000e+00> : vector<256x32xf32>
    %50 = tpu.matmul %47, %49, %cst_13 {dimension_numbers = #tpu.dot_dimension_numbers<[1], [0], [0], [1], [0, 0, 1, 1], [], []>} : vector<256x4xf32>, vector<4x32xf32>, vector<256x32xf32> -> vector<256x32xf32>
    %51 = arith.addf %45, %50 : vector<256x32xf32>
    %52 = vector.extract_strided_slice %1 {offsets = [2, 2, 0], sizes = [16, 16, 4], strides = [1, 1, 1]} : vector<18x18x4xf32> to vector<16x16x4xf32>
    %53 = vector.shape_cast %52 : vector<16x16x4xf32> to vector<256x4xf32>
    %54 = vector.extract_strided_slice %2 {offsets = [8, 0, 0], sizes = [1, 4, 32], strides = [1, 1, 1]} : vector<9x4x32xf32> to vector<1x4x32xf32>
    %55 = vector.shape_cast %54 : vector<1x4x32xf32> to vector<4x32xf32>
    %cst_14 = arith.constant dense<0.000000e+00> : vector<256x32xf32>
    %56 = tpu.matmul %53, %55, %cst_14 {dimension_numbers = #tpu.dot_dimension_numbers<[1], [0], [0], [1], [0, 0, 1, 1], [], []>} : vector<256x4xf32>, vector<4x32xf32>, vector<256x32xf32> -> vector<256x32xf32>
    %57 = arith.addf %51, %56 : vector<256x32xf32>
    %c0_15 = arith.constant 0 : index
    %c0_16 = arith.constant 0 : index
    %58 = vector.load %arg3[%c0_15, %c0_16] : memref<1x32xf32, #tpu.memory_space<vmem>>, vector<1x32xf32>
    %59 = vector.broadcast %58 : vector<1x32xf32> to vector<256x32xf32>
    %60 = arith.addf %57, %59 : vector<256x32xf32>
    %61 = arith.negf %60 : vector<256x32xf32>
    %62 = math.exp %61 : vector<256x32xf32>
    %cst_17 = arith.constant 1.000000e+00 : f32
    %63 = vector.broadcast %cst_17 : f32 to vector<256x32xf32>
    %64 = arith.addf %63, %62 : vector<256x32xf32>
    %65 = arith.divf %63, %64 : vector<256x32xf32>
    %66 = arith.mulf %60, %65 : vector<256x32xf32>
    %67 = tpu.transpose %66, [1, 0] : vector<256x32xf32> -> vector<32x256xf32>
    %c0_18 = arith.constant 0 : index
    %c0_19 = arith.constant 0 : index
    %c0_20 = arith.constant 0 : index
    %68 = vector.load %arg4[%c0_18, %c0_19, %c0_20] : memref<1x32x256xf32, #tpu.memory_space<vmem>>, vector<1x32x256xf32>
    %69 = vector.shape_cast %68 : vector<1x32x256xf32> to vector<32x256xf32>
    %70 = vector.shape_cast %67 : vector<32x256xf32> to vector<1x32x256xf32>
    tpu.vector_store %arg4[%c0_18, %c0_19, %c0_20], %70 {strides = array<i32>} : memref<1x32x256xf32, #tpu.memory_space<vmem>>, vector<1x32x256xf32>,
    return
  }
  func.func @transform_0(%arg0: i32) -> (i32, i32, i32, i32) {
    %c0_i32 = arith.constant 0 : i32
    %c0_i32_0 = arith.constant 0 : i32
    %c0_i32_1 = arith.constant 0 : i32
    %c0_i32_2 = arith.constant 0 : i32
    return %arg0, %c0_i32, %c0_i32_0, %c0_i32_1 : i32, i32, i32, i32
  }
  func.func @transform_1(%arg0: i32) -> (i32, i32, i32) {
    %c0_i32 = arith.constant 0 : i32
    %c0_i32_0 = arith.constant 0 : i32
    %c0_i32_1 = arith.constant 0 : i32
    %c0_i32_2 = arith.constant 0 : i32
    return %c0_i32, %c0_i32_0, %c0_i32_1 : i32, i32, i32
  }
  func.func @transform_2(%arg0: i32) -> (i32, i32) {
    %c0_i32 = arith.constant 0 : i32
    %c0_i32_0 = arith.constant 0 : i32
    %c0_i32_1 = arith.constant 0 : i32
    return %c0_i32, %c0_i32_0 : i32, i32
  }
  func.func @transform_3(%arg0: i32) -> (i32, i32, i32) {
    %c0_i32 = arith.constant 0 : i32
    %c0_i32_0 = arith.constant 0 : i32
    %c0_i32_1 = arith.constant 0 : i32
    return %arg0, %c0_i32, %c0_i32_0 : i32, i32, i32
  }
}

</mosaic_0001>

<llo_original>
// kernel: conv_norm_act.1
$region0: #{conv_norm_act.1}
  #allocation0 [shape = 'u32[]', space=smem, size = 0x4, offset = 0x4, fixed_abs, tag = 'smem constant byte address 0x4 - core index']
  #allocation1 [shape = 'u32[144,128]{1,0:T(1,128)}', space=vmem, size = 0x12000, scoped, tag = 'internal scratch']
  %s0 = inlined_call_operand.vmem [shape: f32[2,18,18,4], index: 0, kind: input, shape index: {}]
  %s1 = inlined_call_operand.vmem [shape: f32[9,4,32], index: 1, kind: input, shape index: {}]
  %s2 = inlined_call_operand.vmem [shape: f32[1,32], index: 2, kind: input, shape index: {}]
  %s3 = inlined_call_operand.vmem [shape: f32[2,32,256], index: 3, kind: output, shape index: {}]
  %s4 = sld [smem:[#allocation0]]
  $region45: #{conv_norm_act.1} parent=0
    _
  %s6 = ssub.s32 1, %s4
  %s7 = scalar_select 0, %s6, %s4
  loop: start=0, step=1, limit=4
  $region2: #{conv_norm_act.1} parent=0 // loop_pre_header
    _
  $region3: #{conv_norm_act.1} parent=0 // loop_header
    %s9 = sphi 0, %s13
    %p10 = scmp.ge.s32.totalorder %s9, 4
    %s19 = sphi 0, %s21
    %s22 = sphi 0, %s19
    %s23 = sphi 0, %s22
    %s39 = sphi 0, %s23
    %s43 = sphi 0, %s43
    %s45 = sphi 0, %s43
    %s46 = sphi 0, %s45
    %s60 = sphi 0, %s46
    %s64 = sphi 0, %s64
    %s66 = sphi 0, %s64
    %s67 = sphi 0, %s66
    %s81 = sphi 0, %s67
    %s87 = sphi 0, %s89
    %s90 = sphi 0, %s87
    %s91 = sphi 0, %s90
    %s107 = sphi 0, %s91
  $region4: #{conv_norm_act.1} parent=0 // loop_header_branch
    %12 = sbr.rel (%p10) target = $region8
  $region5: #{conv_norm_act.1} parent=0 // loop_body
    %s14 = ssub.s32 %s9, 1
    %s15 = ssub.s32 %s9, 2
    %s16 = sadd.s32 %s9, 1
    %s17 = ssub.s32 %s9, %s16
    %p18 = scmp.eq.s32.totalorder %s17, 0
    %s20 = sadd.s32 %s19, 1
    %s21 = scalar_select %p18, %s19, %s20
    %p24 = pneg %p18
    %p25 = scmp.eq.s32.totalorder %s9, 1
    %p26 = por %p24, %p25
    %p27 = scmp.ne.s32.totalorder %s19, %s22
    %p28 = scmp.eq.s32.totalorder %s9, 0
    %p29 = por %p27, %p28
    %p30 = scmp.ne.s32.totalorder %s19, %s22
    %p31 = scmp.eq.s32.totalorder %s14, 1
    %p32 = por %p30, %p31
    %p33 = scmp.ne.s32.totalorder %s22, %s23
    %p34 = scmp.eq.s32.totalorder %s14, 0
    %p35 = por %p33, %p34
    %p36 = scmp.ne.s32.totalorder %s22, %s23
    %p37 = scmp.eq.s32.totalorder %s15, 1
    %p38 = por %p36, %p37
    %p40 = scmp.ne.s32.totalorder %s23, %s39
    %p41 = scmp.eq.s32.totalorder %s15, 0
    %p42 = por %p40, %p41
    %s44 = sadd.s32 %s43, 1
    %p47 = scmp.eq.s32.totalorder %s9, 1
    %p48 = scmp.ne.s32.totalorder %s43, %s45
    %p49 = scmp.eq.s32.totalorder %s9, 0
    %p50 = por %p48, %p49
    %p51 = scmp.ne.s32.totalorder %s43, %s45
    %p52 = scmp.eq.s32.totalorder %s14, 1
    %p53 = por %p51, %p52
    %p54 = scmp.ne.s32.totalorder %s45, %s46
    %p55 = scmp.eq.s32.totalorder %s14, 0
    %p56 = por %p54, %p55
    %p57 = scmp.ne.s32.totalorder %s45, %s46
    %p58 = scmp.eq.s32.totalorder %s15, 1
    %p59 = por %p57, %p58
    %p61 = scmp.ne.s32.totalorder %s46, %s60
    %p62 = scmp.eq.s32.totalorder %s15, 0
    %p63 = por %p61, %p62
    %s65 = sadd.s32 %s64, 1
    %p68 = scmp.eq.s32.totalorder %s9, 1
    %p69 = scmp.ne.s32.totalorder %s64, %s66
    %p70 = scmp.eq.s32.totalorder %s9, 0
    %p71 = por %p69, %p70
    %p72 = scmp.ne.s32.totalorder %s64, %s66
    %p73 = scmp.eq.s32.totalorder %s14, 1
    %p74 = por %p72, %p73
    %p75 = scmp.ne.s32.totalorder %s66, %s67
    %p76 = scmp.eq.s32.totalorder %s14, 0
    %p77 = por %p75, %p76
    %p78 = scmp.ne.s32.totalorder %s66, %s67
    %p79 = scmp.eq.s32.totalorder %s15, 1
    %p80 = por %p78, %p79
    %p82 = scmp.ne.s32.totalorder %s67, %s81
    %p83 = scmp.eq.s32.totalorder %s15, 0
    %p84 = por %p82, %p83
    %s85 = ssub.s32 %s9, %s16
    %p86 = scmp.eq.s32.totalorder %s85, 0
    %s88 = sadd.s32 %s87, 1
    %s89 = scalar_select %p86, %s87, %s88
    %p92 = pneg %p86
    %p93 = scmp.eq.s32.totalorder %s9, 1
    %p94 = por %p92, %p93
    %p95 = scmp.ne.s32.totalorder %s87, %s90
    %p96 = scmp.eq.s32.totalorder %s9, 0
    %p97 = por %p95, %p96
    %p98 = scmp.ne.s32.totalorder %s87, %s90
    %p99 = scmp.eq.s32.totalorder %s14, 1
    %p100 = por %p98, %p99
    %p101 = scmp.ne.s32.totalorder %s90, %s91
    %p102 = scmp.eq.s32.totalorder %s14, 0
    %p103 = por %p101, %p102
    %p104 = scmp.ne.s32.totalorder %s90, %s91
    %p105 = scmp.eq.s32.totalorder %s15, 1
    %p106 = por %p104, %p105
    %p108 = scmp.ne.s32.totalorder %s91, %s107
    %p109 = scmp.eq.s32.totalorder %s15, 0
    %p110 = por %p108, %p109
    %p111 = scmp.le.s32.totalorder 1, %s9
    %p112 = scmp.lt.s32.totalorder %s9, 3
    %p113 = pnand %p111, %p112
    %p114 = pneg %p113
    // Predicated region
    $region9: #{conv_norm_act.1} parent=5 // pred_check
      _
    $region10: #{conv_norm_act.1} parent=5 // pred_check_branch
      %116 = sbr.rel (%p113) target = $region12
    $region11: #{conv_norm_act.1} parent=5 // pred_region
      %s117 = ssub.s32 %s9, 1
      // Predicated region
      $region13: #{conv_norm_act.1} parent=11 // pred_check
        %p118 = pneg %p56
      $region14: #{conv_norm_act.1} parent=11 // pred_check_branch
        %120 = sbr.rel (%p118) target = $region16
      $region15: #{conv_norm_act.1} parent=11 // pred_region
        _
      $region16: #{conv_norm_act.1} parent=11 // pred_fallthru
        _
      // Predicated region
      $region17: #{conv_norm_act.1} parent=11 // pred_check
        %p121 = pneg %p77
      $region18: #{conv_norm_act.1} parent=11 // pred_check_branch
        %123 = sbr.rel (%p121) target = $region20
      $region19: #{conv_norm_act.1} parent=11 // pred_region
        _
      $region20: #{conv_norm_act.1} parent=11 // pred_fallthru
        _
    $region12: #{conv_norm_act.1} parent=5 // pred_fallthru
      _
    %p124 = scmp.lt.s32.totalorder %s9, 2
    // Predicated region
    $region21: #{conv_norm_act.1} parent=5 // pred_check
      %p125 = pneg %p124
    $region22: #{conv_norm_act.1} parent=5 // pred_check_branch
      %127 = sbr.rel (%p125) target = $region24
    $region23: #{conv_norm_act.1} parent=5 // pred_region
      // Predicated region
      $region25: #{conv_norm_act.1} parent=23 // pred_check
        %p128 = pneg %p29
      $region26: #{conv_norm_act.1} parent=23 // pred_check_branch
        %130 = sbr.rel (%p128) target = $region28
      $region27: #{conv_norm_act.1} parent=23 // pred_region
        %p131 = scmp.lt.s32.totalorder %s9, 1
        %s132 = scalar_select %p131, %s9, 1
        %s133 = smul.addr %s132, 54
        %s134 = smul.addr %s133, 8
        %s135 = scalar_lea.vmem %s0, %s134
      $region28: #{conv_norm_act.1} parent=23 // pred_fallthru
        _
    $region24: #{conv_norm_act.1} parent=5 // pred_fallthru
      _
    %p136 = scmp.le.s32.totalorder 1, %s9
    %p137 = scmp.lt.s32.totalorder %s9, 3
    %p138 = pnand %p136, %p137
    %p139 = pneg %p138
    // Predicated region
    $region29: #{conv_norm_act.1} parent=5 // pred_check
      _
    $region30: #{conv_norm_act.1} parent=5 // pred_check_branch
      %141 = sbr.rel (%p138) target = $region32
    $region31: #{conv_norm_act.1} parent=5 // pred_region
      %s142 = ssub.s32 %s9, 1
      %p143 = scmp.lt.s32.totalorder %s14, 1
      %s144 = scalar_select %p143, %s14, 1
      %s145 = smul.addr %s144, 54
      %s146 = smul.addr %s145, 8
      %s147 = scalar_lea.vmem %s0, %s146
      %p148 = pneg %p35
      %p149 = pneg %p32
      %p150 = pneg %p56
      %p151 = pneg %p53
      %p152 = pneg %p77
      %p153 = pneg %p74
      %p154 = pneg %p103
      %p155 = pneg %p100
      %p156 = scmp.lt.s32.totalorder %s14, 1
      %s157 = scalar_select %p156, %s14, 1
      %s158 = smul.addr %s157, 8
      %s159 = smul.addr %s158, 8
      %s160 = scalar_lea.vmem %s3, %s159
      %p161 = scmp.lt.s32.totalorder %s14, 1
      %s162 = scalar_select %p161, %s14, 1
      %s163 = smul.addr %s162, 54
      %s164 = smul.addr %s163, 8
      %s165 = scalar_lea.vmem %s0, %s164
      %p166 = scmp.lt.s32.totalorder %s14, 1
      %s167 = scalar_select %p166, %s14, 1
      %s168 = smul.addr %s167, 8
      %s169 = smul.addr %s168, 8
      %s170 = scalar_lea.vmem %s3, %s169
      %v171 = vld [vmem:[%s165] sm:$0xff]
      %v172 = vld [vmem:[%s165 + $0x8] sm:$0xff]
      %v173 = vld [vmem:[%s165 + $0x10] sm:$0x3]
      %v174 = vld [vmem:[%s165 + $0x18] sm:$0xff]
      %v175 = vld [vmem:[%s165 + $0x20] sm:$0xff]
      %v176 = vld [vmem:[%s165 + $0x28] sm:$0x3]
      %v177 = vld [vmem:[%s165 + $0x30] sm:$0xff]
      %v178 = vld [vmem:[%s165 + $0x38] sm:$0xff]
      %v179 = vld [vmem:[%s165 + $0x40] sm:$0x3]
      %v180 = vld [vmem:[%s165 + $0x48] sm:$0xff]
      %v181 = vld [vmem:[%s165 + $0x50] sm:$0xff]
      %v182 = vld [vmem:[%s165 + $0x58] sm:$0x3]
      %v183 = vld [vmem:[%s165 + $0x60] sm:$0xff]
      %v184 = vld [vmem:[%s165 + $0x68] sm:$0xff]
      %v185 = vld [vmem:[%s165 + $0x70] sm:$0x3]
      %v186 = vld [vmem:[%s165 + $0x78] sm:$0xff]
      %v187 = vld [vmem:[%s165 + $0x80] sm:$0xff]
      %v188 = vld [vmem:[%s165 + $0x88] sm:$0x3]
      %v189 = vld [vmem:[%s165 + $0x90] sm:$0xff]
      %v190 = vld [vmem:[%s165 + $0x98] sm:$0xff]
      %v191 = vld [vmem:[%s165 + $0xa0] sm:$0x3]
      %v192 = vld [vmem:[%s165 + $0xa8] sm:$0xff]
      %v193 = vld [vmem:[%s165 + $0xb0] sm:$0xff]
      %v194 = vld [vmem:[%s165 + $0xb8] sm:$0x3]
      %v195 = vld [vmem:[%s165 + $0xc0] sm:$0xff]
      %v196 = vld [vmem:[%s165 + $0xc8] sm:$0xff]
      %v197 = vld [vmem:[%s165 + $0xd0] sm:$0x3]
      %v198 = vld [vmem:[%s165 + $0xd8] sm:$0xff]
      %v199 = vld [vmem:[%s165 + $0xe0] sm:$0xff]
      %v200 = vld [vmem:[%s165 + $0xe8] sm:$0x3]
      %v201 = vld [vmem:[%s165 + $0xf0] sm:$0xff]
      %v202 = vld [vmem:[%s165 + $0xf8] sm:$0xff]
      %v203 = vld [vmem:[%s165 + $0x100] sm:$0x3]
      %v204 = vld [vmem:[%s165 + $0x108] sm:$0xff]
      %v205 = vld [vmem:[%s165 + $0x110] sm:$0xff]
      %v206 = vld [vmem:[%s165 + $0x118] sm:$0x3]
      %v207 = vld [vmem:[%s165 + $0x120] sm:$0xff]
      %v208 = vld [vmem:[%s165 + $0x128] sm:$0xff]
      %v209 = vld [vmem:[%s165 + $0x130] sm:$0x3]
      %v210 = vld [vmem:[%s165 + $0x138] sm:$0xff]
      %v211 = vld [vmem:[%s165 + $0x140] sm:$0xff]
      %v212 = vld [vmem:[%s165 + $0x148] sm:$0x3]
      %v213 = vld [vmem:[%s165 + $0x150] sm:$0xff]
      %v214 = vld [vmem:[%s165 + $0x158] sm:$0xff]
      %v215 = vld [vmem:[%s165 + $0x160] sm:$0x3]
      %v216 = vld [vmem:[%s165 + $0x168] sm:$0xff]
      %v217 = vld [vmem:[%s165 + $0x170] sm:$0xff]
      %v218 = vld [vmem:[%s165 + $0x178] sm:$0x3]
      %v219 = vld [vmem:[%s165 + $0x180] sm:$0xff]
      %v220 = vld [vmem:[%s165 + $0x188] sm:$0xff]
      %v221 = vld [vmem:[%s165 + $0x190] sm:$0x3]
      %v222 = vld [vmem:[%s165 + $0x198] sm:$0xff]
      %v223 = vld [vmem:[%s165 + $0x1a0] sm:$0xff]
      %v224 = vld [vmem:[%s165 + $0x1a8] sm:$0x3]
      %v225 = vld [vmem:[%s1] sm:$0xf]
      %v226 = vld [vmem:[%s1 + $0x4] sm:$0xf]
      %v227 = vld [vmem:[%s1 + $0x8] sm:$0xf]
      %v228 = vld [vmem:[%s1 + $0xc] sm:$0xf]
      %v229 = vld [vmem:[%s1 + $0x10] sm:$0xf]
      %v230 = vld [vmem:[%s1 + $0x14] sm:$0xf]
      %v231 = vld [vmem:[%s1 + $0x18] sm:$0xf]
      %v232 = vld [vmem:[%s1 + $0x1c] sm:$0xf]
      %v233 = vld [vmem:[%s1 + $0x20] sm:$0xf]
      %vm282 = vcmask 1046528
      %v283 = vrot.slane %v171, 1
      %v284 = vrot.slane %v172, 1
      %v285 = vsel %vm282, %v283, %v284
      %v286 = vrot.slane %v173, 1
      %v287 = vsel %vm282, %v284, %v286
      %v288 = vrot.slane %v174, 1
      %v289 = vrot.slane %v175, 1
      %v290 = vsel %vm282, %v288, %v289
      %v291 = vrot.slane %v176, 1
      %v292 = vsel %vm282, %v289, %v291
      %v293 = vrot.slane %v177, 1
      %v294 = vrot.slane %v178, 1
      %v295 = vsel %vm282, %v293, %v294
      %v296 = vrot.slane %v179, 1
      %v297 = vsel %vm282, %v294, %v296
      %v298 = vrot.slane %v180, 1
      %v299 = vrot.slane %v181, 1
      %v300 = vsel %vm282, %v298, %v299
      %v301 = vrot.slane %v182, 1
      %v302 = vsel %vm282, %v299, %v301
      %v303 = vrot.slane %v183, 1
      %v304 = vrot.slane %v184, 1
      %v305 = vsel %vm282, %v303, %v304
      %v306 = vrot.slane %v185, 1
      %v307 = vsel %vm282, %v304, %v306
      %v308 = vrot.slane %v186, 1
      %v309 = vrot.slane %v187, 1
      %v310 = vsel %vm282, %v308, %v309
      %v311 = vrot.slane %v188, 1
      %v312 = vsel %vm282, %v309, %v311
      %v313 = vrot.slane %v189, 1
      %v314 = vrot.slane %v190, 1
      %v315 = vsel %vm282, %v313, %v314
      %v316 = vrot.slane %v191, 1
      %v317 = vsel %vm282, %v314, %v316
      %v318 = vrot.slane %v192, 1
      %v319 = vrot.slane %v193, 1
      %v320 = vsel %vm282, %v318, %v319
      %v321 = vrot.slane %v194, 1
      %v322 = vsel %vm282, %v319, %v321
      %v323 = vrot.slane %v195, 1
      %v324 = vrot.slane %v196, 1
      %v325 = vsel %vm282, %v323, %v324
      %v326 = vrot.slane %v197, 1
      %v327 = vsel %vm282, %v324, %v326
      %v328 = vrot.slane %v198, 1
      %v329 = vrot.slane %v199, 1
      %v330 = vsel %vm282, %v328, %v329
      %v331 = vrot.slane %v200, 1
      %v332 = vsel %vm282, %v329, %v331
      %v333 = vrot.slane %v201, 1
      %v334 = vrot.slane %v202, 1
      %v335 = vsel %vm282, %v333, %v334
      %v336 = vrot.slane %v203, 1
      %v337 = vsel %vm282, %v334, %v336
      %v338 = vrot.slane %v204, 1
      %v339 = vrot.slane %v205, 1
      %v340 = vsel %vm282, %v338, %v339
      %v341 = vrot.slane %v206, 1
      %v342 = vsel %vm282, %v339, %v341
      %v343 = vrot.slane %v207, 1
      %v344 = vrot.slane %v208, 1
      %v345 = vsel %vm282, %v343, %v344
      %v346 = vrot.slane %v209, 1
      %v347 = vsel %vm282, %v344, %v346
      %v348 = vrot.slane %v210, 1
      %v349 = vrot.slane %v211, 1
      %v350 = vsel %vm282, %v348, %v349
      %v351 = vrot.slane %v212, 1
      %v352 = vsel %vm282, %v349, %v351
      %v353 = vrot.slane %v213, 1
      %v354 = vrot.slane %v214, 1
      %v355 = vsel %vm282, %v353, %v354
      %v356 = vrot.slane %v215, 1
      %v357 = vsel %vm282, %v354, %v356
      %v358 = vrot.slane %v216, 1
      %v359 = vrot.slane %v217, 1
      %v360 = vsel %vm282, %v358, %v359
      %v361 = vrot.slane %v218, 1
      %v362 = vsel %vm282, %v359, %v361
      %vm363 = vcmask 31744
      %v364 = vsel %vm363, %v285, 0
      %v366 = vsel %vm363, %v287, 0
      %v368 = vsel %vm363, %v290, 0
      %v370 = vsel %vm363, %v292, 0
      %v372 = vsel %vm363, %v295, 0
      %v374 = vsel %vm363, %v297, 0
      %v376 = vsel %vm363, %v300, 0
      %v378 = vsel %vm363, %v302, 0
      %v380 = vsel %vm363, %v305, 0
      %v382 = vsel %vm363, %v307, 0
      %v384 = vsel %vm363, %v310, 0
      %v386 = vsel %vm363, %v312, 0
      %v388 = vsel %vm363, %v315, 0
      %v390 = vsel %vm363, %v317, 0
      %v392 = vsel %vm363, %v320, 0
      %v394 = vsel %vm363, %v322, 0
      %v396 = vsel %vm363, %v325, 0
      %v398 = vsel %vm363, %v327, 0
      %v400 = vsel %vm363, %v330, 0
      %v402 = vsel %vm363, %v332, 0
      %v404 = vsel %vm363, %v335, 0
      %v406 = vsel %vm363, %v337, 0
      %v408 = vsel %vm363, %v340, 0
      %v410 = vsel %vm363, %v342, 0
      %v412 = vsel %vm363, %v345, 0
      %v414 = vsel %vm363, %v347, 0
      %v416 = vsel %vm363, %v350, 0
      %v418 = vsel %vm363, %v352, 0
      %v420 = vsel %vm363, %v355, 0
      %v422 = vsel %vm363, %v357, 0
      %v424 = vsel %vm363, %v360, 0
      %v426 = vsel %vm363, %v362, 0
      %vm428 = vcmask 1043456
      %v430 = vsel %vm428, %v226, 0
      %432 = vmatprep.subr.mxu0 0.0
      %433 = vmatpush1.msra.mxu0 %v430
      %434 = vmatprep.subr.mxu0 0.0
      %435 = vmatpush1.msra.mxu0 0.0
      %436 = vmatprep.subr.mxu0 0.0
      %437 = vmatpush1.msra.mxu0 0.0
      %438 = vmatprep.subr.mxu0 0.0
      %439 = vmatpush1.msra.mxu0 0.0
      %440 = vmatprep.subr.mxu0 0.0
      %441 = vmatpush1.msra.mxu0 0.0
      %442 = vmatprep.subr.mxu0 0.0
      %443 = vmatpush1.msra.mxu0 0.0
      %444 = vmatprep.subr.mxu0 0.0
      %445 = vmatpush1.msra.mxu0 0.0
      %446 = vmatprep.subr.mxu0 0.0
      %447 = vmatpush1.msra.mxu0 0.0
      %448 = vmatprep.subr.mxu0 0.0
      %449 = vmatpush1.msra.mxu0 0.0
      %450 = vmatprep.subr.mxu0 0.0
      %451 = vmatpush1.msra.mxu0 0.0
      %452 = vmatprep.subr.mxu0 0.0
      %453 = vmatpush1.msra.mxu0 0.0
      %454 = vmatprep.subr.mxu0 0.0
      %455 = vmatpush1.msra.mxu0 0.0
      %456 = vmatprep.subr.mxu0 0.0
      %457 = vmatpush1.msra.mxu0 0.0
      %458 = vmatprep.subr.mxu0 0.0
      %459 = vmatpush1.msra.mxu0 0.0
      %460 = vmatprep.subr.mxu0 0.0
      %461 = vmatpush1.msra.mxu0 0.0
      %462 = vmatprep.subr.mxu0 0.0
      %463 = vmatpush1.msra.mxu0 0.0
      %464 = vmatprep.subr.mxu0 0.0
      %465 = vmatpush1.msra.mxu0 0.0
      %466 = vmatprep.subr.mxu0 0.0
      %467 = vmatpush1.msra.mxu0 0.0
      %468 = vmatprep.subr.mxu0 0.0
      %469 = vmatpush1.msra.mxu0 0.0
      %470 = vmatprep.subr.mxu0 0.0
      %471 = vmatpush1.msra.mxu0 0.0
      %472 = vmatprep.subr.mxu0 0.0
      %473 = vmatpush1.msra.mxu0 0.0
      %474 = vmatprep.subr.mxu0 0.0
      %475 = vmatpush1.msra.mxu0 0.0
      %476 = vmatprep.subr.mxu0 0.0
      %477 = vmatpush1.msra.mxu0 0.0
      %478 = vmatprep.subr.mxu0 0.0
      %479 = vmatpush1.msra.mxu0 0.0
      %480 = vmatprep.subr.mxu0 0.0
      %481 = vmatpush1.msra.mxu0 0.0
      %482 = vmatprep.subr.mxu0 0.0
      %483 = vmatpush1.msra.mxu0 0.0
      %484 = vmatprep.subr.mxu0 0.0
      %485 = vmatpush1.msra.mxu0 0.0
      %486 = vmatprep.subr.mxu0 0.0
      %487 = vmatpush1.msra.mxu0 0.0
      %488 = vmatprep.subr.mxu0 0.0
      %489 = vmatpush1.msra.mxu0 0.0
      %490 = vmatprep.subr.mxu0 0.0
      %491 = vmatpush1.msra.mxu0 0.0
      %492 = vmatprep.subr.mxu0 0.0
      %493 = vmatpush1.msra.mxu0 0.0
      %494 = vmatprep.subr.mxu0 0.0
      %495 = vmatpush1.msra.mxu0 0.0
      %496 = vmatprep.mubr.f32.mxu0 0.0
      %497 = vmatmul.mubr.f32.gmra.mrb[0].mxu0 %v364
      %v498 = vpop.f32.mrb[0].mxu0
      %v499 = vadd.f32 0.0, %v498
      %v500 = vpop.f32.mrb[0].mxu0
      %501 = vmatprep.mubr.f32.mxu0 0.0
      %502 = vmatmul.mubr.f32.gmra.mrb[0].mxu0 %v366
      %v503 = vpop.f32.mrb[0].mxu0
      %v504 = vadd.f32 0.0, %v503
      %v505 = vpop.f32.mrb[0].mxu0
      %506 = vmatprep.mubr.f32.mxu0 0.0
      %507 = vmatmul.mubr.f32.gmra.mrb[0].mxu0 %v368
      %v508 = vpop.f32.mrb[0].mxu0
      %v509 = vadd.f32 0.0, %v508
      %v510 = vpop.f32.mrb[0].mxu0
      %511 = vmatprep.mubr.f32.mxu0 0.0
      %512 = vmatmul.mubr.f32.gmra.mrb[0].mxu0 %v370
      %v513 = vpop.f32.mrb[0].mxu0
      %v514 = vadd.f32 0.0, %v513
      %v515 = vpop.f32.mrb[0].mxu0
      %516 = vmatprep.mubr.f32.mxu0 0.0
      %517 = vmatmul.mubr.f32.gmra.mrb[0].mxu0 %v372
      %v518 = vpop.f32.mrb[0].mxu0
      %v519 = vadd.f32 0.0, %v518
      %v520 = vpop.f32.mrb[0].mxu0
      %521 = vmatprep.mubr.f32.mxu0 0.0
      %522 = vmatmul.mubr.f32.gmra.mrb[0].mxu0 %v374
      %v523 = vpop.f32.mrb[0].mxu0
      %v524 = vadd.f32 0.0, %v523
      %v525 = vpop.f32.mrb[0].mxu0
      %526 = vmatprep.mubr.f32.mxu0 0.0
      %527 = vmatmul.mubr.f32.gmra.mrb[0].mxu0 %v376
      %v528 = vpop.f32.mrb[0].mxu0
      %v529 = vadd.f32 0.0, %v528
      %v530 = vpop.f32.mrb[0].mxu0
      %531 = vmatprep.mubr.f32.mxu0 0.0
      %532 = vmatmul.mubr.f32.gmra.mrb[0].mxu0 %v378
      %v533 = vpop.f32.mrb[0].mxu0
      %v534 = vadd.f32 0.0, %v533
      %v535 = vpop.f32.mrb[0].mxu0
      %536 = vmatprep.mubr.f32.mxu0 0.0
      %537 = vmatmul.mubr.f32.gmra.mrb[0].mxu0 %v380
      %v538 = vpop.f32.mrb[0].mxu0
      %v539 = vadd.f32 0.0, %v538
      %v540 = vpop.f32.mrb[0].mxu0
      %541 = vmatprep.mubr.f32.mxu0 0.0
      %542 = vmatmul.mubr.f32.gmra.mrb[0].mxu0 %v382
      %v543 = vpop.f32.mrb[0].mxu0
      %v544 = vadd.f32 0.0, %v543
      %v545 = vpop.f32.mrb[0].mxu0
      %546 = vmatprep.mubr.f32.mxu0 0.0
      %547 = vmatmul.mubr.f32.gmra.mrb[0].mxu0 %v384
      %v548 = vpop.f32.mrb[0].mxu0
      %v549 = vadd.f32 0.0, %v548
      %v550 = vpop.f32.mrb[0].mxu0
      %551 = vmatprep.mubr.f32.mxu0 0.0
      %552 = vmatmul.mubr.f32.gmra.mrb[0].mxu0 %v386
      %v553 = vpop.f32.mrb[0].mxu0
      %v554 = vadd.f32 0.0, %v553
      %v555 = vpop.f32.mrb[0].mxu0
      %556 = vmatprep.mubr.f32.mxu0 0.0
      %557 = vmatmul.mubr.f32.gmra.mrb[0].mxu0 %v388
      %v558 = vpop.f32.mrb[0].mxu0
      %v559 = vadd.f32 0.0, %v558
      %v560 = vpop.f32.mrb[0].mxu0
      %561 = vmatprep.mubr.f32.mxu0 0.0
      %562 = vmatmul.mubr.f32.gmra.mrb[0].mxu0 %v390
      %v563 = vpop.f32.mrb[0].mxu0
      %v564 = vadd.f32 0.0, %v563
      %v565 = vpop.f32.mrb[0].mxu0
      %566 = vmatprep.mubr.f32.mxu0 0.0
      %567 = vmatmul.mubr.f32.gmra.mrb[0].mxu0 %v392
      %v568 = vpop.f32.mrb[0].mxu0
      %v569 = vadd.f32 0.0, %v568
      %v570 = vpop.f32.mrb[0].mxu0
      %571 = vmatprep.mubr.f32.mxu0 0.0
      %572 = vmatmul.mubr.f32.gmra.mrb[0].mxu0 %v394
      %v573 = vpop.f32.mrb[0].mxu0
      %v574 = vadd.f32 0.0, %v573
      %v575 = vpop.f32.mrb[0].mxu0
      %576 = vmatprep.mubr.f32.mxu0 0.0
      %577 = vmatmul.mubr.f32.gmra.mrb[0].mxu0 %v396
      %v578 = vpop.f32.mrb[0].mxu0
      %v579 = vadd.f32 0.0, %v578
      %v580 = vpop.f32.mrb[0].mxu0
      %581 = vmatprep.mubr.f32.mxu0 0.0
      %582 = vmatmul.mubr.f32.gmra.mrb[0].mxu0 %v398
      %v583 = vpop.f32.mrb[0].mxu0
      %v584 = vadd.f32 0.0, %v583
      %v585 = vpop.f32.mrb[0].mxu0
      %586 = vmatprep.mubr.f32.mxu0 0.0
      %587 = vmatmul.mubr.f32.gmra.mrb[0].mxu0 %v400
      %v588 = vpop.f32.mrb[0].mxu0
      %v589 = vadd.f32 0.0, %v588
      %v590 = vpop.f32.mrb[0].mxu0
      %591 = vmatprep.mubr.f32.mxu0 0.0
      %592 = vmatmul.mubr.f32.gmra.mrb[0].mxu0 %v402
      %v593 = vpop.f32.mrb[0].mxu0
      %v594 = vadd.f32 0.0, %v593
      %v595 = vpop.f32.mrb[0].mxu0
      %596 = vmatprep.mubr.f32.mxu0 0.0
      %597 = vmatmul.mubr.f32.gmra.mrb[0].mxu0 %v404
      %v598 = vpop.f32.mrb[0].mxu0
      %v599 = vadd.f32 0.0, %v598
      %v600 = vpop.f32.mrb[0].mxu0
      %601 = vmatprep.mubr.f32.mxu0 0.0
      %602 = vmatmul.mubr.f32.gmra.mrb[0].mxu0 %v406
      %v603 = vpop.f32.mrb[0].mxu0
      %v604 = vadd.f32 0.0, %v603
      %v605 = vpop.f32.mrb[0].mxu0
      %606 = vmatprep.mubr.f32.mxu0 0.0
      %607 = vmatmul.mubr.f32.gmra.mrb[0].mxu0 %v408
      %v608 = vpop.f32.mrb[0].mxu0
      %v609 = vadd.f32 0.0, %v608
      %v610 = vpop.f32.mrb[0].mxu0
      %611 = vmatprep.mubr.f32.mxu0 0.0
      %612 = vmatmul.mubr.f32.gmra.mrb[0].mxu0 %v410
      %v613 = vpop.f32.mrb[0].mxu0
      %v614 = vadd.f32 0.0, %v613
      %v615 = vpop.f32.mrb[0].mxu0
      %616 = vmatprep.mubr.f32.mxu0 0.0
      %617 = vmatmul.mubr.f32.gmra.mrb[0].mxu0 %v412
      %v618 = vpop.f32.mrb[0].mxu0
      %v619 = vadd.f32 0.0, %v618
      %v620 = vpop.f32.mrb[0].mxu0
      %621 = vmatprep.mubr.f32.mxu0 0.0
      %622 = vmatmul.mubr.f32.gmra.mrb[0].mxu0 %v414
      %v623 = vpop.f32.mrb[0].mxu0
      %v624 = vadd.f32 0.0, %v623
      %v625 = vpop.f32.mrb[0].mxu0
      %626 = vmatprep.mubr.f32.mxu0 0.0
      %627 = vmatmul.mubr.f32.gmra.mrb[0].mxu0 %v416
      %v628 = vpop.f32.mrb[0].mxu0
      %v629 = vadd.f32 0.0, %v628
      %v630 = vpop.f32.mrb[0].mxu0
      %631 = vmatprep.mubr.f32.mxu0 0.0
      %632 = vmatmul.mubr.f32.gmra.mrb[0].mxu0 %v418
      %v633 = vpop.f32.mrb[0].mxu0
      %v634 = vadd.f32 0.0, %v633
      %v635 = vpop.f32.mrb[0].mxu0
      %636 = vmatprep.mubr.f32.mxu0 0.0
      %637 = vmatmul.mubr.f32.gmra.mrb[0].mxu0 %v420
      %v638 = vpop.f32.mrb[0].mxu0
      %v639 = vadd.f32 0.0, %v638
      %v640 = vpop.f32.mrb[0].mxu0
      %641 = vmatprep.mubr.f32.mxu0 0.0
      %642 = vmatmul.mubr.f32.gmra.mrb[0].mxu0 %v422
      %v643 = vpop.f32.mrb[0].mxu0
      %v644 = vadd.f32 0.0, %v643
      %v645 = vpop.f32.mrb[0].mxu0
      %646 = vmatprep.mubr.f32.mxu0 0.0
      %647 = vmatmul.mubr.f32.gmra.mrb[0].mxu0 %v424
      %v648 = vpop.f32.mrb[0].mxu0
      %v649 = vadd.f32 0.0, %v648
      %v650 = vpop.f32.mrb[0].mxu0
      %651 = vmatprep.mubr.f32.mxu0 0.0
      %652 = vmatmul.mubr.f32.gmra.mrb[0].mxu0 %v426
      %v653 = vpop.f32.mrb[0].mxu0
      %v654 = vadd.f32 0.0, %v653
      %v655 = vpop.f32.mrb[0].mxu0
      %656 = vdwg.mxu0
      %v657 = vsel %vm363, %v171, 0
      %v659 = vsel %vm363, %v172, 0
      %v661 = vsel %vm363, %v174, 0
      %v663 = vsel %vm363, %v175, 0
      %v665 = vsel %vm363, %v177, 0
      %v667 = vsel %vm363, %v178, 0
      %v669 = vsel %vm363, %v180, 0
      %v671 = vsel %vm363, %v181, 0
      %v673 = vsel %vm363, %v183, 0
      %v675 = vsel %vm363, %v184, 0
      %v677 = vsel %vm363, %v186, 0
      %v679 = vsel %vm363, %v187, 0
      %v681 = vsel %vm363, %v189, 0
      %v683 = vsel %vm363, %v190, 0
      %v685 = vsel %vm363, %v192, 0
      %v687 = vsel %vm363, %v193, 0
      %v689 = vsel %vm363, %v195, 0
      %v691 = vsel %vm363, %v196, 0
      %v693 = vsel %vm363, %v198, 0
      %v695 = vsel %vm363, %v199, 0
      %v697 = vsel %vm363, %v201, 0
      %v699 = vsel %vm363, %v202, 0
      %v701 = vsel %vm363, %v204, 0
      %v703 = vsel %vm363, %v205, 0
      %v705 = vsel %vm363, %v207, 0
      %v707 = vsel %vm363, %v208, 0
      %v709 = vsel %vm363, %v210, 0
      %v711 = vsel %vm363, %v211, 0
      %v713 = vsel %vm363, %v213, 0
      %v715 = vsel %vm363, %v214, 0
      %v717 = vsel %vm363, %v216, 0
      %v719 = vsel %vm363, %v217, 0
      %v722 = vsel %vm428, %v225, 0
      %724 = vmatprep.subr.mxu0 0.0
      %725 = vmatpush1.msra.mxu0 %v722
      %726 = vmatprep.subr.mxu0 0.0
      %727 = vmatpush1.msra.mxu0 0.0
      %728 = vmatprep.subr.mxu0 0.0
      %729 = vmatpush1.msra.mxu0 0.0
      %730 = vmatprep.subr.mxu0 0.0
      %731 = vmatpush1.msra.mxu0 0.0
      %732 = vmatprep.subr.mxu0 0.0
      %733 = vmatpush1.msra.mxu0 0.0
      %734 = vmatprep.subr.mxu0 0.0
      %735 = vmatpush1.msra.mxu0 0.0
      %736 = vmatprep.subr.mxu0 0.0
      %737 = vmatpush1.msra.mxu0 0.0
      %738 = vmatprep.subr.mxu0 0.0
      %739 = vmatpush1.msra.mxu0 0.0
      %740 = vmatprep.subr.mxu0 0.0
      %741 = vmatpush1.msra.mxu0 0.0
      %742 = vmatprep.subr.mxu0 0.0
      %743 = vmatpush1.msra.mxu0 0.0
      %744 = vmatprep.subr.mxu0 0.0
      %745 = vmatpush1.msra.mxu0 0.0
      %746 = vmatprep.subr.mxu0 0.0
      %747 = vmatpush1.msra.mxu0 0.0
      %748 = vmatprep.subr.mxu0 0.0
      %749 = vmatpush1.msra.mxu0 0.0
      %750 = vmatprep.subr.mxu0 0.0
      %751 = vmatpush1.msra.mxu0 0.0
      %752 = vmatprep.subr.mxu0 0.0
      %753 = vmatpush1.msra.mxu0 0.0
      %754 = vmatprep.subr.mxu0 0.0
      %755 = vmatpush1.msra.mxu0 0.0
      %756 = vmatprep.subr.mxu0 0.0
      %757 = vmatpush1.msra.mxu0 0.0
      %758 = vmatprep.subr.mxu0 0.0
      %759 = vmatpush1.msra.mxu0 0.0
      %760 = vmatprep.subr.mxu0 0.0
      %761 = vmatpush1.msra.mxu0 0.0
      %762 = vmatprep.subr.mxu0 0.0
      %763 = vmatpush1.msra.mxu0 0.0
      %764 = vmatprep.subr.mxu0 0.0
      %765 = vmatpush1.msra.mxu0 0.0
      %766 = vmatprep.subr.mxu0 0.0
      %767 = vmatpush1.msra.mxu0 0.0
      %768 = vmatprep.subr.mxu0 0.0
      %769 = vmatpush1.msra.mxu0 0.0
      %770 = vmatprep.subr.mxu0 0.0
      %771 = vmatpush1.msra.mxu0 0.0
      %772 = vmatprep.subr.mxu0 0.0
      %773 = vmatpush1.msra.mxu0 0.0
      %774 = vmatprep.subr.mxu0 0.0
      %775 = vmatpush1.msra.mxu0 0.0
      %776 = vmatprep.subr.mxu0 0.0
      %777 = vmatpush1.msra.mxu0 0.0
      %778 = vmatprep.subr.mxu0 0.0
      %779 = vmatpush1.msra.mxu0 0.0
      %780 = vmatprep.subr.mxu0 0.0
      %781 = vmatpush1.msra.mxu0 0.0
      %782 = vmatprep.subr.mxu0 0.0
      %783 = vmatpush1.msra.mxu0 0.0
      %784 = vmatprep.subr.mxu0 0.0
      %785 = vmatpush1.msra.mxu0 0.0
      %786 = vmatprep.subr.mxu0 0.0
      %787 = vmatpush1.msra.mxu0 0.0
      %788 = vmatprep.mubr.f32.mxu0 0.0
      %789 = vmatmul.mubr.f32.gmra.mrb[0].mxu0 %v657
      %v790 = vpop.f32.mrb[0].mxu0
      %v791 = vadd.f32 %v499, %v790
      %v792 = vpop.f32.mrb[0].mxu0
      %793 = vmatprep.mubr.f32.mxu0 0.0
      %794 = vmatmul.mubr.f32.gmra.mrb[0].mxu0 %v659
      %v795 = vpop.f32.mrb[0].mxu0
      %v796 = vadd.f32 %v504, %v795
      %v797 = vpop.f32.mrb[0].mxu0
      %798 = vmatprep.mubr.f32.mxu0 0.0
      %799 = vmatmul.mubr.f32.gmra.mrb[0].mxu0 %v661
      %v800 = vpop.f32.mrb[0].mxu0
      %v801 = vadd.f32 %v509, %v800
      %v802 = vpop.f32.mrb[0].mxu0
      %803 = vmatprep.mubr.f32.mxu0 0.0
      %804 = vmatmul.mubr.f32.gmra.mrb[0].mxu0 %v663
      %v805 = vpop.f32.mrb[0].mxu0
      %v806 = vadd.f32 %v514, %v805
      %v807 = vpop.f32.mrb[0].mxu0
      %808 = vmatprep.mubr.f32.mxu0 0.0
      %809 = vmatmul.mubr.f32.gmra.mrb[0].mxu0 %v665
      %v810 = vpop.f32.mrb[0].mxu0
      %v811 = vadd.f32 %v519, %v810
      %v812 = vpop.f32.mrb[0].mxu0
      %813 = vmatprep.mubr.f32.mxu0 0.0
      %814 = vmatmul.mubr.f32.gmra.mrb[0].mxu0 %v667
      %v815 = vpop.f32.mrb[0].mxu0
      %v816 = vadd.f32 %v524, %v815
      %v817 = vpop.f32.mrb[0].mxu0
      %818 = vmatprep.mubr.f32.mxu0 0.0
      %819 = vmatmul.mubr.f32.gmra.mrb[0].mxu0 %v669
      %v820 = vpop.f32.mrb[0].mxu0
      %v821 = vadd.f32 %v529, %v820
      %v822 = vpop.f32.mrb[0].mxu0
      %823 = vmatprep.mubr.f32.mxu0 0.0
      %824 = vmatmul.mubr.f32.gmra.mrb[0].mxu0 %v671
      %v825 = vpop.f32.mrb[0].mxu0
      %v826 = vadd.f32 %v534, %v825
      %v827 = vpop.f32.mrb[0].mxu0
      %828 = vmatprep.mubr.f32.mxu0 0.0
      %829 = vmatmul.mubr.f32.gmra.mrb[0].mxu0 %v673
      %v830 = vpop.f32.mrb[0].mxu0
      %v831 = vadd.f32 %v539, %v830
      %v832 = vpop.f32.mrb[0].mxu0
      %833 = vmatprep.mubr.f32.mxu0 0.0
      %834 = vmatmul.mubr.f32.gmra.mrb[0].mxu0 %v675
      %v835 = vpop.f32.mrb[0].mxu0
      %v836 = vadd.f32 %v544, %v835
      %v837 = vpop.f32.mrb[0].mxu0
      %838 = vmatprep.mubr.f32.mxu0 0.0
      %839 = vmatmul.mubr.f32.gmra.mrb[0].mxu0 %v677
      %v840 = vpop.f32.mrb[0].mxu0
      %v841 = vadd.f32 %v549, %v840
      %v842 = vpop.f32.mrb[0].mxu0
      %843 = vmatprep.mubr.f32.mxu0 0.0
      %844 = vmatmul.mubr.f32.gmra.mrb[0].mxu0 %v679
      %v845 = vpop.f32.mrb[0].mxu0
      %v846 = vadd.f32 %v554, %v845
      %v847 = vpop.f32.mrb[0].mxu0
      %848 = vmatprep.mubr.f32.mxu0 0.0
      %849 = vmatmul.mubr.f32.gmra.mrb[0].mxu0 %v681
      %v850 = vpop.f32.mrb[0].mxu0
      %v851 = vadd.f32 %v559, %v850
      %v852 = vpop.f32.mrb[0].mxu0
      %853 = vmatprep.mubr.f32.mxu0 0.0
      %854 = vmatmul.mubr.f32.gmra.mrb[0].mxu0 %v683
      %v855 = vpop.f32.mrb[0].mxu0
      %v856 = vadd.f32 %v564, %v855
      %v857 = vpop.f32.mrb[0].mxu0
      %858 = vmatprep.mubr.f32.mxu0 0.0
      %859 = vmatmul.mubr.f32.gmra.mrb[0].mxu0 %v685
      %v860 = vpop.f32.mrb[0].mxu0
      %v861 = vadd.f32 %v569, %v860
      %v862 = vpop.f32.mrb[0].mxu0
      %863 = vmatprep.mubr.f32.mxu0 0.0
      %864 = vmatmul.mubr.f32.gmra.mrb[0].mxu0 %v687
      %v865 = vpop.f32.mrb[0].mxu0
      %v866 = vadd.f32 %v574, %v865
      %v867 = vpop.f32.mrb[0].mxu0
      %868 = vmatprep.mubr.f32.mxu0 0.0
      %869 = vmatmul.mubr.f32.gmra.mrb[0].mxu0 %v689
      %v870 = vpop.f32.mrb[0].mxu0
      %v871 = vadd.f32 %v579, %v870
      %v872 = vpop.f32.mrb[0].mxu0
      %873 = vmatprep.mubr.f32.mxu0 0.0
      %874 = vmatmul.mubr.f32.gmra.mrb[0].mxu0 %v691
      %v875 = vpop.f32.mrb[0].mxu0
      %v876 = vadd.f32 %v584, %v875
      %v877 = vpop.f32.mrb[0].mxu0
      %878 = vmatprep.mubr.f32.mxu0 0.0
      %879 = vmatmul.mubr.f32.gmra.mrb[0].mxu0 %v693
      %v880 = vpop.f32.mrb[0].mxu0
      %v881 = vadd.f32 %v589, %v880
      %v882 = vpop.f32.mrb[0].mxu0
      %883 = vmatprep.mubr.f32.mxu0 0.0
      %884 = vmatmul.mubr.f32.gmra.mrb[0].mxu0 %v695
      %v885 = vpop.f32.mrb[0].mxu0
      %v886 = vadd.f32 %v594, %v885
      %v887 = vpop.f32.mrb[0].mxu0
      %888 = vmatprep.mubr.f32.mxu0 0.0
      %889 = vmatmul.mubr.f32.gmra.mrb[0].mxu0 %v697
      %v890 = vpop.f32.mrb[0].mxu0
      %v891 = vadd.f32 %v599, %v890
      %v892 = vpop.f32.mrb[0].mxu0
      %893 = vmatprep.mubr.f32.mxu0 0.0
      %894 = vmatmul.mubr.f32.gmra.mrb[0].mxu0 %v699
      %v895 = vpop.f32.mrb[0].mxu0
      %v896 = vadd.f32 %v604, %v895
      %v897 = vpop.f32.mrb[0].mxu0
      %898 = vmatprep.mubr.f32.mxu0 0.0
      %899 = vmatmul.mubr.f32.gmra.mrb[0].mxu0 %v701
      %v900 = vpop.f32.mrb[0].mxu0
      %v901 = vadd.f32 %v609, %v900
      %v902 = vpop.f32.mrb[0].mxu0
      %903 = vmatprep.mubr.f32.mxu0 0.0
      %904 = vmatmul.mubr.f32.gmra.mrb[0].mxu0 %v703
      %v905 = vpop.f32.mrb[0].mxu0
      %v906 = vadd.f32 %v614, %v905
      %v907 = vpop.f32.mrb[0].mxu0
      %908 = vmatprep.mubr.f32.mxu0 0.0
      %909 = vmatmul.mubr.f32.gmra.mrb[0].mxu0 %v705
      %v910 = vpop.f32.mrb[0].mxu0
      %v911 = vadd.f32 %v619, %v910
      %v912 = vpop.f32.mrb[0].mxu0
      %913 = vmatprep.mubr.f32.mxu0 0.0
      %914 = vmatmul.mubr.f32.gmra.mrb[0].mxu0 %v707
      %v915 = vpop.f32.mrb[0].mxu0
      %v916 = vadd.f32 %v624, %v915
      %v917 = vpop.f32.mrb[0].mxu0
      %918 = vmatprep.mubr.f32.mxu0 0.0
      %919 = vmatmul.mubr.f32.gmra.mrb[0].mxu0 %v709
      %v920 = vpop.f32.mrb[0].mxu0
      %v921 = vadd.f32 %v629, %v920
      %v922 = vpop.f32.mrb[0].mxu0
      %923 = vmatprep.mubr.f32.mxu0 0.0
      %924 = vmatmul.mubr.f32.gmra.mrb[0].mxu0 %v711
      %v925 = vpop.f32.mrb[0].mxu0
      %v926 = vadd.f32 %v634, %v925
      %v927 = vpop.f32.mrb[0].mxu0
      %928 = vmatprep.mubr.f32.mxu0 0.0
      %929 = vmatmul.mubr.f32.gmra.mrb[0].mxu0 %v713
      %v930 = vpop.f32.mrb[0].mxu0
      %v931 = vadd.f32 %v639, %v930
      %v932 = vpop.f32.mrb[0].mxu0
      %933 = vmatprep.mubr.f32.mxu0 0.0
      %934 = vmatmul.mubr.f32.gmra.mrb[0].mxu0 %v715
      %v935 = vpop.f32.mrb[0].mxu0
      %v936 = vadd.f32 %v644, %v935
      %v937 = vpop.f32.mrb[0].mxu0
      %938 = vmatprep.mubr.f32.mxu0 0.0
      %939 = vmatmul.mubr.f32.gmra.mrb[0].mxu0 %v717
      %v940 = vpop.f32.mrb[0].mxu0
      %v941 = vadd.f32 %v649, %v940
      %v942 = vpop.f32.mrb[0].mxu0
      %943 = vmatprep.mubr.f32.mxu0 0.0
      %944 = vmatmul.mubr.f32.gmra.mrb[0].mxu0 %v719
      %v945 = vpop.f32.mrb[0].mxu0
      %v946 = vadd.f32 %v654, %v945
      %v947 = vpop.f32.mrb[0].mxu0
      %948 = vdwg.mxu0
      %vm949 = vcmask 1045504
      %v950 = vrot.slane %v171, 2
      %v951 = vrot.slane %v172, 2
      %v952 = vsel %vm949, %v950, %v951
      %v953 = vrot.slane %v173, 2
      %v954 = vsel %vm949, %v951, %v953
      %v955 = vrot.slane %v174, 2
      %v956 = vrot.slane %v175, 2
      %v957 = vsel %vm949, %v955, %v956
      %v958 = vrot.slane %v176, 2
      %v959 = vsel %vm949, %v956, %v958
      %v960 = vrot.slane %v177, 2
      %v961 = vrot.slane %v178, 2
      %v962 = vsel %vm949, %v960, %v961
      %v963 = vrot.slane %v179, 2
      %v964 = vsel %vm949, %v961, %v963
      %v965 = vrot.slane %v180, 2
      %v966 = vrot.slane %v181, 2
      %v967 = vsel %vm949, %v965, %v966
      %v968 = vrot.slane %v182, 2
      %v969 = vsel %vm949, %v966, %v968
      %v970 = vrot.slane %v183, 2
      %v971 = vrot.slane %v184, 2
      %v972 = vsel %vm949, %v970, %v971
      %v973 = vrot.slane %v185, 2
      %v974 = vsel %vm949, %v971, %v973
      %v975 = vrot.slane %v186, 2
      %v976 = vrot.slane %v187, 2
      %v977 = vsel %vm949, %v975, %v976
      %v978 = vrot.slane %v188, 2
      %v979 = vsel %vm949, %v976, %v978
      %v980 = vrot.slane %v189, 2
      %v981 = vrot.slane %v190, 2
      %v982 = vsel %vm949, %v980, %v981
      %v983 = vrot.slane %v191, 2
      %v984 = vsel %vm949, %v981, %v983
      %v985 = vrot.slane %v192, 2
      %v986 = vrot.slane %v193, 2
      %v987 = vsel %vm949, %v985, %v986
      %v988 = vrot.slane %v194, 2
      %v989 = vsel %vm949, %v986, %v988
      %v990 = vrot.slane %v195, 2
      %v991 = vrot.slane %v196, 2
      %v992 = vsel %vm949, %v990, %v991
      %v993 = vrot.slane %v197, 2
      %v994 = vsel %vm949, %v991, %v993
      %v995 = vrot.slane %v198, 2
      %v996 = vrot.slane %v199, 2
      %v997 = vsel %vm949, %v995, %v996
      %v998 = vrot.slane %v200, 2
      %v999 = vsel %vm949, %v996, %v998
      %v1000 = vrot.slane %v201, 2
      %v1001 = vrot.slane %v202, 2
      %v1002 = vsel %vm949, %v1000, %v1001
      %v1003 = vrot.slane %v203, 2
      %v1004 = vsel %vm949, %v1001, %v1003
      %v1005 = vrot.slane %v204, 2
      %v1006 = vrot.slane %v205, 2
      %v1007 = vsel %vm949, %v1005, %v1006
      %v1008 = vrot.slane %v206, 2
      %v1009 = vsel %vm949, %v1006, %v1008
      %v1010 = vrot.slane %v207, 2
      %v1011 = vrot.slane %v208, 2
      %v1012 = vsel %vm949, %v1010, %v1011
      %v1013 = vrot.slane %v209, 2
      %v1014 = vsel %vm949, %v1011, %v1013
      %v1015 = vrot.slane %v210, 2
      %v1016 = vrot.slane %v211, 2
      %v1017 = vsel %vm949, %v1015, %v1016
      %v1018 = vrot.slane %v212, 2
      %v1019 = vsel %vm949, %v1016, %v1018
      %v1020 = vrot.slane %v213, 2
      %v1021 = vrot.slane %v214, 2
      %v1022 = vsel %vm949, %v1020, %v1021
      %v1023 = vrot.slane %v215, 2
      %v1024 = vsel %vm949, %v1021, %v1023
      %v1025 = vrot.slane %v216, 2
      %v1026 = vrot.slane %v217, 2
      %v1027 = vsel %vm949, %v1025, %v1026
      %v1028 = vrot.slane %v218, 2
      %v1029 = vsel %vm949, %v1026, %v1028
      %v1030 = vsel %vm363, %v952, 0
      %v1032 = vsel %vm363, %v954, 0
      %v1034 = vsel %vm363, %v957, 0
      %v1036 = vsel %vm363, %v959, 0
      %v1038 = vsel %vm363, %v962, 0
      %v1040 = vsel %vm363, %v964, 0
      %v1042 = vsel %vm363, %v967, 0
      %v1044 = vsel %vm363, %v969, 0
      %v1046 = vsel %vm363, %v972, 0
      %v1048 = vsel %vm363, %v974, 0
      %v1050 = vsel %vm363, %v977, 0
      %v1052 = vsel %vm363, %v979, 0
      %v1054 = vsel %vm363, %v982, 0
      %v1056 = vsel %vm363, %v984, 0
      %v1058 = vsel %vm363, %v987, 0
      %v1060 = vsel %vm363, %v989, 0
      %v1062 = vsel %vm363, %v992, 0
      %v1064 = vsel %vm363, %v994, 0
      %v1066 = vsel %vm363, %v997, 0
      %v1068 = vsel %vm363, %v999, 0
      %v1070 = vsel %vm363, %v1002, 0
      %v1072 = vsel %vm363, %v1004, 0
      %v1074 = vsel %vm363, %v1007, 0
      %v1076 = vsel %vm363, %v1009, 0
      %v1078 = vsel %vm363, %v1012, 0
      %v1080 = vsel %vm363, %v1014, 0
      %v1082 = vsel %vm363, %v1017, 0
      %v1084 = vsel %vm363, %v1019, 0
      %v1086 = vsel %vm363, %v1022, 0
      %v1088 = vsel %vm363, %v1024, 0
      %v1090 = vsel %vm363, %v1027, 0
      %v1092 = vsel %vm363, %v1029, 0
      %v1095 = vsel %vm428, %v227, 0
      %1097 = vmatprep.subr.mxu0 0.0
      %1098 = vmatpush1.msra.mxu0 %v1095
      %1099 = vmatprep.subr.mxu0 0.0
      %1100 = vmatpush1.msra.mxu0 0.0
      %1101 = vmatprep.subr.mxu0 0.0
      %1102 = vmatpush1.msra.mxu0 0.0
      %1103 = vmatprep.subr.mxu0 0.0
      %1104 = vmatpush1.msra.mxu0 0.0
      %1105 = vmatprep.subr.mxu0 0.0
      %1106 = vmatpush1.msra.mxu0 0.0
      %1107 = vmatprep.subr.mxu0 0.0
      %1108 = vmatpush1.msra.mxu0 0.0
      %1109 = vmatprep.subr.mxu0 0.0
      %1110 = vmatpush1.msra.mxu0 0.0
      %1111 = vmatprep.subr.mxu0 0.0
      %1112 = vmatpush1.msra.mxu0 0.0
      %1113 = vmatprep.subr.mxu0 0.0
      %1114 = vmatpush1.msra.mxu0 0.0
      %1115 = vmatprep.subr.mxu0 0.0
      %1116 = vmatpush1.msra.mxu0 0.0
      %1117 = vmatprep.subr.mxu0 0.0
      %1118 = vmatpush1.msra.mxu0 0.0
      %1119 = vmatprep.subr.mxu0 0.0
      %1120 = vmatpush1.msra.mxu0 0.0
      %1121 = vmatprep.subr.mxu0 0.0
      %1122 = vmatpush1.msra.mxu0 0.0
      %1123 = vmatprep.subr.mxu0 0.0
      %1124 = vmatpush1.msra.mxu0 0.0
      %1125 = vmatprep.subr.mxu0 0.0
      %1126 = vmatpush1.msra.mxu0 0.0
      %1127 = vmatprep.subr.mxu0 0.0
      %1128 = vmatpush1.msra.mxu0 0.0
      %1129 = vmatprep.subr.mxu0 0.0
      %1130 = vmatpush1.msra.mxu0 0.0
      %1131 = vmatprep.subr.mxu0 0.0
      %1132 = vmatpush1.msra.mxu0 0.0
      %1133 = vmatprep.subr.mxu0 0.0
      %1134 = vmatpush1.msra.mxu0 0.0
      %1135 = vmatprep.subr.mxu0 0.0
      %1136 = vmatpush1.msra.mxu0 0.0
      %1137 = vmatprep.subr.mxu0 0.0
      %1138 = vmatpush1.msra.mxu0 0.0
      %1139 = vmatprep.subr.mxu0 0.0
      %1140 = vmatpush1.msra.mxu0 0.0
      %1141 = vmatprep.subr.mxu0 0.0
      %1142 = vmatpush1.msra.mxu0 0.0
      %1143 = vmatprep.subr.mxu0 0.0
      %1144 = vmatpush1.msra.mxu0 0.0
      %1145 = vmatprep.subr.mxu0 0.0
      %1146 = vmatpush1.msra.mxu0 0.0
      %1147 = vmatprep.subr.mxu0 0.0
      %1148 = vmatpush1.msra.mxu0 0.0
      %1149 = vmatprep.subr.mxu0 0.0
      %1150 = vmatpush1.msra.mxu0 0.0
      %1151 = vmatprep.subr.mxu0 0.0
      %1152 = vmatpush1.msra.mxu0 0.0
      %1153 = vmatprep.subr.mxu0 0.0
      %1154 = vmatpush1.msra.mxu0 0.0
      %1155 = vmatprep.subr.mxu0 0.0
      %1156 = vmatpush1.msra.mxu0 0.0
      %1157 = vmatprep.subr.mxu0 0.0
      %1158 = vmatpush1.msra.mxu0 0.0
      %1159 = vmatprep.subr.mxu0 0.0
      %1160 = vmatpush1.msra.mxu0 0.0
      %1161 = vmatprep.mubr.f32.mxu0 0.0
      %1162 = vmatmul.mubr.f32.gmra.mrb[0].mxu0 %v1030
      %v1163 = vpop.f32.mrb[0].mxu0
      %v1164 = vadd.f32 0.0, %v1163
      %v1165 = vpop.f32.mrb[0].mxu0
      %1166 = vmatprep.mubr.f32.mxu0 0.0
      %1167 = vmatmul.mubr.f32.gmra.mrb[0].mxu0 %v1032
      %v1168 = vpop.f32.mrb[0].mxu0
      %v1169 = vadd.f32 0.0, %v1168
      %v1170 = vpop.f32.mrb[0].mxu0
      %1171 = vmatprep.mubr.f32.mxu0 0.0
      %1172 = vmatmul.mubr.f32.gmra.mrb[0].mxu0 %v1034
      %v1173 = vpop.f32.mrb[0].mxu0
      %v1174 = vadd.f32 0.0, %v1173
      %v1175 = vpop.f32.mrb[0].mxu0
      %1176 = vmatprep.mubr.f32.mxu0 0.0
      %1177 = vmatmul.mubr.f32.gmra.mrb[0].mxu0 %v1036
      %v1178 = vpop.f32.mrb[0].mxu0
      %v1179 = vadd.f32 0.0, %v1178
      %v1180 = vpop.f32.mrb[0].mxu0
      %1181 = vmatprep.mubr.f32.mxu0 0.0
      %1182 = vmatmul.mubr.f32.gmra.mrb[0].mxu0 %v1038
      %v1183 = vpop.f32.mrb[0].mxu0
      %v1184 = vadd.f32 0.0, %v1183
      %v1185 = vpop.f32.mrb[0].mxu0
      %1186 = vmatprep.mubr.f32.mxu0 0.0
      %1187 = vmatmul.mubr.f32.gmra.mrb[0].mxu0 %v1040
      %v1188 = vpop.f32.mrb[0].mxu0
      %v1189 = vadd.f32 0.0, %v1188
      %v1190 = vpop.f32.mrb[0].mxu0
      %1191 = vmatprep.mubr.f32.mxu0 0.0
      %1192 = vmatmul.mubr.f32.gmra.mrb[0].mxu0 %v1042
      %v1193 = vpop.f32.mrb[0].mxu0
      %v1194 = vadd.f32 0.0, %v1193
      %v1195 = vpop.f32.mrb[0].mxu0
      %1196 = vmatprep.mubr.f32.mxu0 0.0
      %1197 = vmatmul.mubr.f32.gmra.mrb[0].mxu0 %v1044
      %v1198 = vpop.f32.mrb[0].mxu0
      %v1199 = vadd.f32 0.0, %v1198
      %v1200 = vpop.f32.mrb[0].mxu0
      %1201 = vmatprep.mubr.f32.mxu0 0.0
      %1202 = vmatmul.mubr.f32.gmra.mrb[0].mxu0 %v1046
      %v1203 = vpop.f32.mrb[0].mxu0
      %v1204 = vadd.f32 0.0, %v1203
      %v1205 = vpop.f32.mrb[0].mxu0
      %1206 = vmatprep.mubr.f32.mxu0 0.0
      %1207 = vmatmul.mubr.f32.gmra.mrb[0].mxu0 %v1048
      %v1208 = vpop.f32.mrb[0].mxu0
      %v1209 = vadd.f32 0.0, %v1208
      %v1210 = vpop.f32.mrb[0].mxu0
      %1211 = vmatprep.mubr.f32.mxu0 0.0
      %1212 = vmatmul.mubr.f32.gmra.mrb[0].mxu0 %v1050
      %v1213 = vpop.f32.mrb[0].mxu0
      %v1214 = vadd.f32 0.0, %v1213
      %v1215 = vpop.f32.mrb[0].mxu0
      %1216 = vmatprep.mubr.f32.mxu0 0.0
      %1217 = vmatmul.mubr.f32.gmra.mrb[0].mxu0 %v1052
      %v1218 = vpop.f32.mrb[0].mxu0
      %v1219 = vadd.f32 0.0, %v1218
      %v1220 = vpop.f32.mrb[0].mxu0
      %1221 = vmatprep.mubr.f32.mxu0 0.0
      %1222 = vmatmul.mubr.f32.gmra.mrb[0].mxu0 %v1054
      %v1223 = vpop.f32.mrb[0].mxu0
      %v1224 = vadd.f32 0.0, %v1223
      %v1225 = vpop.f32.mrb[0].mxu0
      %1226 = vmatprep.mubr.f32.mxu0 0.0
      %1227 = vmatmul.mubr.f32.gmra.mrb[0].mxu0 %v1056
      %v1228 = vpop.f32.mrb[0].mxu0
      %v1229 = vadd.f32 0.0, %v1228
      %v1230 = vpop.f32.mrb[0].mxu0
      %1231 = vmatprep.mubr.f32.mxu0 0.0
      %1232 = vmatmul.mubr.f32.gmra.mrb[0].mxu0 %v1058
      %v1233 = vpop.f32.mrb[0].mxu0
      %v1234 = vadd.f32 0.0, %v1233
      %v1235 = vpop.f32.mrb[0].mxu0
      %1236 = vmatprep.mubr.f32.mxu0 0.0
      %1237 = vmatmul.mubr.f32.gmra.mrb[0].mxu0 %v1060
      %v1238 = vpop.f32.mrb[0].mxu0
      %v1239 = vadd.f32 0.0, %v1238
      %v1240 = vpop.f32.mrb[0].mxu0
      %1241 = vmatprep.mubr.f32.mxu0 0.0
      %1242 = vmatmul.mubr.f32.gmra.mrb[0].mxu0 %v1062
      %v1243 = vpop.f32.mrb[0].mxu0
      %v1244 = vadd.f32 0.0, %v1243
      %v1245 = vpop.f32.mrb[0].mxu0
      %1246 = vmatprep.mubr.f32.mxu0 0.0
      %1247 = vmatmul.mubr.f32.gmra.mrb[0].mxu0 %v1064
      %v1248 = vpop.f32.mrb[0].mxu0
      %v1249 = vadd.f32 0.0, %v1248
      %v1250 = vpop.f32.mrb[0].mxu0
      %1251 = vmatprep.mubr.f32.mxu0 0.0
      %1252 = vmatmul.mubr.f32.gmra.mrb[0].mxu0 %v1066
      %v1253 = vpop.f32.mrb[0].mxu0
      %v1254 = vadd.f32 0.0, %v1253
      %v1255 = vpop.f32.mrb[0].mxu0
      %1256 = vmatprep.mubr.f32.mxu0 0.0
      %1257 = vmatmul.mubr.f32.gmra.mrb[0].mxu0 %v1068
      %v1258 = vpop.f32.mrb[0].mxu0
      %v1259 = vadd.f32 0.0, %v1258
      %v1260 = vpop.f32.mrb[0].mxu0
      %1261 = vmatprep.mubr.f32.mxu0 0.0
      %1262 = vmatmul.mubr.f32.gmra.mrb[0].mxu0 %v1070
      %v1263 = vpop.f32.mrb[0].mxu0
      %v1264 = vadd.f32 0.0, %v1263
      %v1265 = vpop.f32.mrb[0].mxu0
      %1266 = vmatprep.mubr.f32.mxu0 0.0
      %1267 = vmatmul.mubr.f32.gmra.mrb[0].mxu0 %v1072
      %v1268 = vpop.f32.mrb[0].mxu0
      %v1269 = vadd.f32 0.0, %v1268
      %v1270 = vpop.f32.mrb[0].mxu0
      %1271 = vmatprep.mubr.f32.mxu0 0.0
      %1272 = vmatmul.mubr.f32.gmra.mrb[0].mxu0 %v1074
      %v1273 = vpop.f32.mrb[0].mxu0
      %v1274 = vadd.f32 0.0, %v1273
      %v1275 = vpop.f32.mrb[0].mxu0
      %1276 = vmatprep.mubr.f32.mxu0 0.0
      %1277 = vmatmul.mubr.f32.gmra.mrb[0].mxu0 %v1076
      %v1278 = vpop.f32.mrb[0].mxu0
      %v1279 = vadd.f32 0.0, %v1278
      %v1280 = vpop.f32.mrb[0].mxu0
      %1281 = vmatprep.mubr.f32.mxu0 0.0
      %1282 = vmatmul.mubr.f32.gmra.mrb[0].mxu0 %v1078
      %v1283 = vpop.f32.mrb[0].mxu0
      %v1284 = vadd.f32 0.0, %v1283
      %v1285 = vpop.f32.mrb[0].mxu0
      %1286 = vmatprep.mubr.f32.mxu0 0.0
      %1287 = vmatmul.mubr.f32.gmra.mrb[0].mxu0 %v1080
      %v1288 = vpop.f32.mrb[0].mxu0
      %v1289 = vadd.f32 0.0, %v1288
      %v1290 = vpop.f32.mrb[0].mxu0
      %1291 = vmatprep.mubr.f32.mxu0 0.0
      %1292 = vmatmul.mubr.f32.gmra.mrb[0].mxu0 %v1082
      %v1293 = vpop.f32.mrb[0].mxu0
      %v1294 = vadd.f32 0.0, %v1293
      %v1295 = vpop.f32.mrb[0].mxu0
      %1296 = vmatprep.mubr.f32.mxu0 0.0
      %1297 = vmatmul.mubr.f32.gmra.mrb[0].mxu0 %v1084
      %v1298 = vpop.f32.mrb[0].mxu0
      %v1299 = vadd.f32 0.0, %v1298
      %v1300 = vpop.f32.mrb[0].mxu0
      %1301 = vmatprep.mubr.f32.mxu0 0.0
      %1302 = vmatmul.mubr.f32.gmra.mrb[0].mxu0 %v1086
      %v1303 = vpop.f32.mrb[0].mxu0
      %v1304 = vadd.f32 0.0, %v1303
      %v1305 = vpop.f32.mrb[0].mxu0
      %1306 = vmatprep.mubr.f32.mxu0 0.0
      %1307 = vmatmul.mubr.f32.gmra.mrb[0].mxu0 %v1088
      %v1308 = vpop.f32.mrb[0].mxu0
      %v1309 = vadd.f32 0.0, %v1308
      %v1310 = vpop.f32.mrb[0].mxu0
      %1311 = vmatprep.mubr.f32.mxu0 0.0
      %1312 = vmatmul.mubr.f32.gmra.mrb[0].mxu0 %v1090
      %v1313 = vpop.f32.mrb[0].mxu0
      %v1314 = vadd.f32 0.0, %v1313
      %v1315 = vpop.f32.mrb[0].mxu0
      %1316 = vmatprep.mubr.f32.mxu0 0.0
      %1317 = vmatmul.mubr.f32.gmra.mrb[0].mxu0 %v1092
      %v1318 = vpop.f32.mrb[0].mxu0
      %v1319 = vadd.f32 0.0, %v1318
      %v1320 = vpop.f32.mrb[0].mxu0
      %1321 = vdwg.mxu0
      %v1322 = vadd.f32 %v791, %v1164
      %v1323 = vadd.f32 %v796, %v1169
      %v1324 = vadd.f32 %v801, %v1174
      %v1325 = vadd.f32 %v806, %v1179
      %v1326 = vadd.f32 %v811, %v1184
      %v1327 = vadd.f32 %v816, %v1189
      %v1328 = vadd.f32 %v821, %v1194
      %v1329 = vadd.f32 %v826, %v1199
      %v1330 = vadd.f32 %v831, %v1204
      %v1331 = vadd.f32 %v836, %v1209
      %v1332 = vadd.f32 %v841, %v1214
      %v1333 = vadd.f32 %v846, %v1219
      %v1334 = vadd.f32 %v851, %v1224
      %v1335 = vadd.f32 %v856, %v1229
      %v1336 = vadd.f32 %v861, %v1234
      %v1337 = vadd.f32 %v866, %v1239
      %v1338 = vadd.f32 %v871, %v1244
      %v1339 = vadd.f32 %v876, %v1249
      %v1340 = vadd.f32 %v881, %v1254
      %v1341 = vadd.f32 %v886, %v1259
      %v1342 = vadd.f32 %v891, %v1264
      %v1343 = vadd.f32 %v896, %v1269
      %v1344 = vadd.f32 %v901, %v1274
      %v1345 = vadd.f32 %v906, %v1279
      %v1346 = vadd.f32 %v911, %v1284
      %v1347 = vadd.f32 %v916, %v1289
      %v1348 = vadd.f32 %v921, %v1294
      %v1349 = vadd.f32 %v926, %v1299
      %v1350 = vadd.f32 %v931, %v1304
      %v1351 = vadd.f32 %v936, %v1309
      %v1352 = vadd.f32 %v941, %v1314
      %v1353 = vadd.f32 %v946, %v1319
      %v1355 = vsel %vm363, %v219, 0
      %v1358 = vsel %vm363, %v220, 0
      %v1361 = vsel %vm428, %v228, 0
      %1363 = vmatprep.subr.mxu0 0.0
      %1364 = vmatpush1.msra.mxu0 %v1361
      %1365 = vmatprep.subr.mxu0 0.0
      %1366 = vmatpush1.msra.mxu0 0.0
      %1367 = vmatprep.subr.mxu0 0.0
      %1368 = vmatpush1.msra.mxu0 0.0
      %1369 = vmatprep.subr.mxu0 0.0
      %1370 = vmatpush1.msra.mxu0 0.0
      %1371 = vmatprep.subr.mxu0 0.0
      %1372 = vmatpush1.msra.mxu0 0.0
      %1373 = vmatprep.subr.mxu0 0.0
      %1374 = vmatpush1.msra.mxu0 0.0
      %1375 = vmatprep.subr.mxu0 0.0
      %1376 = vmatpush1.msra.mxu0 0.0
      %1377 = vmatprep.subr.mxu0 0.0
      %1378 = vmatpush1.msra.mxu0 0.0
      %1379 = vmatprep.subr.mxu0 0.0
      %1380 = vmatpush1.msra.mxu0 0.0
      %1381 = vmatprep.subr.mxu0 0.0
      %1382 = vmatpush1.msra.mxu0 0.0
      %1383 = vmatprep.subr.mxu0 0.0
      %1384 = vmatpush1.msra.mxu0 0.0
      %1385 = vmatprep.subr.mxu0 0.0
      %1386 = vmatpush1.msra.mxu0 0.0
      %1387 = vmatprep.subr.mxu0 0.0
      %1388 = vmatpush1.msra.mxu0 0.0
      %1389 = vmatprep.subr.mxu0 0.0
      %1390 = vmatpush1.msra.mxu0 0.0
      %1391 = vmatprep.subr.mxu0 0.0
      %1392 = vmatpush1.msra.mxu0 0.0
      %1393 = vmatprep.subr.mxu0 0.0
      %1394 = vmatpush1.msra.mxu0 0.0
      %1395 = vmatprep.subr.mxu0 0.0
      %1396 = vmatpush1.msra.mxu0 0.0
      %1397 = vmatprep.subr.mxu0 0.0
      %1398 = vmatpush1.msra.mxu0 0.0
      %1399 = vmatprep.subr.mxu0 0.0
      %1400 = vmatpush1.msra.mxu0 0.0
      %1401 = vmatprep.subr.mxu0 0.0
      %1402 = vmatpush1.msra.mxu0 0.0
      %1403 = vmatprep.subr.mxu0 0.0
      %1404 = vmatpush1.msra.mxu0 0.0
      %1405 = vmatprep.subr.mxu0 0.0
      %1406 = vmatpush1.msra.mxu0 0.0
      %1407 = vmatprep.subr.mxu0 0.0
      %1408 = vmatpush1.msra.mxu0 0.0
      %1409 = vmatprep.subr.mxu0 0.0
      %1410 = vmatpush1.msra.mxu0 0.0
      %1411 = vmatprep.subr.mxu0 0.0
      %1412 = vmatpush1.msra.mxu0 0.0
      %1413 = vmatprep.subr.mxu0 0.0
      %1414 = vmatpush1.msra.mxu0 0.0
      %1415 = vmatprep.subr.mxu0 0.0
      %1416 = vmatpush1.msra.mxu0 0.0
      %1417 = vmatprep.subr.mxu0 0.0
      %1418 = vmatpush1.msra.mxu0 0.0
      %1419 = vmatprep.subr.mxu0 0.0
      %1420 = vmatpush1.msra.mxu0 0.0
      %1421 = vmatprep.subr.mxu0 0.0
      %1422 = vmatpush1.msra.mxu0 0.0
      %1423 = vmatprep.subr.mxu0 0.0
      %1424 = vmatpush1.msra.mxu0 0.0
      %1425 = vmatprep.subr.mxu0 0.0
      %1426 = vmatpush1.msra.mxu0 0.0
      %1427 = vmatprep.mubr.f32.mxu0 0.0
      %1428 = vmatmul.mubr.f32.gmra.mrb[0].mxu0 %v661
      %v1429 = vpop.f32.mrb[0].mxu0
      %v1430 = vadd.f32 0.0, %v1429
      %v1431 = vpop.f32.mrb[0].mxu0
      %1432 = vmatprep.mubr.f32.mxu0 0.0
      %1433 = vmatmul.mubr.f32.gmra.mrb[0].mxu0 %v663
      %v1434 = vpop.f32.mrb[0].mxu0
      %v1435 = vadd.f32 0.0, %v1434
      %v1436 = vpop.f32.mrb[0].mxu0
      %1437 = vmatprep.mubr.f32.mxu0 0.0
      %1438 = vmatmul.mubr.f32.gmra.mrb[0].mxu0 %v665
      %v1439 = vpop.f32.mrb[0].mxu0
      %v1440 = vadd.f32 0.0, %v1439
      %v1441 = vpop.f32.mrb[0].mxu0
      %1442 = vmatprep.mubr.f32.mxu0 0.0
      %1443 = vmatmul.mubr.f32.gmra.mrb[0].mxu0 %v667
      %v1444 = vpop.f32.mrb[0].mxu0
      %v1445 = vadd.f32 0.0, %v1444
      %v1446 = vpop.f32.mrb[0].mxu0
      %1447 = vmatprep.mubr.f32.mxu0 0.0
      %1448 = vmatmul.mubr.f32.gmra.mrb[0].mxu0 %v669
      %v1449 = vpop.f32.mrb[0].mxu0
      %v1450 = vadd.f32 0.0, %v1449
      %v1451 = vpop.f32.mrb[0].mxu0
      %1452 = vmatprep.mubr.f32.mxu0 0.0
      %1453 = vmatmul.mubr.f32.gmra.mrb[0].mxu0 %v671
      %v1454 = vpop.f32.mrb[0].mxu0
      %v1455 = vadd.f32 0.0, %v1454
      %v1456 = vpop.f32.mrb[0].mxu0
      %1457 = vmatprep.mubr.f32.mxu0 0.0
      %1458 = vmatmul.mubr.f32.gmra.mrb[0].mxu0 %v673
      %v1459 = vpop.f32.mrb[0].mxu0
      %v1460 = vadd.f32 0.0, %v1459
      %v1461 = vpop.f32.mrb[0].mxu0
      %1462 = vmatprep.mubr.f32.mxu0 0.0
      %1463 = vmatmul.mubr.f32.gmra.mrb[0].mxu0 %v675
      %v1464 = vpop.f32.mrb[0].mxu0
      %v1465 = vadd.f32 0.0, %v1464
      %v1466 = vpop.f32.mrb[0].mxu0
      %1467 = vmatprep.mubr.f32.mxu0 0.0
      %1468 = vmatmul.mubr.f32.gmra.mrb[0].mxu0 %v677
      %v1469 = vpop.f32.mrb[0].mxu0
      %v1470 = vadd.f32 0.0, %v1469
      %v1471 = vpop.f32.mrb[0].mxu0
      %1472 = vmatprep.mubr.f32.mxu0 0.0
      %1473 = vmatmul.mubr.f32.gmra.mrb[0].mxu0 %v679
      %v1474 = vpop.f32.mrb[0].mxu0
      %v1475 = vadd.f32 0.0, %v1474
      %v1476 = vpop.f32.mrb[0].mxu0
      %1477 = vmatprep.mubr.f32.mxu0 0.0
      %1478 = vmatmul.mubr.f32.gmra.mrb[0].mxu0 %v681
      %v1479 = vpop.f32.mrb[0].mxu0
      %v1480 = vadd.f32 0.0, %v1479
      %v1481 = vpop.f32.mrb[0].mxu0
      %1482 = vmatprep.mubr.f32.mxu0 0.0
      %1483 = vmatmul.mubr.f32.gmra.mrb[0].mxu0 %v683
      %v1484 = vpop.f32.mrb[0].mxu0
      %v1485 = vadd.f32 0.0, %v1484
      %v1486 = vpop.f32.mrb[0].mxu0
      %1487 = vmatprep.mubr.f32.mxu0 0.0
      %1488 = vmatmul.mubr.f32.gmra.mrb[0].mxu0 %v685
      %v1489 = vpop.f32.mrb[0].mxu0
      %v1490 = vadd.f32 0.0, %v1489
      %v1491 = vpop.f32.mrb[0].mxu0
      %1492 = vmatprep.mubr.f32.mxu0 0.0
      %1493 = vmatmul.mubr.f32.gmra.mrb[0].mxu0 %v687
      %v1494 = vpop.f32.mrb[0].mxu0
      %v1495 = vadd.f32 0.0, %v1494
      %v1496 = vpop.f32.mrb[0].mxu0
      %1497 = vmatprep.mubr.f32.mxu0 0.0
      %1498 = vmatmul.mubr.f32.gmra.mrb[0].mxu0 %v689
      %v1499 = vpop.f32.mrb[0].mxu0
      %v1500 = vadd.f32 0.0, %v1499
      %v1501 = vpop.f32.mrb[0].mxu0
      %1502 = vmatprep.mubr.f32.mxu0 0.0
      %1503 = vmatmul.mubr.f32.gmra.mrb[0].mxu0 %v691
      %v1504 = vpop.f32.mrb[0].mxu0
      %v1505 = vadd.f32 0.0, %v1504
      %v1506 = vpop.f32.mrb[0].mxu0
      %1507 = vmatprep.mubr.f32.mxu0 0.0
      %1508 = vmatmul.mubr.f32.gmra.mrb[0].mxu0 %v693
      %v1509 = vpop.f32.mrb[0].mxu0
      %v1510 = vadd.f32 0.0, %v1509
      %v1511 = vpop.f32.mrb[0].mxu0
      %1512 = vmatprep.mubr.f32.mxu0 0.0
      %1513 = vmatmul.mubr.f32.gmra.mrb[0].mxu0 %v695
      %v1514 = vpop.f32.mrb[0].mxu0
      %v1515 = vadd.f32 0.0, %v1514
      %v1516 = vpop.f32.mrb[0].mxu0
      %1517 = vmatprep.mubr.f32.mxu0 0.0
      %1518 = vmatmul.mubr.f32.gmra.mrb[0].mxu0 %v697
      %v1519 = vpop.f32.mrb[0].mxu0
      %v1520 = vadd.f32 0.0, %v1519
      %v1521 = vpop.f32.mrb[0].mxu0
      %1522 = vmatprep.mubr.f32.mxu0 0.0
      %1523 = vmatmul.mubr.f32.gmra.mrb[0].mxu0 %v699
      %v1524 = vpop.f32.mrb[0].mxu0
      %v1525 = vadd.f32 0.0, %v1524
      %v1526 = vpop.f32.mrb[0].mxu0
      %1527 = vmatprep.mubr.f32.mxu0 0.0
      %1528 = vmatmul.mubr.f32.gmra.mrb[0].mxu0 %v701
      %v1529 = vpop.f32.mrb[0].mxu0
      %v1530 = vadd.f32 0.0, %v1529
      %v1531 = vpop.f32.mrb[0].mxu0
      %1532 = vmatprep.mubr.f32.mxu0 0.0
      %1533 = vmatmul.mubr.f32.gmra.mrb[0].mxu0 %v703
      %v1534 = vpop.f32.mrb[0].mxu0
      %v1535 = vadd.f32 0.0, %v1534
      %v1536 = vpop.f32.mrb[0].mxu0
      %1537 = vmatprep.mubr.f32.mxu0 0.0
      %1538 = vmatmul.mubr.f32.gmra.mrb[0].mxu0 %v705
      %v1539 = vpop.f32.mrb[0].mxu0
      %v1540 = vadd.f32 0.0, %v1539
      %v1541 = vpop.f32.mrb[0].mxu0
      %1542 = vmatprep.mubr.f32.mxu0 0.0
      %1543 = vmatmul.mubr.f32.gmra.mrb[0].mxu0 %v707
      %v1544 = vpop.f32.mrb[0].mxu0
      %v1545 = vadd.f32 0.0, %v1544
      %v1546 = vpop.f32.mrb[0].mxu0
      %1547 = vmatprep.mubr.f32.mxu0 0.0
      %1548 = vmatmul.mubr.f32.gmra.mrb[0].mxu0 %v709
      %v1549 = vpop.f32.mrb[0].mxu0
      %v1550 = vadd.f32 0.0, %v1549
      %v1551 = vpop.f32.mrb[0].mxu0
      %1552 = vmatprep.mubr.f32.mxu0 0.0
      %1553 = vmatmul.mubr.f32.gmra.mrb[0].mxu0 %v711
      %v1554 = vpop.f32.mrb[0].mxu0
      %v1555 = vadd.f32 0.0, %v1554
      %v1556 = vpop.f32.mrb[0].mxu0
      %1557 = vmatprep.mubr.f32.mxu0 0.0
      %1558 = vmatmul.mubr.f32.gmra.mrb[0].mxu0 %v713
      %v1559 = vpop.f32.mrb[0].mxu0
      %v1560 = vadd.f32 0.0, %v1559
      %v1561 = vpop.f32.mrb[0].mxu0
      %1562 = vmatprep.mubr.f32.mxu0 0.0
      %1563 = vmatmul.mubr.f32.gmra.mrb[0].mxu0 %v715
      %v1564 = vpop.f32.mrb[0].mxu0
      %v1565 = vadd.f32 0.0, %v1564
      %v1566 = vpop.f32.mrb[0].mxu0
      %1567 = vmatprep.mubr.f32.mxu0 0.0
      %1568 = vmatmul.mubr.f32.gmra.mrb[0].mxu0 %v717
      %v1569 = vpop.f32.mrb[0].mxu0
      %v1570 = vadd.f32 0.0, %v1569
      %v1571 = vpop.f32.mrb[0].mxu0
      %1572 = vmatprep.mubr.f32.mxu0 0.0
      %1573 = vmatmul.mubr.f32.gmra.mrb[0].mxu0 %v719
      %v1574 = vpop.f32.mrb[0].mxu0
      %v1575 = vadd.f32 0.0, %v1574
      %v1576 = vpop.f32.mrb[0].mxu0
      %1577 = vmatprep.mubr.f32.mxu0 0.0
      %1578 = vmatmul.mubr.f32.gmra.mrb[0].mxu0 %v1355
      %v1579 = vpop.f32.mrb[0].mxu0
      %v1580 = vadd.f32 0.0, %v1579
      %v1581 = vpop.f32.mrb[0].mxu0
      %1582 = vmatprep.mubr.f32.mxu0 0.0
      %1583 = vmatmul.mubr.f32.gmra.mrb[0].mxu0 %v1358
      %v1584 = vpop.f32.mrb[0].mxu0
      %v1585 = vadd.f32 0.0, %v1584
      %v1586 = vpop.f32.mrb[0].mxu0
      %1587 = vdwg.mxu0
      %v1588 = vadd.f32 %v1322, %v1430
      %v1589 = vadd.f32 %v1323, %v1435
      %v1590 = vadd.f32 %v1324, %v1440
      %v1591 = vadd.f32 %v1325, %v1445
      %v1592 = vadd.f32 %v1326, %v1450
      %v1593 = vadd.f32 %v1327, %v1455
      %v1594 = vadd.f32 %v1328, %v1460
      %v1595 = vadd.f32 %v1329, %v1465
      %v1596 = vadd.f32 %v1330, %v1470
      %v1597 = vadd.f32 %v1331, %v1475
      %v1598 = vadd.f32 %v1332, %v1480
      %v1599 = vadd.f32 %v1333, %v1485
      %v1600 = vadd.f32 %v1334, %v1490
      %v1601 = vadd.f32 %v1335, %v1495
      %v1602 = vadd.f32 %v1336, %v1500
      %v1603 = vadd.f32 %v1337, %v1505
      %v1604 = vadd.f32 %v1338, %v1510
      %v1605 = vadd.f32 %v1339, %v1515
      %v1606 = vadd.f32 %v1340, %v1520
      %v1607 = vadd.f32 %v1341, %v1525
      %v1608 = vadd.f32 %v1342, %v1530
      %v1609 = vadd.f32 %v1343, %v1535
      %v1610 = vadd.f32 %v1344, %v1540
      %v1611 = vadd.f32 %v1345, %v1545
      %v1612 = vadd.f32 %v1346, %v1550
      %v1613 = vadd.f32 %v1347, %v1555
      %v1614 = vadd.f32 %v1348, %v1560
      %v1615 = vadd.f32 %v1349, %v1565
      %v1616 = vadd.f32 %v1350, %v1570
      %v1617 = vadd.f32 %v1351, %v1575
      %v1618 = vadd.f32 %v1352, %v1580
      %v1619 = vadd.f32 %v1353, %v1585
      %v1621 = vrot.slane %v219, 1
      %v1622 = vrot.slane %v220, 1
      %v1623 = vsel %vm282, %v1621, %v1622
      %v1624 = vrot.slane %v221, 1
      %v1625 = vsel %vm282, %v1622, %v1624
      %v1626 = vsel %vm363, %v1623, 0
      %v1628 = vsel %vm363, %v1625, 0
      %v1631 = vsel %vm428, %v229, 0
      %1633 = vmatprep.subr.mxu0 0.0
      %1634 = vmatpush1.msra.mxu0 %v1631
      %1635 = vmatprep.subr.mxu0 0.0
      %1636 = vmatpush1.msra.mxu0 0.0
      %1637 = vmatprep.subr.mxu0 0.0
      %1638 = vmatpush1.msra.mxu0 0.0
      %1639 = vmatprep.subr.mxu0 0.0
      %1640 = vmatpush1.msra.mxu0 0.0
      %1641 = vmatprep.subr.mxu0 0.0
      %1642 = vmatpush1.msra.mxu0 0.0
      %1643 = vmatprep.subr.mxu0 0.0
      %1644 = vmatpush1.msra.mxu0 0.0
      %1645 = vmatprep.subr.mxu0 0.0
      %1646 = vmatpush1.msra.mxu0 0.0
      %1647 = vmatprep.subr.mxu0 0.0
      %1648 = vmatpush1.msra.mxu0 0.0
      %1649 = vmatprep.subr.mxu0 0.0
      %1650 = vmatpush1.msra.mxu0 0.0
      %1651 = vmatprep.subr.mxu0 0.0
      %1652 = vmatpush1.msra.mxu0 0.0
      %1653 = vmatprep.subr.mxu0 0.0
      %1654 = vmatpush1.msra.mxu0 0.0
      %1655 = vmatprep.subr.mxu0 0.0
      %1656 = vmatpush1.msra.mxu0 0.0
      %1657 = vmatprep.subr.mxu0 0.0
      %1658 = vmatpush1.msra.mxu0 0.0
      %1659 = vmatprep.subr.mxu0 0.0
      %1660 = vmatpush1.msra.mxu0 0.0
      %1661 = vmatprep.subr.mxu0 0.0
      %1662 = vmatpush1.msra.mxu0 0.0
      %1663 = vmatprep.subr.mxu0 0.0
      %1664 = vmatpush1.msra.mxu0 0.0
      %1665 = vmatprep.subr.mxu0 0.0
      %1666 = vmatpush1.msra.mxu0 0.0
      %1667 = vmatprep.subr.mxu0 0.0
      %1668 = vmatpush1.msra.mxu0 0.0
      %1669 = vmatprep.subr.mxu0 0.0
      %1670 = vmatpush1.msra.mxu0 0.0
      %1671 = vmatprep.subr.mxu0 0.0
      %1672 = vmatpush1.msra.mxu0 0.0
      %1673 = vmatprep.subr.mxu0 0.0
      %1674 = vmatpush1.msra.mxu0 0.0
      %1675 = vmatprep.subr.mxu0 0.0
      %1676 = vmatpush1.msra.mxu0 0.0
      %1677 = vmatprep.subr.mxu0 0.0
      %1678 = vmatpush1.msra.mxu0 0.0
      %1679 = vmatprep.subr.mxu0 0.0
      %1680 = vmatpush1.msra.mxu0 0.0
      %1681 = vmatprep.subr.mxu0 0.0
      %1682 = vmatpush1.msra.mxu0 0.0
      %1683 = vmatprep.subr.mxu0 0.0
      %1684 = vmatpush1.msra.mxu0 0.0
      %1685 = vmatprep.subr.mxu0 0.0
      %1686 = vmatpush1.msra.mxu0 0.0
      %1687 = vmatprep.subr.mxu0 0.0
      %1688 = vmatpush1.msra.mxu0 0.0
      %1689 = vmatprep.subr.mxu0 0.0
      %1690 = vmatpush1.msra.mxu0 0.0
      %1691 = vmatprep.subr.mxu0 0.0
      %1692 = vmatpush1.msra.mxu0 0.0
      %1693 = vmatprep.subr.mxu0 0.0
      %1694 = vmatpush1.msra.mxu0 0.0
      %1695 = vmatprep.subr.mxu0 0.0
      %1696 = vmatpush1.msra.mxu0 0.0
      %1697 = vmatprep.mubr.f32.mxu0 0.0
      %1698 = vmatmul.mubr.f32.gmra.mrb[0].mxu0 %v368
      %v1699 = vpop.f32.mrb[0].mxu0
      %v1700 = vadd.f32 0.0, %v1699
      %v1701 = vpop.f32.mrb[0].mxu0
      %1702 = vmatprep.mubr.f32.mxu0 0.0
      %1703 = vmatmul.mubr.f32.gmra.mrb[0].mxu0 %v370
      %v1704 = vpop.f32.mrb[0].mxu0
      %v1705 = vadd.f32 0.0, %v1704
      %v1706 = vpop.f32.mrb[0].mxu0
      %1707 = vmatprep.mubr.f32.mxu0 0.0
      %1708 = vmatmul.mubr.f32.gmra.mrb[0].mxu0 %v372
      %v1709 = vpop.f32.mrb[0].mxu0
      %v1710 = vadd.f32 0.0, %v1709
      %v1711 = vpop.f32.mrb[0].mxu0
      %1712 = vmatprep.mubr.f32.mxu0 0.0
      %1713 = vmatmul.mubr.f32.gmra.mrb[0].mxu0 %v374
      %v1714 = vpop.f32.mrb[0].mxu0
      %v1715 = vadd.f32 0.0, %v1714
      %v1716 = vpop.f32.mrb[0].mxu0
      %1717 = vmatprep.mubr.f32.mxu0 0.0
      %1718 = vmatmul.mubr.f32.gmra.mrb[0].mxu0 %v376
      %v1719 = vpop.f32.mrb[0].mxu0
      %v1720 = vadd.f32 0.0, %v1719
      %v1721 = vpop.f32.mrb[0].mxu0
      %1722 = vmatprep.mubr.f32.mxu0 0.0
      %1723 = vmatmul.mubr.f32.gmra.mrb[0].mxu0 %v378
      %v1724 = vpop.f32.mrb[0].mxu0
      %v1725 = vadd.f32 0.0, %v1724
      %v1726 = vpop.f32.mrb[0].mxu0
      %1727 = vmatprep.mubr.f32.mxu0 0.0
      %1728 = vmatmul.mubr.f32.gmra.mrb[0].mxu0 %v380
      %v1729 = vpop.f32.mrb[0].mxu0
      %v1730 = vadd.f32 0.0, %v1729
      %v1731 = vpop.f32.mrb[0].mxu0
      %1732 = vmatprep.mubr.f32.mxu0 0.0
      %1733 = vmatmul.mubr.f32.gmra.mrb[0].mxu0 %v382
      %v1734 = vpop.f32.mrb[0].mxu0
      %v1735 = vadd.f32 0.0, %v1734
      %v1736 = vpop.f32.mrb[0].mxu0
      %1737 = vmatprep.mubr.f32.mxu0 0.0
      %1738 = vmatmul.mubr.f32.gmra.mrb[0].mxu0 %v384
      %v1739 = vpop.f32.mrb[0].mxu0
      %v1740 = vadd.f32 0.0, %v1739
      %v1741 = vpop.f32.mrb[0].mxu0
      %1742 = vmatprep.mubr.f32.mxu0 0.0
      %1743 = vmatmul.mubr.f32.gmra.mrb[0].mxu0 %v386
      %v1744 = vpop.f32.mrb[0].mxu0
      %v1745 = vadd.f32 0.0, %v1744
      %v1746 = vpop.f32.mrb[0].mxu0
      %1747 = vmatprep.mubr.f32.mxu0 0.0
      %1748 = vmatmul.mubr.f32.gmra.mrb[0].mxu0 %v388
      %v1749 = vpop.f32.mrb[0].mxu0
      %v1750 = vadd.f32 0.0, %v1749
      %v1751 = vpop.f32.mrb[0].mxu0
      %1752 = vmatprep.mubr.f32.mxu0 0.0
      %1753 = vmatmul.mubr.f32.gmra.mrb[0].mxu0 %v390
      %v1754 = vpop.f32.mrb[0].mxu0
      %v1755 = vadd.f32 0.0, %v1754
      %v1756 = vpop.f32.mrb[0].mxu0
      %1757 = vmatprep.mubr.f32.mxu0 0.0
      %1758 = vmatmul.mubr.f32.gmra.mrb[0].mxu0 %v392
      %v1759 = vpop.f32.mrb[0].mxu0
      %v1760 = vadd.f32 0.0, %v1759
      %v1761 = vpop.f32.mrb[0].mxu0
      %1762 = vmatprep.mubr.f32.mxu0 0.0
      %1763 = vmatmul.mubr.f32.gmra.mrb[0].mxu0 %v394
      %v1764 = vpop.f32.mrb[0].mxu0
      %v1765 = vadd.f32 0.0, %v1764
      %v1766 = vpop.f32.mrb[0].mxu0
      %1767 = vmatprep.mubr.f32.mxu0 0.0
      %1768 = vmatmul.mubr.f32.gmra.mrb[0].mxu0 %v396
      %v1769 = vpop.f32.mrb[0].mxu0
      %v1770 = vadd.f32 0.0, %v1769
      %v1771 = vpop.f32.mrb[0].mxu0
      %1772 = vmatprep.mubr.f32.mxu0 0.0
      %1773 = vmatmul.mubr.f32.gmra.mrb[0].mxu0 %v398
      %v1774 = vpop.f32.mrb[0].mxu0
      %v1775 = vadd.f32 0.0, %v1774
      %v1776 = vpop.f32.mrb[0].mxu0
      %1777 = vmatprep.mubr.f32.mxu0 0.0
      %1778 = vmatmul.mubr.f32.gmra.mrb[0].mxu0 %v400
      %v1779 = vpop.f32.mrb[0].mxu0
      %v1780 = vadd.f32 0.0, %v1779
      %v1781 = vpop.f32.mrb[0].mxu0
      %1782 = vmatprep.mubr.f32.mxu0 0.0
      %1783 = vmatmul.mubr.f32.gmra.mrb[0].mxu0 %v402
      %v1784 = vpop.f32.mrb[0].mxu0
      %v1785 = vadd.f32 0.0, %v1784
      %v1786 = vpop.f32.mrb[0].mxu0
      %1787 = vmatprep.mubr.f32.mxu0 0.0
      %1788 = vmatmul.mubr.f32.gmra.mrb[0].mxu0 %v404
      %v1789 = vpop.f32.mrb[0].mxu0
      %v1790 = vadd.f32 0.0, %v1789
      %v1791 = vpop.f32.mrb[0].mxu0
      %1792 = vmatprep.mubr.f32.mxu0 0.0
      %1793 = vmatmul.mubr.f32.gmra.mrb[0].mxu0 %v406
      %v1794 = vpop.f32.mrb[0].mxu0
      %v1795 = vadd.f32 0.0, %v1794
      %v1796 = vpop.f32.mrb[0].mxu0
      %1797 = vmatprep.mubr.f32.mxu0 0.0
      %1798 = vmatmul.mubr.f32.gmra.mrb[0].mxu0 %v408
      %v1799 = vpop.f32.mrb[0].mxu0
      %v1800 = vadd.f32 0.0, %v1799
      %v1801 = vpop.f32.mrb[0].mxu0
      %1802 = vmatprep.mubr.f32.mxu0 0.0
      %1803 = vmatmul.mubr.f32.gmra.mrb[0].mxu0 %v410
      %v1804 = vpop.f32.mrb[0].mxu0
      %v1805 = vadd.f32 0.0, %v1804
      %v1806 = vpop.f32.mrb[0].mxu0
      %1807 = vmatprep.mubr.f32.mxu0 0.0
      %1808 = vmatmul.mubr.f32.gmra.mrb[0].mxu0 %v412
      %v1809 = vpop.f32.mrb[0].mxu0
      %v1810 = vadd.f32 0.0, %v1809
      %v1811 = vpop.f32.mrb[0].mxu0
      %1812 = vmatprep.mubr.f32.mxu0 0.0
      %1813 = vmatmul.mubr.f32.gmra.mrb[0].mxu0 %v414
      %v1814 = vpop.f32.mrb[0].mxu0
      %v1815 = vadd.f32 0.0, %v1814
      %v1816 = vpop.f32.mrb[0].mxu0
      %1817 = vmatprep.mubr.f32.mxu0 0.0
      %1818 = vmatmul.mubr.f32.gmra.mrb[0].mxu0 %v416
      %v1819 = vpop.f32.mrb[0].mxu0
      %v1820 = vadd.f32 0.0, %v1819
      %v1821 = vpop.f32.mrb[0].mxu0
      %1822 = vmatprep.mubr.f32.mxu0 0.0
      %1823 = vmatmul.mubr.f32.gmra.mrb[0].mxu0 %v418
      %v1824 = vpop.f32.mrb[0].mxu0
      %v1825 = vadd.f32 0.0, %v1824
      %v1826 = vpop.f32.mrb[0].mxu0
      %1827 = vmatprep.mubr.f32.mxu0 0.0
      %1828 = vmatmul.mubr.f32.gmra.mrb[0].mxu0 %v420
      %v1829 = vpop.f32.mrb[0].mxu0
      %v1830 = vadd.f32 0.0, %v1829
      %v1831 = vpop.f32.mrb[0].mxu0
      %1832 = vmatprep.mubr.f32.mxu0 0.0
      %1833 = vmatmul.mubr.f32.gmra.mrb[0].mxu0 %v422
      %v1834 = vpop.f32.mrb[0].mxu0
      %v1835 = vadd.f32 0.0, %v1834
      %v1836 = vpop.f32.mrb[0].mxu0
      %1837 = vmatprep.mubr.f32.mxu0 0.0
      %1838 = vmatmul.mubr.f32.gmra.mrb[0].mxu0 %v424
      %v1839 = vpop.f32.mrb[0].mxu0
      %v1840 = vadd.f32 0.0, %v1839
      %v1841 = vpop.f32.mrb[0].mxu0
      %1842 = vmatprep.mubr.f32.mxu0 0.0
      %1843 = vmatmul.mubr.f32.gmra.mrb[0].mxu0 %v426
      %v1844 = vpop.f32.mrb[0].mxu0
      %v1845 = vadd.f32 0.0, %v1844
      %v1846 = vpop.f32.mrb[0].mxu0
      %1847 = vmatprep.mubr.f32.mxu0 0.0
      %1848 = vmatmul.mubr.f32.gmra.mrb[0].mxu0 %v1626
      %v1849 = vpop.f32.mrb[0].mxu0
      %v1850 = vadd.f32 0.0, %v1849
      %v1851 = vpop.f32.mrb[0].mxu0
      %1852 = vmatprep.mubr.f32.mxu0 0.0
      %1853 = vmatmul.mubr.f32.gmra.mrb[0].mxu0 %v1628
      %v1854 = vpop.f32.mrb[0].mxu0
      %v1855 = vadd.f32 0.0, %v1854
      %v1856 = vpop.f32.mrb[0].mxu0
      %1857 = vdwg.mxu0
      %v1858 = vadd.f32 %v1588, %v1700
      %v1859 = vadd.f32 %v1589, %v1705
      %v1860 = vadd.f32 %v1590, %v1710
      %v1861 = vadd.f32 %v1591, %v1715
      %v1862 = vadd.f32 %v1592, %v1720
      %v1863 = vadd.f32 %v1593, %v1725
      %v1864 = vadd.f32 %v1594, %v1730
      %v1865 = vadd.f32 %v1595, %v1735
      %v1866 = vadd.f32 %v1596, %v1740
      %v1867 = vadd.f32 %v1597, %v1745
      %v1868 = vadd.f32 %v1598, %v1750
      %v1869 = vadd.f32 %v1599, %v1755
      %v1870 = vadd.f32 %v1600, %v1760
      %v1871 = vadd.f32 %v1601, %v1765
      %v1872 = vadd.f32 %v1602, %v1770
      %v1873 = vadd.f32 %v1603, %v1775
      %v1874 = vadd.f32 %v1604, %v1780
      %v1875 = vadd.f32 %v1605, %v1785
      %v1876 = vadd.f32 %v1606, %v1790
      %v1877 = vadd.f32 %v1607, %v1795
      %v1878 = vadd.f32 %v1608, %v1800
      %v1879 = vadd.f32 %v1609, %v1805
      %v1880 = vadd.f32 %v1610, %v1810
      %v1881 = vadd.f32 %v1611, %v1815
      %v1882 = vadd.f32 %v1612, %v1820
      %v1883 = vadd.f32 %v1613, %v1825
      %v1884 = vadd.f32 %v1614, %v1830
      %v1885 = vadd.f32 %v1615, %v1835
      %v1886 = vadd.f32 %v1616, %v1840
      %v1887 = vadd.f32 %v1617, %v1845
      %v1888 = vadd.f32 %v1618, %v1850
      %v1889 = vadd.f32 %v1619, %v1855
      %v1890 = vrot.slane %v219, 2
      %v1891 = vrot.slane %v220, 2
      %v1892 = vsel %vm949, %v1890, %v1891
      %v1893 = vrot.slane %v221, 2
      %v1894 = vsel %vm949, %v1891, %v1893
      %v1895 = vsel %vm363, %v1892, 0
      %v1897 = vsel %vm363, %v1894, 0
      %v1900 = vsel %vm428, %v230, 0
      %1902 = vmatprep.subr.mxu0 0.0
      %1903 = vmatpush1.msra.mxu0 %v1900
      %1904 = vmatprep.subr.mxu0 0.0
      %1905 = vmatpush1.msra.mxu0 0.0
      %1906 = vmatprep.subr.mxu0 0.0
      %1907 = vmatpush1.msra.mxu0 0.0
      %1908 = vmatprep.subr.mxu0 0.0
      %1909 = vmatpush1.msra.mxu0 0.0
      %1910 = vmatprep.subr.mxu0 0.0
      %1911 = vmatpush1.msra.mxu0 0.0
      %1912 = vmatprep.subr.mxu0 0.0
      %1913 = vmatpush1.msra.mxu0 0.0
      %1914 = vmatprep.subr.mxu0 0.0
      %1915 = vmatpush1.msra.mxu0 0.0
      %1916 = vmatprep.subr.mxu0 0.0
      %1917 = vmatpush1.msra.mxu0 0.0
      %1918 = vmatprep.subr.mxu0 0.0
      %1919 = vmatpush1.msra.mxu0 0.0
      %1920 = vmatprep.subr.mxu0 0.0
      %1921 = vmatpush1.msra.mxu0 0.0
      %1922 = vmatprep.subr.mxu0 0.0
      %1923 = vmatpush1.msra.mxu0 0.0
      %1924 = vmatprep.subr.mxu0 0.0
      %1925 = vmatpush1.msra.mxu0 0.0
      %1926 = vmatprep.subr.mxu0 0.0
      %1927 = vmatpush1.msra.mxu0 0.0
      %1928 = vmatprep.subr.mxu0 0.0
      %1929 = vmatpush1.msra.mxu0 0.0
      %1930 = vmatprep.subr.mxu0 0.0
      %1931 = vmatpush1.msra.mxu0 0.0
      %1932 = vmatprep.subr.mxu0 0.0
      %1933 = vmatpush1.msra.mxu0 0.0
      %1934 = vmatprep.subr.mxu0 0.0
      %1935 = vmatpush1.msra.mxu0 0.0
      %1936 = vmatprep.subr.mxu0 0.0
      %1937 = vmatpush1.msra.mxu0 0.0
      %1938 = vmatprep.subr.mxu0 0.0
      %1939 = vmatpush1.msra.mxu0 0.0
      %1940 = vmatprep.subr.mxu0 0.0
      %1941 = vmatpush1.msra.mxu0 0.0
      %1942 = vmatprep.subr.mxu0 0.0
      %1943 = vmatpush1.msra.mxu0 0.0
      %1944 = vmatprep.subr.mxu0 0.0
      %1945 = vmatpush1.msra.mxu0 0.0
      %1946 = vmatprep.subr.mxu0 0.0
      %1947 = vmatpush1.msra.mxu0 0.0
      %1948 = vmatprep.subr.mxu0 0.0
      %1949 = vmatpush1.msra.mxu0 0.0
      %1950 = vmatprep.subr.mxu0 0.0
      %1951 = vmatpush1.msra.mxu0 0.0
      %1952 = vmatprep.subr.mxu0 0.0
      %1953 = vmatpush1.msra.mxu0 0.0
      %1954 = vmatprep.subr.mxu0 0.0
      %1955 = vmatpush1.msra.mxu0 0.0
      %1956 = vmatprep.subr.mxu0 0.0
      %1957 = vmatpush1.msra.mxu0 0.0
      %1958 = vmatprep.subr.mxu0 0.0
      %1959 = vmatpush1.msra.mxu0 0.0
      %1960 = vmatprep.subr.mxu0 0.0
      %1961 = vmatpush1.msra.mxu0 0.0
      %1962 = vmatprep.subr.mxu0 0.0
      %1963 = vmatpush1.msra.mxu0 0.0
      %1964 = vmatprep.subr.mxu0 0.0
      %1965 = vmatpush1.msra.mxu0 0.0
      %1966 = vmatprep.mubr.f32.mxu0 0.0
      %1967 = vmatmul.mubr.f32.gmra.mrb[0].mxu0 %v1034
      %v1968 = vpop.f32.mrb[0].mxu0
      %v1969 = vadd.f32 0.0, %v1968
      %v1970 = vpop.f32.mrb[0].mxu0
      %1971 = vmatprep.mubr.f32.mxu0 0.0
      %1972 = vmatmul.mubr.f32.gmra.mrb[0].mxu0 %v1036
      %v1973 = vpop.f32.mrb[0].mxu0
      %v1974 = vadd.f32 0.0, %v1973
      %v1975 = vpop.f32.mrb[0].mxu0
      %1976 = vmatprep.mubr.f32.mxu0 0.0
      %1977 = vmatmul.mubr.f32.gmra.mrb[0].mxu0 %v1038
      %v1978 = vpop.f32.mrb[0].mxu0
      %v1979 = vadd.f32 0.0, %v1978
      %v1980 = vpop.f32.mrb[0].mxu0
      %1981 = vmatprep.mubr.f32.mxu0 0.0
      %1982 = vmatmul.mubr.f32.gmra.mrb[0].mxu0 %v1040
      %v1983 = vpop.f32.mrb[0].mxu0
      %v1984 = vadd.f32 0.0, %v1983
      %v1985 = vpop.f32.mrb[0].mxu0
      %1986 = vmatprep.mubr.f32.mxu0 0.0
      %1987 = vmatmul.mubr.f32.gmra.mrb[0].mxu0 %v1042
      %v1988 = vpop.f32.mrb[0].mxu0
      %v1989 = vadd.f32 0.0, %v1988
      %v1990 = vpop.f32.mrb[0].mxu0
      %1991 = vmatprep.mubr.f32.mxu0 0.0
      %1992 = vmatmul.mubr.f32.gmra.mrb[0].mxu0 %v1044
      %v1993 = vpop.f32.mrb[0].mxu0
      %v1994 = vadd.f32 0.0, %v1993
      %v1995 = vpop.f32.mrb[0].mxu0
      %1996 = vmatprep.mubr.f32.mxu0 0.0
      %1997 = vmatmul.mubr.f32.gmra.mrb[0].mxu0 %v1046
      %v1998 = vpop.f32.mrb[0].mxu0
      %v1999 = vadd.f32 0.0, %v1998
      %v2000 = vpop.f32.mrb[0].mxu0
      %2001 = vmatprep.mubr.f32.mxu0 0.0
      %2002 = vmatmul.mubr.f32.gmra.mrb[0].mxu0 %v1048
      %v2003 = vpop.f32.mrb[0].mxu0
      %v2004 = vadd.f32 0.0, %v2003
      %v2005 = vpop.f32.mrb[0].mxu0
      %2006 = vmatprep.mubr.f32.mxu0 0.0
      %2007 = vmatmul.mubr.f32.gmra.mrb[0].mxu0 %v1050
      %v2008 = vpop.f32.mrb[0].mxu0
      %v2009 = vadd.f32 0.0, %v2008
      %v2010 = vpop.f32.mrb[0].mxu0
      %2011 = vmatprep.mubr.f32.mxu0 0.0
      %2012 = vmatmul.mubr.f32.gmra.mrb[0].mxu0 %v1052
      %v2013 = vpop.f32.mrb[0].mxu0
      %v2014 = vadd.f32 0.0, %v2013
      %v2015 = vpop.f32.mrb[0].mxu0
      %2016 = vmatprep.mubr.f32.mxu0 0.0
      %2017 = vmatmul.mubr.f32.gmra.mrb[0].mxu0 %v1054
      %v2018 = vpop.f32.mrb[0].mxu0
      %v2019 = vadd.f32 0.0, %v2018
      %v2020 = vpop.f32.mrb[0].mxu0
      %2021 = vmatprep.mubr.f32.mxu0 0.0
      %2022 = vmatmul.mubr.f32.gmra.mrb[0].mxu0 %v1056
      %v2023 = vpop.f32.mrb[0].mxu0
      %v2024 = vadd.f32 0.0, %v2023
      %v2025 = vpop.f32.mrb[0].mxu0
      %2026 = vmatprep.mubr.f32.mxu0 0.0
      %2027 = vmatmul.mubr.f32.gmra.mrb[0].mxu0 %v1058
      %v2028 = vpop.f32.mrb[0].mxu0
      %v2029 = vadd.f32 0.0, %v2028
      %v2030 = vpop.f32.mrb[0].mxu0
      %2031 = vmatprep.mubr.f32.mxu0 0.0
      %2032 = vmatmul.mubr.f32.gmra.mrb[0].mxu0 %v1060
      %v2033 = vpop.f32.mrb[0].mxu0
      %v2034 = vadd.f32 0.0, %v2033
      %v2035 = vpop.f32.mrb[0].mxu0
      %2036 = vmatprep.mubr.f32.mxu0 0.0
      %2037 = vmatmul.mubr.f32.gmra.mrb[0].mxu0 %v1062
      %v2038 = vpop.f32.mrb[0].mxu0
      %v2039 = vadd.f32 0.0, %v2038
      %v2040 = vpop.f32.mrb[0].mxu0
      %2041 = vmatprep.mubr.f32.mxu0 0.0
      %2042 = vmatmul.mubr.f32.gmra.mrb[0].mxu0 %v1064
      %v2043 = vpop.f32.mrb[0].mxu0
      %v2044 = vadd.f32 0.0, %v2043
      %v2045 = vpop.f32.mrb[0].mxu0
      %2046 = vmatprep.mubr.f32.mxu0 0.0
      %2047 = vmatmul.mubr.f32.gmra.mrb[0].mxu0 %v1066
      %v2048 = vpop.f32.mrb[0].mxu0
      %v2049 = vadd.f32 0.0, %v2048
      %v2050 = vpop.f32.mrb[0].mxu0
      %2051 = vmatprep.mubr.f32.mxu0 0.0
      %2052 = vmatmul.mubr.f32.gmra.mrb[0].mxu0 %v1068
      %v2053 = vpop.f32.mrb[0].mxu0
      %v2054 = vadd.f32 0.0, %v2053
      %v2055 = vpop.f32.mrb[0].mxu0
      %2056 = vmatprep.mubr.f32.mxu0 0.0
      %2057 = vmatmul.mubr.f32.gmra.mrb[0].mxu0 %v1070
      %v2058 = vpop.f32.mrb[0].mxu0
      %v2059 = vadd.f32 0.0, %v2058
      %v2060 = vpop.f32.mrb[0].mxu0
      %2061 = vmatprep.mubr.f32.mxu0 0.0
      %2062 = vmatmul.mubr.f32.gmra.mrb[0].mxu0 %v1072
      %v2063 = vpop.f32.mrb[0].mxu0
      %v2064 = vadd.f32 0.0, %v2063
      %v2065 = vpop.f32.mrb[0].mxu0
      %2066 = vmatprep.mubr.f32.mxu0 0.0
      %2067 = vmatmul.mubr.f32.gmra.mrb[0].mxu0 %v1074
      %v2068 = vpop.f32.mrb[0].mxu0
      %v2069 = vadd.f32 0.0, %v2068
      %v2070 = vpop.f32.mrb[0].mxu0
      %2071 = vmatprep.mubr.f32.mxu0 0.0
      %2072 = vmatmul.mubr.f32.gmra.mrb[0].mxu0 %v1076
      %v2073 = vpop.f32.mrb[0].mxu0
      %v2074 = vadd.f32 0.0, %v2073
      %v2075 = vpop.f32.mrb[0].mxu0
      %2076 = vmatprep.mubr.f32.mxu0 0.0
      %2077 = vmatmul.mubr.f32.gmra.mrb[0].mxu0 %v1078
      %v2078 = vpop.f32.mrb[0].mxu0
      %v2079 = vadd.f32 0.0, %v2078
      %v2080 = vpop.f32.mrb[0].mxu0
      %2081 = vmatprep.mubr.f32.mxu0 0.0
      %2082 = vmatmul.mubr.f32.gmra.mrb[0].mxu0 %v1080
      %v2083 = vpop.f32.mrb[0].mxu0
      %v2084 = vadd.f32 0.0, %v2083
      %v2085 = vpop.f32.mrb[0].mxu0
      %2086 = vmatprep.mubr.f32.mxu0 0.0
      %2087 = vmatmul.mubr.f32.gmra.mrb[0].mxu0 %v1082
      %v2088 = vpop.f32.mrb[0].mxu0
      %v2089 = vadd.f32 0.0, %v2088
      %v2090 = vpop.f32.mrb[0].mxu0
      %2091 = vmatprep.mubr.f32.mxu0 0.0
      %2092 = vmatmul.mubr.f32.gmra.mrb[0].mxu0 %v1084
      %v2093 = vpop.f32.mrb[0].mxu0
      %v2094 = vadd.f32 0.0, %v2093
      %v2095 = vpop.f32.mrb[0].mxu0
      %2096 = vmatprep.mubr.f32.mxu0 0.0
      %2097 = vmatmul.mubr.f32.gmra.mrb[0].mxu0 %v1086
      %v2098 = vpop.f32.mrb[0].mxu0
      %v2099 = vadd.f32 0.0, %v2098
      %v2100 = vpop.f32.mrb[0].mxu0
      %2101 = vmatprep.mubr.f32.mxu0 0.0
      %2102 = vmatmul.mubr.f32.gmra.mrb[0].mxu0 %v1088
      %v2103 = vpop.f32.mrb[0].mxu0
      %v2104 = vadd.f32 0.0, %v2103
      %v2105 = vpop.f32.mrb[0].mxu0
      %2106 = vmatprep.mubr.f32.mxu0 0.0
      %2107 = vmatmul.mubr.f32.gmra.mrb[0].mxu0 %v1090
      %v2108 = vpop.f32.mrb[0].mxu0
      %v2109 = vadd.f32 0.0, %v2108
      %v2110 = vpop.f32.mrb[0].mxu0
      %2111 = vmatprep.mubr.f32.mxu0 0.0
      %2112 = vmatmul.mubr.f32.gmra.mrb[0].mxu0 %v1092
      %v2113 = vpop.f32.mrb[0].mxu0
      %v2114 = vadd.f32 0.0, %v2113
      %v2115 = vpop.f32.mrb[0].mxu0
      %2116 = vmatprep.mubr.f32.mxu0 0.0
      %2117 = vmatmul.mubr.f32.gmra.mrb[0].mxu0 %v1895
      %v2118 = vpop.f32.mrb[0].mxu0
      %v2119 = vadd.f32 0.0, %v2118
      %v2120 = vpop.f32.mrb[0].mxu0
      %2121 = vmatprep.mubr.f32.mxu0 0.0
      %2122 = vmatmul.mubr.f32.gmra.mrb[0].mxu0 %v1897
      %v2123 = vpop.f32.mrb[0].mxu0
      %v2124 = vadd.f32 0.0, %v2123
      %v2125 = vpop.f32.mrb[0].mxu0
      %2126 = vdwg.mxu0
      %v2127 = vadd.f32 %v1858, %v1969
      %v2128 = vadd.f32 %v1859, %v1974
      %v2129 = vadd.f32 %v1860, %v1979
      %v2130 = vadd.f32 %v1861, %v1984
      %v2131 = vadd.f32 %v1862, %v1989
      %v2132 = vadd.f32 %v1863, %v1994
      %v2133 = vadd.f32 %v1864, %v1999
      %v2134 = vadd.f32 %v1865, %v2004
      %v2135 = vadd.f32 %v1866, %v2009
      %v2136 = vadd.f32 %v1867, %v2014
      %v2137 = vadd.f32 %v1868, %v2019
      %v2138 = vadd.f32 %v1869, %v2024
      %v2139 = vadd.f32 %v1870, %v2029
      %v2140 = vadd.f32 %v1871, %v2034
      %v2141 = vadd.f32 %v1872, %v2039
      %v2142 = vadd.f32 %v1873, %v2044
      %v2143 = vadd.f32 %v1874, %v2049
      %v2144 = vadd.f32 %v1875, %v2054
      %v2145 = vadd.f32 %v1876, %v2059
      %v2146 = vadd.f32 %v1877, %v2064
      %v2147 = vadd.f32 %v1878, %v2069
      %v2148 = vadd.f32 %v1879, %v2074
      %v2149 = vadd.f32 %v1880, %v2079
      %v2150 = vadd.f32 %v1881, %v2084
      %v2151 = vadd.f32 %v1882, %v2089
      %v2152 = vadd.f32 %v1883, %v2094
      %v2153 = vadd.f32 %v1884, %v2099
      %v2154 = vadd.f32 %v1885, %v2104
      %v2155 = vadd.f32 %v1886, %v2109
      %v2156 = vadd.f32 %v1887, %v2114
      %v2157 = vadd.f32 %v1888, %v2119
      %v2158 = vadd.f32 %v1889, %v2124
      %v2160 = vsel %vm363, %v222, 0
      %v2163 = vsel %vm363, %v223, 0
      %v2166 = vsel %vm428, %v231, 0
      %2168 = vmatprep.subr.mxu0 0.0
      %2169 = vmatpush1.msra.mxu0 %v2166
      %2170 = vmatprep.subr.mxu0 0.0
      %2171 = vmatpush1.msra.mxu0 0.0
      %2172 = vmatprep.subr.mxu0 0.0
      %2173 = vmatpush1.msra.mxu0 0.0
      %2174 = vmatprep.subr.mxu0 0.0
      %2175 = vmatpush1.msra.mxu0 0.0
      %2176 = vmatprep.subr.mxu0 0.0
      %2177 = vmatpush1.msra.mxu0 0.0
      %2178 = vmatprep.subr.mxu0 0.0
      %2179 = vmatpush1.msra.mxu0 0.0
      %2180 = vmatprep.subr.mxu0 0.0
      %2181 = vmatpush1.msra.mxu0 0.0
      %2182 = vmatprep.subr.mxu0 0.0
      %2183 = vmatpush1.msra.mxu0 0.0
      %2184 = vmatprep.subr.mxu0 0.0
      %2185 = vmatpush1.msra.mxu0 0.0
      %2186 = vmatprep.subr.mxu0 0.0
      %2187 = vmatpush1.msra.mxu0 0.0
      %2188 = vmatprep.subr.mxu0 0.0
      %2189 = vmatpush1.msra.mxu0 0.0
      %2190 = vmatprep.subr.mxu0 0.0
      %2191 = vmatpush1.msra.mxu0 0.0
      %2192 = vmatprep.subr.mxu0 0.0
      %2193 = vmatpush1.msra.mxu0 0.0
      %2194 = vmatprep.subr.mxu0 0.0
      %2195 = vmatpush1.msra.mxu0 0.0
      %2196 = vmatprep.subr.mxu0 0.0
      %2197 = vmatpush1.msra.mxu0 0.0
      %2198 = vmatprep.subr.mxu0 0.0
      %2199 = vmatpush1.msra.mxu0 0.0
      %2200 = vmatprep.subr.mxu0 0.0
      %2201 = vmatpush1.msra.mxu0 0.0
      %2202 = vmatprep.subr.mxu0 0.0
      %2203 = vmatpush1.msra.mxu0 0.0
      %2204 = vmatprep.subr.mxu0 0.0
      %2205 = vmatpush1.msra.mxu0 0.0
      %2206 = vmatprep.subr.mxu0 0.0
      %2207 = vmatpush1.msra.mxu0 0.0
      %2208 = vmatprep.subr.mxu0 0.0
      %2209 = vmatpush1.msra.mxu0 0.0
      %2210 = vmatprep.subr.mxu0 0.0
      %2211 = vmatpush1.msra.mxu0 0.0
      %2212 = vmatprep.subr.mxu0 0.0
      %2213 = vmatpush1.msra.mxu0 0.0
      %2214 = vmatprep.subr.mxu0 0.0
      %2215 = vmatpush1.msra.mxu0 0.0
      %2216 = vmatprep.subr.mxu0 0.0
      %2217 = vmatpush1.msra.mxu0 0.0
      %2218 = vmatprep.subr.mxu0 0.0
      %2219 = vmatpush1.msra.mxu0 0.0
      %2220 = vmatprep.subr.mxu0 0.0
      %2221 = vmatpush1.msra.mxu0 0.0
      %2222 = vmatprep.subr.mxu0 0.0
      %2223 = vmatpush1.msra.mxu0 0.0
      %2224 = vmatprep.subr.mxu0 0.0
      %2225 = vmatpush1.msra.mxu0 0.0
      %2226 = vmatprep.subr.mxu0 0.0
      %2227 = vmatpush1.msra.mxu0 0.0
      %2228 = vmatprep.subr.mxu0 0.0
      %2229 = vmatpush1.msra.mxu0 0.0
      %2230 = vmatprep.subr.mxu0 0.0
      %2231 = vmatpush1.msra.mxu0 0.0
      %2232 = vmatprep.mubr.f32.mxu0 0.0
      %2233 = vmatmul.mubr.f32.gmra.mrb[0].mxu0 %v665
      %v2234 = vpop.f32.mrb[0].mxu0
      %v2235 = vadd.f32 0.0, %v2234
      %v2236 = vpop.f32.mrb[0].mxu0
      %2237 = vmatprep.mubr.f32.mxu0 0.0
      %2238 = vmatmul.mubr.f32.gmra.mrb[0].mxu0 %v667
      %v2239 = vpop.f32.mrb[0].mxu0
      %v2240 = vadd.f32 0.0, %v2239
      %v2241 = vpop.f32.mrb[0].mxu0
      %2242 = vmatprep.mubr.f32.mxu0 0.0
      %2243 = vmatmul.mubr.f32.gmra.mrb[0].mxu0 %v669
      %v2244 = vpop.f32.mrb[0].mxu0
      %v2245 = vadd.f32 0.0, %v2244
      %v2246 = vpop.f32.mrb[0].mxu0
      %2247 = vmatprep.mubr.f32.mxu0 0.0
      %2248 = vmatmul.mubr.f32.gmra.mrb[0].mxu0 %v671
      %v2249 = vpop.f32.mrb[0].mxu0
      %v2250 = vadd.f32 0.0, %v2249
      %v2251 = vpop.f32.mrb[0].mxu0
      %2252 = vmatprep.mubr.f32.mxu0 0.0
      %2253 = vmatmul.mubr.f32.gmra.mrb[0].mxu0 %v673
      %v2254 = vpop.f32.mrb[0].mxu0
      %v2255 = vadd.f32 0.0, %v2254
      %v2256 = vpop.f32.mrb[0].mxu0
      %2257 = vmatprep.mubr.f32.mxu0 0.0
      %2258 = vmatmul.mubr.f32.gmra.mrb[0].mxu0 %v675
      %v2259 = vpop.f32.mrb[0].mxu0
      %v2260 = vadd.f32 0.0, %v2259
      %v2261 = vpop.f32.mrb[0].mxu0
      %2262 = vmatprep.mubr.f32.mxu0 0.0
      %2263 = vmatmul.mubr.f32.gmra.mrb[0].mxu0 %v677
      %v2264 = vpop.f32.mrb[0].mxu0
      %v2265 = vadd.f32 0.0, %v2264
      %v2266 = vpop.f32.mrb[0].mxu0
      %2267 = vmatprep.mubr.f32.mxu0 0.0
      %2268 = vmatmul.mubr.f32.gmra.mrb[0].mxu0 %v679
      %v2269 = vpop.f32.mrb[0].mxu0
      %v2270 = vadd.f32 0.0, %v2269
      %v2271 = vpop.f32.mrb[0].mxu0
      %2272 = vmatprep.mubr.f32.mxu0 0.0
      %2273 = vmatmul.mubr.f32.gmra.mrb[0].mxu0 %v681
      %v2274 = vpop.f32.mrb[0].mxu0
      %v2275 = vadd.f32 0.0, %v2274
      %v2276 = vpop.f32.mrb[0].mxu0
      %2277 = vmatprep.mubr.f32.mxu0 0.0
      %2278 = vmatmul.mubr.f32.gmra.mrb[0].mxu0 %v683
      %v2279 = vpop.f32.mrb[0].mxu0
      %v2280 = vadd.f32 0.0, %v2279
      %v2281 = vpop.f32.mrb[0].mxu0
      %2282 = vmatprep.mubr.f32.mxu0 0.0
      %2283 = vmatmul.mubr.f32.gmra.mrb[0].mxu0 %v685
      %v2284 = vpop.f32.mrb[0].mxu0
      %v2285 = vadd.f32 0.0, %v2284
      %v2286 = vpop.f32.mrb[0].mxu0
      %2287 = vmatprep.mubr.f32.mxu0 0.0
      %2288 = vmatmul.mubr.f32.gmra.mrb[0].mxu0 %v687
      %v2289 = vpop.f32.mrb[0].mxu0
      %v2290 = vadd.f32 0.0, %v2289
      %v2291 = vpop.f32.mrb[0].mxu0
      %2292 = vmatprep.mubr.f32.mxu0 0.0
      %2293 = vmatmul.mubr.f32.gmra.mrb[0].mxu0 %v689
      %v2294 = vpop.f32.mrb[0].mxu0
      %v2295 = vadd.f32 0.0, %v2294
      %v2296 = vpop.f32.mrb[0].mxu0
      %2297 = vmatprep.mubr.f32.mxu0 0.0
      %2298 = vmatmul.mubr.f32.gmra.mrb[0].mxu0 %v691
      %v2299 = vpop.f32.mrb[0].mxu0
      %v2300 = vadd.f32 0.0, %v2299
      %v2301 = vpop.f32.mrb[0].mxu0
      %2302 = vmatprep.mubr.f32.mxu0 0.0
      %2303 = vmatmul.mubr.f32.gmra.mrb[0].mxu0 %v693
      %v2304 = vpop.f32.mrb[0].mxu0
      %v2305 = vadd.f32 0.0, %v2304
      %v2306 = vpop.f32.mrb[0].mxu0
      %2307 = vmatprep.mubr.f32.mxu0 0.0
      %2308 = vmatmul.mubr.f32.gmra.mrb[0].mxu0 %v695
      %v2309 = vpop.f32.mrb[0].mxu0
      %v2310 = vadd.f32 0.0, %v2309
      %v2311 = vpop.f32.mrb[0].mxu0
      %2312 = vmatprep.mubr.f32.mxu0 0.0
      %2313 = vmatmul.mubr.f32.gmra.mrb[0].mxu0 %v697
      %v2314 = vpop.f32.mrb[0].mxu0
      %v2315 = vadd.f32 0.0, %v2314
      %v2316 = vpop.f32.mrb[0].mxu0
      %2317 = vmatprep.mubr.f32.mxu0 0.0
      %2318 = vmatmul.mubr.f32.gmra.mrb[0].mxu0 %v699
      %v2319 = vpop.f32.mrb[0].mxu0
      %v2320 = vadd.f32 0.0, %v2319
      %v2321 = vpop.f32.mrb[0].mxu0
      %2322 = vmatprep.mubr.f32.mxu0 0.0
      %2323 = vmatmul.mubr.f32.gmra.mrb[0].mxu0 %v701
      %v2324 = vpop.f32.mrb[0].mxu0
      %v2325 = vadd.f32 0.0, %v2324
      %v2326 = vpop.f32.mrb[0].mxu0
      %2327 = vmatprep.mubr.f32.mxu0 0.0
      %2328 = vmatmul.mubr.f32.gmra.mrb[0].mxu0 %v703
      %v2329 = vpop.f32.mrb[0].mxu0
      %v2330 = vadd.f32 0.0, %v2329
      %v2331 = vpop.f32.mrb[0].mxu0
      %2332 = vmatprep.mubr.f32.mxu0 0.0
      %2333 = vmatmul.mubr.f32.gmra.mrb[0].mxu0 %v705
      %v2334 = vpop.f32.mrb[0].mxu0
      %v2335 = vadd.f32 0.0, %v2334
      %v2336 = vpop.f32.mrb[0].mxu0
      %2337 = vmatprep.mubr.f32.mxu0 0.0
      %2338 = vmatmul.mubr.f32.gmra.mrb[0].mxu0 %v707
      %v2339 = vpop.f32.mrb[0].mxu0
      %v2340 = vadd.f32 0.0, %v2339
      %v2341 = vpop.f32.mrb[0].mxu0
      %2342 = vmatprep.mubr.f32.mxu0 0.0
      %2343 = vmatmul.mubr.f32.gmra.mrb[0].mxu0 %v709
      %v2344 = vpop.f32.mrb[0].mxu0
      %v2345 = vadd.f32 0.0, %v2344
      %v2346 = vpop.f32.mrb[0].mxu0
      %2347 = vmatprep.mubr.f32.mxu0 0.0
      %2348 = vmatmul.mubr.f32.gmra.mrb[0].mxu0 %v711
      %v2349 = vpop.f32.mrb[0].mxu0
      %v2350 = vadd.f32 0.0, %v2349
      %v2351 = vpop.f32.mrb[0].mxu0
      %2352 = vmatprep.mubr.f32.mxu0 0.0
      %2353 = vmatmul.mubr.f32.gmra.mrb[0].mxu0 %v713
      %v2354 = vpop.f32.mrb[0].mxu0
      %v2355 = vadd.f32 0.0, %v2354
      %v2356 = vpop.f32.mrb[0].mxu0
      %2357 = vmatprep.mubr.f32.mxu0 0.0
      %2358 = vmatmul.mubr.f32.gmra.mrb[0].mxu0 %v715
      %v2359 = vpop.f32.mrb[0].mxu0
      %v2360 = vadd.f32 0.0, %v2359
      %v2361 = vpop.f32.mrb[0].mxu0
      %2362 = vmatprep.mubr.f32.mxu0 0.0
      %2363 = vmatmul.mubr.f32.gmra.mrb[0].mxu0 %v717
      %v2364 = vpop.f32.mrb[0].mxu0
      %v2365 = vadd.f32 0.0, %v2364
      %v2366 = vpop.f32.mrb[0].mxu0
      %2367 = vmatprep.mubr.f32.mxu0 0.0
      %2368 = vmatmul.mubr.f32.gmra.mrb[0].mxu0 %v719
      %v2369 = vpop.f32.mrb[0].mxu0
      %v2370 = vadd.f32 0.0, %v2369
      %v2371 = vpop.f32.mrb[0].mxu0
      %2372 = vmatprep.mubr.f32.mxu0 0.0
      %2373 = vmatmul.mubr.f32.gmra.mrb[0].mxu0 %v1355
      %v2374 = vpop.f32.mrb[0].mxu0
      %v2375 = vadd.f32 0.0, %v2374
      %v2376 = vpop.f32.mrb[0].mxu0
      %2377 = vmatprep.mubr.f32.mxu0 0.0
      %2378 = vmatmul.mubr.f32.gmra.mrb[0].mxu0 %v1358
      %v2379 = vpop.f32.mrb[0].mxu0
      %v2380 = vadd.f32 0.0, %v2379
      %v2381 = vpop.f32.mrb[0].mxu0
      %2382 = vmatprep.mubr.f32.mxu0 0.0
      %2383 = vmatmul.mubr.f32.gmra.mrb[0].mxu0 %v2160
      %v2384 = vpop.f32.mrb[0].mxu0
      %v2385 = vadd.f32 0.0, %v2384
      %v2386 = vpop.f32.mrb[0].mxu0
      %2387 = vmatprep.mubr.f32.mxu0 0.0
      %2388 = vmatmul.mubr.f32.gmra.mrb[0].mxu0 %v2163
      %v2389 = vpop.f32.mrb[0].mxu0
      %v2390 = vadd.f32 0.0, %v2389
      %v2391 = vpop.f32.mrb[0].mxu0
      %2392 = vdwg.mxu0
      %v2393 = vadd.f32 %v2127, %v2235
      %v2394 = vadd.f32 %v2128, %v2240
      %v2395 = vadd.f32 %v2129, %v2245
      %v2396 = vadd.f32 %v2130, %v2250
      %v2397 = vadd.f32 %v2131, %v2255
      %v2398 = vadd.f32 %v2132, %v2260
      %v2399 = vadd.f32 %v2133, %v2265
      %v2400 = vadd.f32 %v2134, %v2270
      %v2401 = vadd.f32 %v2135, %v2275
      %v2402 = vadd.f32 %v2136, %v2280
      %v2403 = vadd.f32 %v2137, %v2285
      %v2404 = vadd.f32 %v2138, %v2290
      %v2405 = vadd.f32 %v2139, %v2295
      %v2406 = vadd.f32 %v2140, %v2300
      %v2407 = vadd.f32 %v2141, %v2305
      %v2408 = vadd.f32 %v2142, %v2310
      %v2409 = vadd.f32 %v2143, %v2315
      %v2410 = vadd.f32 %v2144, %v2320
      %v2411 = vadd.f32 %v2145, %v2325
      %v2412 = vadd.f32 %v2146, %v2330
      %v2413 = vadd.f32 %v2147, %v2335
      %v2414 = vadd.f32 %v2148, %v2340
      %v2415 = vadd.f32 %v2149, %v2345
      %v2416 = vadd.f32 %v2150, %v2350
      %v2417 = vadd.f32 %v2151, %v2355
      %v2418 = vadd.f32 %v2152, %v2360
      %v2419 = vadd.f32 %v2153, %v2365
      %v2420 = vadd.f32 %v2154, %v2370
      %v2421 = vadd.f32 %v2155, %v2375
      %v2422 = vadd.f32 %v2156, %v2380
      %v2423 = vadd.f32 %v2157, %v2385
      %v2424 = vadd.f32 %v2158, %v2390
      %v2426 = vrot.slane %v222, 1
      %v2427 = vrot.slane %v223, 1
      %v2428 = vsel %vm282, %v2426, %v2427
      %v2429 = vrot.slane %v224, 1
      %v2430 = vsel %vm282, %v2427, %v2429
      %v2431 = vsel %vm363, %v2428, 0
      %v2433 = vsel %vm363, %v2430, 0
      %v2436 = vsel %vm428, %v232, 0
      %2438 = vmatprep.subr.mxu0 0.0
      %2439 = vmatpush1.msra.mxu0 %v2436
      %2440 = vmatprep.subr.mxu0 0.0
      %2441 = vmatpush1.msra.mxu0 0.0
      %2442 = vmatprep.subr.mxu0 0.0
      %2443 = vmatpush1.msra.mxu0 0.0
      %2444 = vmatprep.subr.mxu0 0.0
      %2445 = vmatpush1.msra.mxu0 0.0
      %2446 = vmatprep.subr.mxu0 0.0
      %2447 = vmatpush1.msra.mxu0 0.0
      %2448 = vmatprep.subr.mxu0 0.0
      %2449 = vmatpush1.msra.mxu0 0.0
      %2450 = vmatprep.subr.mxu0 0.0
      %2451 = vmatpush1.msra.mxu0 0.0
      %2452 = vmatprep.subr.mxu0 0.0
      %2453 = vmatpush1.msra.mxu0 0.0
      %2454 = vmatprep.subr.mxu0 0.0
      %2455 = vmatpush1.msra.mxu0 0.0
      %2456 = vmatprep.subr.mxu0 0.0
      %2457 = vmatpush1.msra.mxu0 0.0
      %2458 = vmatprep.subr.mxu0 0.0
      %2459 = vmatpush1.msra.mxu0 0.0
      %2460 = vmatprep.subr.mxu0 0.0
      %2461 = vmatpush1.msra.mxu0 0.0
      %2462 = vmatprep.subr.mxu0 0.0
      %2463 = vmatpush1.msra.mxu0 0.0
      %2464 = vmatprep.subr.mxu0 0.0
      %2465 = vmatpush1.msra.mxu0 0.0
      %2466 = vmatprep.subr.mxu0 0.0
      %2467 = vmatpush1.msra.mxu0 0.0
      %2468 = vmatprep.subr.mxu0 0.0
      %2469 = vmatpush1.msra.mxu0 0.0
      %2470 = vmatprep.subr.mxu0 0.0
      %2471 = vmatpush1.msra.mxu0 0.0
      %2472 = vmatprep.subr.mxu0 0.0
      %2473 = vmatpush1.msra.mxu0 0.0
      %2474 = vmatprep.subr.mxu0 0.0
      %2475 = vmatpush1.msra.mxu0 0.0
      %2476 = vmatprep.subr.mxu0 0.0
      %2477 = vmatpush1.msra.mxu0 0.0
      %2478 = vmatprep.subr.mxu0 0.0
      %2479 = vmatpush1.msra.mxu0 0.0
      %2480 = vmatprep.subr.mxu0 0.0
      %2481 = vmatpush1.msra.mxu0 0.0
      %2482 = vmatprep.subr.mxu0 0.0
      %2483 = vmatpush1.msra.mxu0 0.0
      %2484 = vmatprep.subr.mxu0 0.0
      %2485 = vmatpush1.msra.mxu0 0.0
      %2486 = vmatprep.subr.mxu0 0.0
      %2487 = vmatpush1.msra.mxu0 0.0
      %2488 = vmatprep.subr.mxu0 0.0
      %2489 = vmatpush1.msra.mxu0 0.0
      %2490 = vmatprep.subr.mxu0 0.0
      %2491 = vmatpush1.msra.mxu0 0.0
      %2492 = vmatprep.subr.mxu0 0.0
      %2493 = vmatpush1.msra.mxu0 0.0
      %2494 = vmatprep.subr.mxu0 0.0
      %2495 = vmatpush1.msra.mxu0 0.0
      %2496 = vmatprep.subr.mxu0 0.0
      %2497 = vmatpush1.msra.mxu0 0.0
      %2498 = vmatprep.subr.mxu0 0.0
      %2499 = vmatpush1.msra.mxu0 0.0
      %2500 = vmatprep.subr.mxu0 0.0
      %2501 = vmatpush1.msra.mxu0 0.0
      %2502 = vmatprep.mubr.f32.mxu0 0.0
      %2503 = vmatmul.mubr.f32.gmra.mrb[0].mxu0 %v372
      %v2504 = vpop.f32.mrb[0].mxu0
      %v2505 = vadd.f32 0.0, %v2504
      %v2506 = vpop.f32.mrb[0].mxu0
      %2507 = vmatprep.mubr.f32.mxu0 0.0
      %2508 = vmatmul.mubr.f32.gmra.mrb[0].mxu0 %v374
      %v2509 = vpop.f32.mrb[0].mxu0
      %v2510 = vadd.f32 0.0, %v2509
      %v2511 = vpop.f32.mrb[0].mxu0
      %2512 = vmatprep.mubr.f32.mxu0 0.0
      %2513 = vmatmul.mubr.f32.gmra.mrb[0].mxu0 %v376
      %v2514 = vpop.f32.mrb[0].mxu0
      %v2515 = vadd.f32 0.0, %v2514
      %v2516 = vpop.f32.mrb[0].mxu0
      %2517 = vmatprep.mubr.f32.mxu0 0.0
      %2518 = vmatmul.mubr.f32.gmra.mrb[0].mxu0 %v378
      %v2519 = vpop.f32.mrb[0].mxu0
      %v2520 = vadd.f32 0.0, %v2519
      %v2521 = vpop.f32.mrb[0].mxu0
      %2522 = vmatprep.mubr.f32.mxu0 0.0
      %2523 = vmatmul.mubr.f32.gmra.mrb[0].mxu0 %v380
      %v2524 = vpop.f32.mrb[0].mxu0
      %v2525 = vadd.f32 0.0, %v2524
      %v2526 = vpop.f32.mrb[0].mxu0
      %2527 = vmatprep.mubr.f32.mxu0 0.0
      %2528 = vmatmul.mubr.f32.gmra.mrb[0].mxu0 %v382
      %v2529 = vpop.f32.mrb[0].mxu0
      %v2530 = vadd.f32 0.0, %v2529
      %v2531 = vpop.f32.mrb[0].mxu0
      %2532 = vmatprep.mubr.f32.mxu0 0.0
      %2533 = vmatmul.mubr.f32.gmra.mrb[0].mxu0 %v384
      %v2534 = vpop.f32.mrb[0].mxu0
      %v2535 = vadd.f32 0.0, %v2534
      %v2536 = vpop.f32.mrb[0].mxu0
      %2537 = vmatprep.mubr.f32.mxu0 0.0
      %2538 = vmatmul.mubr.f32.gmra.mrb[0].mxu0 %v386
      %v2539 = vpop.f32.mrb[0].mxu0
      %v2540 = vadd.f32 0.0, %v2539
      %v2541 = vpop.f32.mrb[0].mxu0
      %2542 = vmatprep.mubr.f32.mxu0 0.0
      %2543 = vmatmul.mubr.f32.gmra.mrb[0].mxu0 %v388
      %v2544 = vpop.f32.mrb[0].mxu0
      %v2545 = vadd.f32 0.0, %v2544
      %v2546 = vpop.f32.mrb[0].mxu0
      %2547 = vmatprep.mubr.f32.mxu0 0.0
      %2548 = vmatmul.mubr.f32.gmra.mrb[0].mxu0 %v390
      %v2549 = vpop.f32.mrb[0].mxu0
      %v2550 = vadd.f32 0.0, %v2549
      %v2551 = vpop.f32.mrb[0].mxu0
      %2552 = vmatprep.mubr.f32.mxu0 0.0
      %2553 = vmatmul.mubr.f32.gmra.mrb[0].mxu0 %v392
      %v2554 = vpop.f32.mrb[0].mxu0
      %v2555 = vadd.f32 0.0, %v2554
      %v2556 = vpop.f32.mrb[0].mxu0
      %2557 = vmatprep.mubr.f32.mxu0 0.0
      %2558 = vmatmul.mubr.f32.gmra.mrb[0].mxu0 %v394
      %v2559 = vpop.f32.mrb[0].mxu0
      %v2560 = vadd.f32 0.0, %v2559
      %v2561 = vpop.f32.mrb[0].mxu0
      %2562 = vmatprep.mubr.f32.mxu0 0.0
      %2563 = vmatmul.mubr.f32.gmra.mrb[0].mxu0 %v396
      %v2564 = vpop.f32.mrb[0].mxu0
      %v2565 = vadd.f32 0.0, %v2564
      %v2566 = vpop.f32.mrb[0].mxu0
      %2567 = vmatprep.mubr.f32.mxu0 0.0
      %2568 = vmatmul.mubr.f32.gmra.mrb[0].mxu0 %v398
      %v2569 = vpop.f32.mrb[0].mxu0
      %v2570 = vadd.f32 0.0, %v2569
      %v2571 = vpop.f32.mrb[0].mxu0
      %2572 = vmatprep.mubr.f32.mxu0 0.0
      %2573 = vmatmul.mubr.f32.gmra.mrb[0].mxu0 %v400
      %v2574 = vpop.f32.mrb[0].mxu0
      %v2575 = vadd.f32 0.0, %v2574
      %v2576 = vpop.f32.mrb[0].mxu0
      %2577 = vmatprep.mubr.f32.mxu0 0.0
      %2578 = vmatmul.mubr.f32.gmra.mrb[0].mxu0 %v402
      %v2579 = vpop.f32.mrb[0].mxu0
      %v2580 = vadd.f32 0.0, %v2579
      %v2581 = vpop.f32.mrb[0].mxu0
      %2582 = vmatprep.mubr.f32.mxu0 0.0
      %2583 = vmatmul.mubr.f32.gmra.mrb[0].mxu0 %v404
      %v2584 = vpop.f32.mrb[0].mxu0
      %v2585 = vadd.f32 0.0, %v2584
      %v2586 = vpop.f32.mrb[0].mxu0
      %2587 = vmatprep.mubr.f32.mxu0 0.0
      %2588 = vmatmul.mubr.f32.gmra.mrb[0].mxu0 %v406
      %v2589 = vpop.f32.mrb[0].mxu0
      %v2590 = vadd.f32 0.0, %v2589
      %v2591 = vpop.f32.mrb[0].mxu0
      %2592 = vmatprep.mubr.f32.mxu0 0.0
      %2593 = vmatmul.mubr.f32.gmra.mrb[0].mxu0 %v408
      %v2594 = vpop.f32.mrb[0].mxu0
      %v2595 = vadd.f32 0.0, %v2594
      %v2596 = vpop.f32.mrb[0].mxu0
      %2597 = vmatprep.mubr.f32.mxu0 0.0
      %2598 = vmatmul.mubr.f32.gmra.mrb[0].mxu0 %v410
      %v2599 = vpop.f32.mrb[0].mxu0
      %v2600 = vadd.f32 0.0, %v2599
      %v2601 = vpop.f32.mrb[0].mxu0
      %2602 = vmatprep.mubr.f32.mxu0 0.0
      %2603 = vmatmul.mubr.f32.gmra.mrb[0].mxu0 %v412
      %v2604 = vpop.f32.mrb[0].mxu0
      %v2605 = vadd.f32 0.0, %v2604
      %v2606 = vpop.f32.mrb[0].mxu0
      %2607 = vmatprep.mubr.f32.mxu0 0.0
      %2608 = vmatmul.mubr.f32.gmra.mrb[0].mxu0 %v414
      %v2609 = vpop.f32.mrb[0].mxu0
      %v2610 = vadd.f32 0.0, %v2609
      %v2611 = vpop.f32.mrb[0].mxu0
      %2612 = vmatprep.mubr.f32.mxu0 0.0
      %2613 = vmatmul.mubr.f32.gmra.mrb[0].mxu0 %v416
      %v2614 = vpop.f32.mrb[0].mxu0
      %v2615 = vadd.f32 0.0, %v2614
      %v2616 = vpop.f32.mrb[0].mxu0
      %2617 = vmatprep.mubr.f32.mxu0 0.0
      %2618 = vmatmul.mubr.f32.gmra.mrb[0].mxu0 %v418
      %v2619 = vpop.f32.mrb[0].mxu0
      %v2620 = vadd.f32 0.0, %v2619
      %v2621 = vpop.f32.mrb[0].mxu0
      %2622 = vmatprep.mubr.f32.mxu0 0.0
      %2623 = vmatmul.mubr.f32.gmra.mrb[0].mxu0 %v420
      %v2624 = vpop.f32.mrb[0].mxu0
      %v2625 = vadd.f32 0.0, %v2624
      %v2626 = vpop.f32.mrb[0].mxu0
      %2627 = vmatprep.mubr.f32.mxu0 0.0
      %2628 = vmatmul.mubr.f32.gmra.mrb[0].mxu0 %v422
      %v2629 = vpop.f32.mrb[0].mxu0
      %v2630 = vadd.f32 0.0, %v2629
      %v2631 = vpop.f32.mrb[0].mxu0
      %2632 = vmatprep.mubr.f32.mxu0 0.0
      %2633 = vmatmul.mubr.f32.gmra.mrb[0].mxu0 %v424
      %v2634 = vpop.f32.mrb[0].mxu0
      %v2635 = vadd.f32 0.0, %v2634
      %v2636 = vpop.f32.mrb[0].mxu0
      %2637 = vmatprep.mubr.f32.mxu0 0.0
      %2638 = vmatmul.mubr.f32.gmra.mrb[0].mxu0 %v426
      %v2639 = vpop.f32.mrb[0].mxu0
      %v2640 = vadd.f32 0.0, %v2639
      %v2641 = vpop.f32.mrb[0].mxu0
      %2642 = vmatprep.mubr.f32.mxu0 0.0
      %2643 = vmatmul.mubr.f32.gmra.mrb[0].mxu0 %v1626
      %v2644 = vpop.f32.mrb[0].mxu0
      %v2645 = vadd.f32 0.0, %v2644
      %v2646 = vpop.f32.mrb[0].mxu0
      %2647 = vmatprep.mubr.f32.mxu0 0.0
      %2648 = vmatmul.mubr.f32.gmra.mrb[0].mxu0 %v1628
      %v2649 = vpop.f32.mrb[0].mxu0
      %v2650 = vadd.f32 0.0, %v2649
      %v2651 = vpop.f32.mrb[0].mxu0
      %2652 = vmatprep.mubr.f32.mxu0 0.0
      %2653 = vmatmul.mubr.f32.gmra.mrb[0].mxu0 %v2431
      %v2654 = vpop.f32.mrb[0].mxu0
      %v2655 = vadd.f32 0.0, %v2654
      %v2656 = vpop.f32.mrb[0].mxu0
      %2657 = vmatprep.mubr.f32.mxu0 0.0
      %2658 = vmatmul.mubr.f32.gmra.mrb[0].mxu0 %v2433
      %v2659 = vpop.f32.mrb[0].mxu0
      %v2660 = vadd.f32 0.0, %v2659
      %v2661 = vpop.f32.mrb[0].mxu0
      %2662 = vdwg.mxu0
      %v2663 = vadd.f32 %v2393, %v2505
      %v2664 = vadd.f32 %v2394, %v2510
      %v2665 = vadd.f32 %v2395, %v2515
      %v2666 = vadd.f32 %v2396, %v2520
      %v2667 = vadd.f32 %v2397, %v2525
      %v2668 = vadd.f32 %v2398, %v2530
      %v2669 = vadd.f32 %v2399, %v2535
      %v2670 = vadd.f32 %v2400, %v2540
      %v2671 = vadd.f32 %v2401, %v2545
      %v2672 = vadd.f32 %v2402, %v2550
      %v2673 = vadd.f32 %v2403, %v2555
      %v2674 = vadd.f32 %v2404, %v2560
      %v2675 = vadd.f32 %v2405, %v2565
      %v2676 = vadd.f32 %v2406, %v2570
      %v2677 = vadd.f32 %v2407, %v2575
      %v2678 = vadd.f32 %v2408, %v2580
      %v2679 = vadd.f32 %v2409, %v2585
      %v2680 = vadd.f32 %v2410, %v2590
      %v2681 = vadd.f32 %v2411, %v2595
      %v2682 = vadd.f32 %v2412, %v2600
      %v2683 = vadd.f32 %v2413, %v2605
      %v2684 = vadd.f32 %v2414, %v2610
      %v2685 = vadd.f32 %v2415, %v2615
      %v2686 = vadd.f32 %v2416, %v2620
      %v2687 = vadd.f32 %v2417, %v2625
      %v2688 = vadd.f32 %v2418, %v2630
      %v2689 = vadd.f32 %v2419, %v2635
      %v2690 = vadd.f32 %v2420, %v2640
      %v2691 = vadd.f32 %v2421, %v2645
      %v2692 = vadd.f32 %v2422, %v2650
      %v2693 = vadd.f32 %v2423, %v2655
      %v2694 = vadd.f32 %v2424, %v2660
      %v2695 = vrot.slane %v222, 2
      %v2696 = vrot.slane %v223, 2
      %v2697 = vsel %vm949, %v2695, %v2696
      %v2698 = vrot.slane %v224, 2
      %v2699 = vsel %vm949, %v2696, %v2698
      %v2700 = vsel %vm363, %v2697, 0
      %v2702 = vsel %vm363, %v2699, 0
      %v2705 = vsel %vm428, %v233, 0
      %2707 = vmatprep.subr.mxu0 0.0
      %2708 = vmatpush1.msra.mxu0 %v2705
      %2709 = vmatprep.subr.mxu0 0.0
      %2710 = vmatpush1.msra.mxu0 0.0
      %2711 = vmatprep.subr.mxu0 0.0
      %2712 = vmatpush1.msra.mxu0 0.0
      %2713 = vmatprep.subr.mxu0 0.0
      %2714 = vmatpush1.msra.mxu0 0.0
      %2715 = vmatprep.subr.mxu0 0.0
      %2716 = vmatpush1.msra.mxu0 0.0
      %2717 = vmatprep.subr.mxu0 0.0
      %2718 = vmatpush1.msra.mxu0 0.0
      %2719 = vmatprep.subr.mxu0 0.0
      %2720 = vmatpush1.msra.mxu0 0.0
      %2721 = vmatprep.subr.mxu0 0.0
      %2722 = vmatpush1.msra.mxu0 0.0
      %2723 = vmatprep.subr.mxu0 0.0
      %2724 = vmatpush1.msra.mxu0 0.0
      %2725 = vmatprep.subr.mxu0 0.0
      %2726 = vmatpush1.msra.mxu0 0.0
      %2727 = vmatprep.subr.mxu0 0.0
      %2728 = vmatpush1.msra.mxu0 0.0
      %2729 = vmatprep.subr.mxu0 0.0
      %2730 = vmatpush1.msra.mxu0 0.0
      %2731 = vmatprep.subr.mxu0 0.0
      %2732 = vmatpush1.msra.mxu0 0.0
      %2733 = vmatprep.subr.mxu0 0.0
      %2734 = vmatpush1.msra.mxu0 0.0
      %2735 = vmatprep.subr.mxu0 0.0
      %2736 = vmatpush1.msra.mxu0 0.0
      %2737 = vmatprep.subr.mxu0 0.0
      %2738 = vmatpush1.msra.mxu0 0.0
      %2739 = vmatprep.subr.mxu0 0.0
      %2740 = vmatpush1.msra.mxu0 0.0
      %2741 = vmatprep.subr.mxu0 0.0
      %2742 = vmatpush1.msra.mxu0 0.0
      %2743 = vmatprep.subr.mxu0 0.0
      %2744 = vmatpush1.msra.mxu0 0.0
      %2745 = vmatprep.subr.mxu0 0.0
      %2746 = vmatpush1.msra.mxu0 0.0
      %2747 = vmatprep.subr.mxu0 0.0
      %2748 = vmatpush1.msra.mxu0 0.0
      %2749 = vmatprep.subr.mxu0 0.0
      %2750 = vmatpush1.msra.mxu0 0.0
      %2751 = vmatprep.subr.mxu0 0.0
      %2752 = vmatpush1.msra.mxu0 0.0
      %2753 = vmatprep.subr.mxu0 0.0
      %2754 = vmatpush1.msra.mxu0 0.0
      %2755 = vmatprep.subr.mxu0 0.0
      %2756 = vmatpush1.msra.mxu0 0.0
      %2757 = vmatprep.subr.mxu0 0.0
      %2758 = vmatpush1.msra.mxu0 0.0
      %2759 = vmatprep.subr.mxu0 0.0
      %2760 = vmatpush1.msra.mxu0 0.0
      %2761 = vmatprep.subr.mxu0 0.0
      %2762 = vmatpush1.msra.mxu0 0.0
      %2763 = vmatprep.subr.mxu0 0.0
      %2764 = vmatpush1.msra.mxu0 0.0
      %2765 = vmatprep.subr.mxu0 0.0
      %2766 = vmatpush1.msra.mxu0 0.0
      %2767 = vmatprep.subr.mxu0 0.0
      %2768 = vmatpush1.msra.mxu0 0.0
      %2769 = vmatprep.subr.mxu0 0.0
      %2770 = vmatpush1.msra.mxu0 0.0
      %2771 = vmatprep.mubr.f32.mxu0 0.0
      %2772 = vmatmul.mubr.f32.gmra.mrb[0].mxu0 %v1038
      %v2773 = vpop.f32.mrb[0].mxu0
      %v2774 = vadd.f32 0.0, %v2773
      %v2775 = vpop.f32.mrb[0].mxu0
      %2776 = vmatprep.mubr.f32.mxu0 0.0
      %2777 = vmatmul.mubr.f32.gmra.mrb[0].mxu0 %v1040
      %v2778 = vpop.f32.mrb[0].mxu0
      %v2779 = vadd.f32 0.0, %v2778
      %v2780 = vpop.f32.mrb[0].mxu0
      %2781 = vmatprep.mubr.f32.mxu0 0.0
      %2782 = vmatmul.mubr.f32.gmra.mrb[0].mxu0 %v1042
      %v2783 = vpop.f32.mrb[0].mxu0
      %v2784 = vadd.f32 0.0, %v2783
      %v2785 = vpop.f32.mrb[0].mxu0
      %2786 = vmatprep.mubr.f32.mxu0 0.0
      %2787 = vmatmul.mubr.f32.gmra.mrb[0].mxu0 %v1044
      %v2788 = vpop.f32.mrb[0].mxu0
      %v2789 = vadd.f32 0.0, %v2788
      %v2790 = vpop.f32.mrb[0].mxu0
      %2791 = vmatprep.mubr.f32.mxu0 0.0
      %2792 = vmatmul.mubr.f32.gmra.mrb[0].mxu0 %v1046
      %v2793 = vpop.f32.mrb[0].mxu0
      %v2794 = vadd.f32 0.0, %v2793
      %v2795 = vpop.f32.mrb[0].mxu0
      %2796 = vmatprep.mubr.f32.mxu0 0.0
      %2797 = vmatmul.mubr.f32.gmra.mrb[0].mxu0 %v1048
      %v2798 = vpop.f32.mrb[0].mxu0
      %v2799 = vadd.f32 0.0, %v2798
      %v2800 = vpop.f32.mrb[0].mxu0
      %2801 = vmatprep.mubr.f32.mxu0 0.0
      %2802 = vmatmul.mubr.f32.gmra.mrb[0].mxu0 %v1050
      %v2803 = vpop.f32.mrb[0].mxu0
      %v2804 = vadd.f32 0.0, %v2803
      %v2805 = vpop.f32.mrb[0].mxu0
      %2806 = vmatprep.mubr.f32.mxu0 0.0
      %2807 = vmatmul.mubr.f32.gmra.mrb[0].mxu0 %v1052
      %v2808 = vpop.f32.mrb[0].mxu0
      %v2809 = vadd.f32 0.0, %v2808
      %v2810 = vpop.f32.mrb[0].mxu0
      %2811 = vmatprep.mubr.f32.mxu0 0.0
      %2812 = vmatmul.mubr.f32.gmra.mrb[0].mxu0 %v1054
      %v2813 = vpop.f32.mrb[0].mxu0
      %v2814 = vadd.f32 0.0, %v2813
      %v2815 = vpop.f32.mrb[0].mxu0
      %2816 = vmatprep.mubr.f32.mxu0 0.0
      %2817 = vmatmul.mubr.f32.gmra.mrb[0].mxu0 %v1056
      %v2818 = vpop.f32.mrb[0].mxu0
      %v2819 = vadd.f32 0.0, %v2818
      %v2820 = vpop.f32.mrb[0].mxu0
      %2821 = vmatprep.mubr.f32.mxu0 0.0
      %2822 = vmatmul.mubr.f32.gmra.mrb[0].mxu0 %v1058
      %v2823 = vpop.f32.mrb[0].mxu0
      %v2824 = vadd.f32 0.0, %v2823
      %v2825 = vpop.f32.mrb[0].mxu0
      %2826 = vmatprep.mubr.f32.mxu0 0.0
      %2827 = vmatmul.mubr.f32.gmra.mrb[0].mxu0 %v1060
      %v2828 = vpop.f32.mrb[0].mxu0
      %v2829 = vadd.f32 0.0, %v2828
      %v2830 = vpop.f32.mrb[0].mxu0
      %2831 = vmatprep.mubr.f32.mxu0 0.0
      %2832 = vmatmul.mubr.f32.gmra.mrb[0].mxu0 %v1062
      %v2833 = vpop.f32.mrb[0].mxu0
      %v2834 = vadd.f32 0.0, %v2833
      %v2835 = vpop.f32.mrb[0].mxu0
      %2836 = vmatprep.mubr.f32.mxu0 0.0
      %2837 = vmatmul.mubr.f32.gmra.mrb[0].mxu0 %v1064
      %v2838 = vpop.f32.mrb[0].mxu0
      %v2839 = vadd.f32 0.0, %v2838
      %v2840 = vpop.f32.mrb[0].mxu0
      %2841 = vmatprep.mubr.f32.mxu0 0.0
      %2842 = vmatmul.mubr.f32.gmra.mrb[0].mxu0 %v1066
      %v2843 = vpop.f32.mrb[0].mxu0
      %v2844 = vadd.f32 0.0, %v2843
      %v2845 = vpop.f32.mrb[0].mxu0
      %2846 = vmatprep.mubr.f32.mxu0 0.0
      %2847 = vmatmul.mubr.f32.gmra.mrb[0].mxu0 %v1068
      %v2848 = vpop.f32.mrb[0].mxu0
      %v2849 = vadd.f32 0.0, %v2848
      %v2850 = vpop.f32.mrb[0].mxu0
      %2851 = vmatprep.mubr.f32.mxu0 0.0
      %2852 = vmatmul.mubr.f32.gmra.mrb[0].mxu0 %v1070
      %v2853 = vpop.f32.mrb[0].mxu0
      %v2854 = vadd.f32 0.0, %v2853
      %v2855 = vpop.f32.mrb[0].mxu0
      %2856 = vmatprep.mubr.f32.mxu0 0.0
      %2857 = vmatmul.mubr.f32.gmra.mrb[0].mxu0 %v1072
      %v2858 = vpop.f32.mrb[0].mxu0
      %v2859 = vadd.f32 0.0, %v2858
      %v2860 = vpop.f32.mrb[0].mxu0
      %2861 = vmatprep.mubr.f32.mxu0 0.0
      %2862 = vmatmul.mubr.f32.gmra.mrb[0].mxu0 %v1074
      %v2863 = vpop.f32.mrb[0].mxu0
      %v2864 = vadd.f32 0.0, %v2863
      %v2865 = vpop.f32.mrb[0].mxu0
      %2866 = vmatprep.mubr.f32.mxu0 0.0
      %2867 = vmatmul.mubr.f32.gmra.mrb[0].mxu0 %v1076
      %v2868 = vpop.f32.mrb[0].mxu0
      %v2869 = vadd.f32 0.0, %v2868
      %v2870 = vpop.f32.mrb[0].mxu0
      %2871 = vmatprep.mubr.f32.mxu0 0.0
      %2872 = vmatmul.mubr.f32.gmra.mrb[0].mxu0 %v1078
      %v2873 = vpop.f32.mrb[0].mxu0
      %v2874 = vadd.f32 0.0, %v2873
      %v2875 = vpop.f32.mrb[0].mxu0
      %2876 = vmatprep.mubr.f32.mxu0 0.0
      %2877 = vmatmul.mubr.f32.gmra.mrb[0].mxu0 %v1080
      %v2878 = vpop.f32.mrb[0].mxu0
      %v2879 = vadd.f32 0.0, %v2878
      %v2880 = vpop.f32.mrb[0].mxu0
      %2881 = vmatprep.mubr.f32.mxu0 0.0
      %2882 = vmatmul.mubr.f32.gmra.mrb[0].mxu0 %v1082
      %v2883 = vpop.f32.mrb[0].mxu0
      %v2884 = vadd.f32 0.0, %v2883
      %v2885 = vpop.f32.mrb[0].mxu0
      %2886 = vmatprep.mubr.f32.mxu0 0.0
      %2887 = vmatmul.mubr.f32.gmra.mrb[0].mxu0 %v1084
      %v2888 = vpop.f32.mrb[0].mxu0
      %v2889 = vadd.f32 0.0, %v2888
      %v2890 = vpop.f32.mrb[0].mxu0
      %2891 = vmatprep.mubr.f32.mxu0 0.0
      %2892 = vmatmul.mubr.f32.gmra.mrb[0].mxu0 %v1086
      %v2893 = vpop.f32.mrb[0].mxu0
      %v2894 = vadd.f32 0.0, %v2893
      %v2895 = vpop.f32.mrb[0].mxu0
      %2896 = vmatprep.mubr.f32.mxu0 0.0
      %2897 = vmatmul.mubr.f32.gmra.mrb[0].mxu0 %v1088
      %v2898 = vpop.f32.mrb[0].mxu0
      %v2899 = vadd.f32 0.0, %v2898
      %v2900 = vpop.f32.mrb[0].mxu0
      %2901 = vmatprep.mubr.f32.mxu0 0.0
      %2902 = vmatmul.mubr.f32.gmra.mrb[0].mxu0 %v1090
      %v2903 = vpop.f32.mrb[0].mxu0
      %v2904 = vadd.f32 0.0, %v2903
      %v2905 = vpop.f32.mrb[0].mxu0
      %2906 = vmatprep.mubr.f32.mxu0 0.0
      %2907 = vmatmul.mubr.f32.gmra.mrb[0].mxu0 %v1092
      %v2908 = vpop.f32.mrb[0].mxu0
      %v2909 = vadd.f32 0.0, %v2908
      %v2910 = vpop.f32.mrb[0].mxu0
      %2911 = vmatprep.mubr.f32.mxu0 0.0
      %2912 = vmatmul.mubr.f32.gmra.mrb[0].mxu0 %v1895
      %v2913 = vpop.f32.mrb[0].mxu0
      %v2914 = vadd.f32 0.0, %v2913
      %v2915 = vpop.f32.mrb[0].mxu0
      %2916 = vmatprep.mubr.f32.mxu0 0.0
      %2917 = vmatmul.mubr.f32.gmra.mrb[0].mxu0 %v1897
      %v2918 = vpop.f32.mrb[0].mxu0
      %v2919 = vadd.f32 0.0, %v2918
      %v2920 = vpop.f32.mrb[0].mxu0
      %2921 = vmatprep.mubr.f32.mxu0 0.0
      %2922 = vmatmul.mubr.f32.gmra.mrb[0].mxu0 %v2700
      %v2923 = vpop.f32.mrb[0].mxu0
      %v2924 = vadd.f32 0.0, %v2923
      %v2925 = vpop.f32.mrb[0].mxu0
      %2926 = vmatprep.mubr.f32.mxu0 0.0
      %2927 = vmatmul.mubr.f32.gmra.mrb[0].mxu0 %v2702
      %v2928 = vpop.f32.mrb[0].mxu0
      %v2929 = vadd.f32 0.0, %v2928
      %v2930 = vpop.f32.mrb[0].mxu0
      %2931 = vdwg.mxu0
      %v2932 = vadd.f32 %v2663, %v2774
      %v2933 = vadd.f32 %v2664, %v2779
      %v2934 = vadd.f32 %v2665, %v2784
      %v2935 = vadd.f32 %v2666, %v2789
      %v2936 = vadd.f32 %v2667, %v2794
      %v2937 = vadd.f32 %v2668, %v2799
      %v2938 = vadd.f32 %v2669, %v2804
      %v2939 = vadd.f32 %v2670, %v2809
      %v2940 = vadd.f32 %v2671, %v2814
      %v2941 = vadd.f32 %v2672, %v2819
      %v2942 = vadd.f32 %v2673, %v2824
      %v2943 = vadd.f32 %v2674, %v2829
      %v2944 = vadd.f32 %v2675, %v2834
      %v2945 = vadd.f32 %v2676, %v2839
      %v2946 = vadd.f32 %v2677, %v2844
      %v2947 = vadd.f32 %v2678, %v2849
      %v2948 = vadd.f32 %v2679, %v2854
      %v2949 = vadd.f32 %v2680, %v2859
      %v2950 = vadd.f32 %v2681, %v2864
      %v2951 = vadd.f32 %v2682, %v2869
      %v2952 = vadd.f32 %v2683, %v2874
      %v2953 = vadd.f32 %v2684, %v2879
      %v2954 = vadd.f32 %v2685, %v2884
      %v2955 = vadd.f32 %v2686, %v2889
      %v2956 = vadd.f32 %v2687, %v2894
      %v2957 = vadd.f32 %v2688, %v2899
      %v2958 = vadd.f32 %v2689, %v2904
      %v2959 = vadd.f32 %v2690, %v2909
      %v2960 = vadd.f32 %v2691, %v2914
      %v2961 = vadd.f32 %v2692, %v2919
      %v2962 = vadd.f32 %v2693, %v2924
      %v2963 = vadd.f32 %v2694, %v2929
      %v2964 = vld [vmem:[%s2] sm:$0x1]
      %v2966 = vlaneseq
      %v2967 = vshrl.u32 %v2966, 7
      %v2968 = vsub.s32 0, %v2967
      %v2969 = vrot.slane %v2964, %v2968
      %v2971 = vadd.f32 %v2932, %v2969
      %v2972 = vadd.f32 %v2933, %v2969
      %v2973 = vadd.f32 %v2934, %v2969
      %v2974 = vadd.f32 %v2935, %v2969
      %v2975 = vadd.f32 %v2936, %v2969
      %v2976 = vadd.f32 %v2937, %v2969
      %v2977 = vadd.f32 %v2938, %v2969
      %v2978 = vadd.f32 %v2939, %v2969
      %v2979 = vadd.f32 %v2940, %v2969
      %v2980 = vadd.f32 %v2941, %v2969
      %v2981 = vadd.f32 %v2942, %v2969
      %v2982 = vadd.f32 %v2943, %v2969
      %v2983 = vadd.f32 %v2944, %v2969
      %v2984 = vadd.f32 %v2945, %v2969
      %v2985 = vadd.f32 %v2946, %v2969
      %v2986 = vadd.f32 %v2947, %v2969
      %v2987 = vadd.f32 %v2948, %v2969
      %v2988 = vadd.f32 %v2949, %v2969
      %v2989 = vadd.f32 %v2950, %v2969
      %v2990 = vadd.f32 %v2951, %v2969
      %v2991 = vadd.f32 %v2952, %v2969
      %v2992 = vadd.f32 %v2953, %v2969
      %v2993 = vadd.f32 %v2954, %v2969
      %v2994 = vadd.f32 %v2955, %v2969
      %v2995 = vadd.f32 %v2956, %v2969
      %v2996 = vadd.f32 %v2957, %v2969
      %v2997 = vadd.f32 %v2958, %v2969
      %v2998 = vadd.f32 %v2959, %v2969
      %v2999 = vadd.f32 %v2960, %v2969
      %v3000 = vadd.f32 %v2961, %v2969
      %v3001 = vadd.f32 %v2962, %v2969
      %v3002 = vadd.f32 %v2963, %v2969
      %v3003 = vxor.u32 %v2971, 2147483648
      %v3004 = vxor.u32 %v2972, 2147483648
      %v3005 = vxor.u32 %v2973, 2147483648
      %v3006 = vxor.u32 %v2974, 2147483648
      %v3007 = vxor.u32 %v2975, 2147483648
      %v3008 = vxor.u32 %v2976, 2147483648
      %v3009 = vxor.u32 %v2977, 2147483648
      %v3010 = vxor.u32 %v2978, 2147483648
      %v3011 = vxor.u32 %v2979, 2147483648
      %v3012 = vxor.u32 %v2980, 2147483648
      %v3013 = vxor.u32 %v2981, 2147483648
      %v3014 = vxor.u32 %v2982, 2147483648
      %v3015 = vxor.u32 %v2983, 2147483648
      %v3016 = vxor.u32 %v2984, 2147483648
      %v3017 = vxor.u32 %v2985, 2147483648
      %v3018 = vxor.u32 %v2986, 2147483648
      %v3019 = vxor.u32 %v2987, 2147483648
      %v3020 = vxor.u32 %v2988, 2147483648
      %v3021 = vxor.u32 %v2989, 2147483648
      %v3022 = vxor.u32 %v2990, 2147483648
      %v3023 = vxor.u32 %v2991, 2147483648
      %v3024 = vxor.u32 %v2992, 2147483648
      %v3025 = vxor.u32 %v2993, 2147483648
      %v3026 = vxor.u32 %v2994, 2147483648
      %v3027 = vxor.u32 %v2995, 2147483648
      %v3028 = vxor.u32 %v2996, 2147483648
      %v3029 = vxor.u32 %v2997, 2147483648
      %v3030 = vxor.u32 %v2998, 2147483648
      %v3031 = vxor.u32 %v2999, 2147483648
      %v3032 = vxor.u32 %v3000, 2147483648
      %v3033 = vxor.u32 %v3001, 2147483648
      %v3034 = vxor.u32 %v3002, 2147483648
      %v3035 = vmul.f32 %v3003, 1.442695
      %v3036 = vpow.pop %v3035
      %v3037 = vmul.f32 %v3004, 1.442695
      %v3038 = vpow.pop %v3037
      %v3039 = vmul.f32 %v3005, 1.442695
      %v3040 = vpow.pop %v3039
      %v3041 = vmul.f32 %v3006, 1.442695
      %v3042 = vpow.pop %v3041
      %v3043 = vmul.f32 %v3007, 1.442695
      %v3044 = vpow.pop %v3043
      %v3045 = vmul.f32 %v3008, 1.442695
      %v3046 = vpow.pop %v3045
      %v3047 = vmul.f32 %v3009, 1.442695
      %v3048 = vpow.pop %v3047
      %v3049 = vmul.f32 %v3010, 1.442695
      %v3050 = vpow.pop %v3049
      %v3051 = vmul.f32 %v3011, 1.442695
      %v3052 = vpow.pop %v3051
      %v3053 = vmul.f32 %v3012, 1.442695
      %v3054 = vpow.pop %v3053
      %v3055 = vmul.f32 %v3013, 1.442695
      %v3056 = vpow.pop %v3055
      %v3057 = vmul.f32 %v3014, 1.442695
      %v3058 = vpow.pop %v3057
      %v3059 = vmul.f32 %v3015, 1.442695
      %v3060 = vpow.pop %v3059
      %v3061 = vmul.f32 %v3016, 1.442695
      %v3062 = vpow.pop %v3061
      %v3063 = vmul.f32 %v3017, 1.442695
      %v3064 = vpow.pop %v3063
      %v3065 = vmul.f32 %v3018, 1.442695
      %v3066 = vpow.pop %v3065
      %v3067 = vmul.f32 %v3019, 1.442695
      %v3068 = vpow.pop %v3067
      %v3069 = vmul.f32 %v3020, 1.442695
      %v3070 = vpow.pop %v3069
      %v3071 = vmul.f32 %v3021, 1.442695
      %v3072 = vpow.pop %v3071
      %v3073 = vmul.f32 %v3022, 1.442695
      %v3074 = vpow.pop %v3073
      %v3075 = vmul.f32 %v3023, 1.442695
      %v3076 = vpow.pop %v3075
      %v3077 = vmul.f32 %v3024, 1.442695
      %v3078 = vpow.pop %v3077
      %v3079 = vmul.f32 %v3025, 1.442695
      %v3080 = vpow.pop %v3079
      %v3081 = vmul.f32 %v3026, 1.442695
      %v3082 = vpow.pop %v3081
      %v3083 = vmul.f32 %v3027, 1.442695
      %v3084 = vpow.pop %v3083
      %v3085 = vmul.f32 %v3028, 1.442695
      %v3086 = vpow.pop %v3085
      %v3087 = vmul.f32 %v3029, 1.442695
      %v3088 = vpow.pop %v3087
      %v3089 = vmul.f32 %v3030, 1.442695
      %v3090 = vpow.pop %v3089
      %v3091 = vmul.f32 %v3031, 1.442695
      %v3092 = vpow.pop %v3091
      %v3093 = vmul.f32 %v3032, 1.442695
      %v3094 = vpow.pop %v3093
      %v3095 = vmul.f32 %v3033, 1.442695
      %v3096 = vpow.pop %v3095
      %v3097 = vmul.f32 %v3034, 1.442695
      %v3098 = vpow.pop %v3097
      %v3099 = vadd.f32 %v3036, 1.0
      %v3100 = vadd.f32 %v3038, 1.0
      %v3101 = vadd.f32 %v3040, 1.0
      %v3102 = vadd.f32 %v3042, 1.0
      %v3103 = vadd.f32 %v3044, 1.0
      %v3104 = vadd.f32 %v3046, 1.0
      %v3105 = vadd.f32 %v3048, 1.0
      %v3106 = vadd.f32 %v3050, 1.0
      %v3107 = vadd.f32 %v3052, 1.0
      %v3108 = vadd.f32 %v3054, 1.0
      %v3109 = vadd.f32 %v3056, 1.0
      %v3110 = vadd.f32 %v3058, 1.0
      %v3111 = vadd.f32 %v3060, 1.0
      %v3112 = vadd.f32 %v3062, 1.0
      %v3113 = vadd.f32 %v3064, 1.0
      %v3114 = vadd.f32 %v3066, 1.0
      %v3115 = vadd.f32 %v3068, 1.0
      %v3116 = vadd.f32 %v3070, 1.0
      %v3117 = vadd.f32 %v3072, 1.0
      %v3118 = vadd.f32 %v3074, 1.0
      %v3119 = vadd.f32 %v3076, 1.0
      %v3120 = vadd.f32 %v3078, 1.0
      %v3121 = vadd.f32 %v3080, 1.0
      %v3122 = vadd.f32 %v3082, 1.0
      %v3123 = vadd.f32 %v3084, 1.0
      %v3124 = vadd.f32 %v3086, 1.0
      %v3125 = vadd.f32 %v3088, 1.0
      %v3126 = vadd.f32 %v3090, 1.0
      %v3127 = vadd.f32 %v3092, 1.0
      %v3128 = vadd.f32 %v3094, 1.0
      %v3129 = vadd.f32 %v3096, 1.0
      %v3130 = vadd.f32 %v3098, 1.0
      %v3131 = vrcp.pop %v3099
      %v3132 = vmul.f32 1.0, %v3131
      %v3133 = vrcp.pop %v3100
      %v3134 = vmul.f32 1.0, %v3133
      %v3135 = vrcp.pop %v3101
      %v3136 = vmul.f32 1.0, %v3135
      %v3137 = vrcp.pop %v3102
      %v3138 = vmul.f32 1.0, %v3137
      %v3139 = vrcp.pop %v3103
      %v3140 = vmul.f32 1.0, %v3139
      %v3141 = vrcp.pop %v3104
      %v3142 = vmul.f32 1.0, %v3141
      %v3143 = vrcp.pop %v3105
      %v3144 = vmul.f32 1.0, %v3143
      %v3145 = vrcp.pop %v3106
      %v3146 = vmul.f32 1.0, %v3145
      %v3147 = vrcp.pop %v3107
      %v3148 = vmul.f32 1.0, %v3147
      %v3149 = vrcp.pop %v3108
      %v3150 = vmul.f32 1.0, %v3149
      %v3151 = vrcp.pop %v3109
      %v3152 = vmul.f32 1.0, %v3151
      %v3153 = vrcp.pop %v3110
      %v3154 = vmul.f32 1.0, %v3153
      %v3155 = vrcp.pop %v3111
      %v3156 = vmul.f32 1.0, %v3155
      %v3157 = vrcp.pop %v3112
      %v3158 = vmul.f32 1.0, %v3157
      %v3159 = vrcp.pop %v3113
      %v3160 = vmul.f32 1.0, %v3159
      %v3161 = vrcp.pop %v3114
      %v3162 = vmul.f32 1.0, %v3161
      %v3163 = vrcp.pop %v3115
      %v3164 = vmul.f32 1.0, %v3163
      %v3165 = vrcp.pop %v3116
      %v3166 = vmul.f32 1.0, %v3165
      %v3167 = vrcp.pop %v3117
      %v3168 = vmul.f32 1.0, %v3167
      %v3169 = vrcp.pop %v3118
      %v3170 = vmul.f32 1.0, %v3169
      %v3171 = vrcp.pop %v3119
      %v3172 = vmul.f32 1.0, %v3171
      %v3173 = vrcp.pop %v3120
      %v3174 = vmul.f32 1.0, %v3173
      %v3175 = vrcp.pop %v3121
      %v3176 = vmul.f32 1.0, %v3175
      %v3177 = vrcp.pop %v3122
      %v3178 = vmul.f32 1.0, %v3177
      %v3179 = vrcp.pop %v3123
      %v3180 = vmul.f32 1.0, %v3179
      %v3181 = vrcp.pop %v3124
      %v3182 = vmul.f32 1.0, %v3181
      %v3183 = vrcp.pop %v3125
      %v3184 = vmul.f32 1.0, %v3183
      %v3185 = vrcp.pop %v3126
      %v3186 = vmul.f32 1.0, %v3185
      %v3187 = vrcp.pop %v3127
      %v3188 = vmul.f32 1.0, %v3187
      %v3189 = vrcp.pop %v3128
      %v3190 = vmul.f32 1.0, %v3189
      %v3191 = vrcp.pop %v3129
      %v3192 = vmul.f32 1.0, %v3191
      %v3193 = vrcp.pop %v3130
      %v3194 = vmul.f32 1.0, %v3193
      %v3195 = vmul.f32 %v2971, %v3132
      %v3196 = vmul.f32 %v2972, %v3134
      %v3197 = vmul.f32 %v2973, %v3136
      %v3198 = vmul.f32 %v2974, %v3138
      %v3199 = vmul.f32 %v2975, %v3140
      %v3200 = vmul.f32 %v2976, %v3142
      %v3201 = vmul.f32 %v2977, %v3144
      %v3202 = vmul.f32 %v2978, %v3146
      %v3203 = vmul.f32 %v2979, %v3148
      %v3204 = vmul.f32 %v2980, %v3150
      %v3205 = vmul.f32 %v2981, %v3152
      %v3206 = vmul.f32 %v2982, %v3154
      %v3207 = vmul.f32 %v2983, %v3156
      %v3208 = vmul.f32 %v2984, %v3158
      %v3209 = vmul.f32 %v2985, %v3160
      %v3210 = vmul.f32 %v2986, %v3162
      %v3211 = vmul.f32 %v2987, %v3164
      %v3212 = vmul.f32 %v2988, %v3166
      %v3213 = vmul.f32 %v2989, %v3168
      %v3214 = vmul.f32 %v2990, %v3170
      %v3215 = vmul.f32 %v2991, %v3172
      %v3216 = vmul.f32 %v2992, %v3174
      %v3217 = vmul.f32 %v2993, %v3176
      %v3218 = vmul.f32 %v2994, %v3178
      %v3219 = vmul.f32 %v2995, %v3180
      %v3220 = vmul.f32 %v2996, %v3182
      %v3221 = vmul.f32 %v2997, %v3184
      %v3222 = vmul.f32 %v2998, %v3186
      %v3223 = vmul.f32 %v2999, %v3188
      %v3224 = vmul.f32 %v3000, %v3190
      %v3225 = vmul.f32 %v3001, %v3192
      %v3226 = vmul.f32 %v3002, %v3194
      %3227 = vxpose.xlu0.b32.start [1/16] %v3195, 128
      %3228 = vxpose.xlu0.b32.cont [2/16] %v3196, 128
      %3229 = vxpose.xlu0.b32.cont [3/16] %v3197, 128
      %3230 = vxpose.xlu0.b32.cont [4/16] %v3198, 128
      %3231 = vxpose.xlu0.b32.cont [5/16] %v3199, 128
      %3232 = vxpose.xlu0.b32.cont [6/16] %v3200, 128
      %3233 = vxpose.xlu0.b32.cont [7/16] %v3201, 128
      %3234 = vxpose.xlu0.b32.cont [8/16] %v3202, 128
      %3235 = vxpose.xlu0.b32.cont [9/16] %v3203, 128
      %3236 = vxpose.xlu0.b32.cont [10/16] %v3204, 128
      %3237 = vxpose.xlu0.b32.cont [11/16] %v3205, 128
      %3238 = vxpose.xlu0.b32.cont [12/16] %v3206, 128
      %3239 = vxpose.xlu0.b32.cont [13/16] %v3207, 128
      %3240 = vxpose.xlu0.b32.cont [14/16] %v3208, 128
      %3241 = vxpose.xlu0.b32.cont [15/16] %v3209, 128
      %3242 = vxpose.xlu0.b32.end [16/16] %v3210, 128
      %v3243 = vpop.trf.xlu0
      %v3244 = vpop.trf.xlu0
      %v3245 = vpop.trf.xlu0
      %v3246 = vpop.trf.xlu0
      %v3247 = vpop.trf.xlu0
      %v3248 = vpop.trf.xlu0
      %v3249 = vpop.trf.xlu0
      %v3250 = vpop.trf.xlu0
      %v3251 = vpop.trf.xlu0
      %v3252 = vpop.trf.xlu0
      %v3253 = vpop.trf.xlu0
      %v3254 = vpop.trf.xlu0
      %v3255 = vpop.trf.xlu0
      %v3256 = vpop.trf.xlu0
      %v3257 = vpop.trf.xlu0
      %v3258 = vpop.trf.xlu0
      %3259 = vxpose.xlu0.b32.start [1/16] %v3211, 128
      %3260 = vxpose.xlu0.b32.cont [2/16] %v3212, 128
      %3261 = vxpose.xlu0.b32.cont [3/16] %v3213, 128
      %3262 = vxpose.xlu0.b32.cont [4/16] %v3214, 128
      %3263 = vxpose.xlu0.b32.cont [5/16] %v3215, 128
      %3264 = vxpose.xlu0.b32.cont [6/16] %v3216, 128
      %3265 = vxpose.xlu0.b32.cont [7/16] %v3217, 128
      %3266 = vxpose.xlu0.b32.cont [8/16] %v3218, 128
      %3267 = vxpose.xlu0.b32.cont [9/16] %v3219, 128
      %3268 = vxpose.xlu0.b32.cont [10/16] %v3220, 128
      %3269 = vxpose.xlu0.b32.cont [11/16] %v3221, 128
      %3270 = vxpose.xlu0.b32.cont [12/16] %v3222, 128
      %3271 = vxpose.xlu0.b32.cont [13/16] %v3223, 128
      %3272 = vxpose.xlu0.b32.cont [14/16] %v3224, 128
      %3273 = vxpose.xlu0.b32.cont [15/16] %v3225, 128
      %3274 = vxpose.xlu0.b32.end [16/16] %v3226, 128
      %v3275 = vpop.trf.xlu0
      %v3276 = vpop.trf.xlu0
      %v3277 = vpop.trf.xlu0
      %v3278 = vpop.trf.xlu0
      %v3279 = vpop.trf.xlu0
      %v3280 = vpop.trf.xlu0
      %v3281 = vpop.trf.xlu0
      %v3282 = vpop.trf.xlu0
      %v3283 = vpop.trf.xlu0
      %v3284 = vpop.trf.xlu0
      %v3285 = vpop.trf.xlu0
      %v3286 = vpop.trf.xlu0
      %v3287 = vpop.trf.xlu0
      %v3288 = vpop.trf.xlu0
      %v3289 = vpop.trf.xlu0
      %v3290 = vpop.trf.xlu0
      %3291 = vst [vmem:[%s170] sm:$0xff] %v3243
      %3292 = vst [vmem:[%s170 + $0x8] sm:$0xff] %v3275
      %3293 = vst [vmem:[%s170 + $0x10] sm:$0xff] %v3244
      %3294 = vst [vmem:[%s170 + $0x18] sm:$0xff] %v3276
      %3295 = vst [vmem:[%s170 + $0x20] sm:$0xff] %v3245
      %3296 = vst [vmem:[%s170 + $0x28] sm:$0xff] %v3277
      %3297 = vst [vmem:[%s170 + $0x30] sm:$0xff] %v3246
      %3298 = vst [vmem:[%s170 + $0x38] sm:$0xff] %v3278
      %p3299 = scmp.lt.s32.totalorder %s14, 1
      %s3300 = scalar_select %p3299, %s14, 1
      %s3301 = smul.addr %s3300, 8
      %s3302 = smul.addr %s3301, 8
      %s3303 = scalar_lea.vmem %s3, %s3302
      // Predicated region
      $region33: #{conv_norm_act.1} parent=31 // pred_check
        %p3304 = pneg %p100
      $region34: #{conv_norm_act.1} parent=31 // pred_check_branch
        %3306 = sbr.rel (%p3304) target = $region36
      $region35: #{conv_norm_act.1} parent=31 // pred_region
        _
      $region36: #{conv_norm_act.1} parent=31 // pred_fallthru
        _
    $region32: #{conv_norm_act.1} parent=5 // pred_fallthru
      _
    %p3307 = scmp.le.s32.totalorder 2, %s9
    // Predicated region
    $region37: #{conv_norm_act.1} parent=5 // pred_check
      %p3308 = pneg %p3307
    $region38: #{conv_norm_act.1} parent=5 // pred_check_branch
      %3310 = sbr.rel (%p3308) target = $region40
    $region39: #{conv_norm_act.1} parent=5 // pred_region
      %s3311 = ssub.s32 %s9, 2
      // Predicated region
      $region41: #{conv_norm_act.1} parent=39 // pred_check
        %p3312 = pneg %p106
      $region42: #{conv_norm_act.1} parent=39 // pred_check_branch
        %3314 = sbr.rel (%p3312) target = $region44
      $region43: #{conv_norm_act.1} parent=39 // pred_region
        %p3315 = scmp.lt.s32.totalorder %s15, 1
        %s3316 = scalar_select %p3315, %s15, 1
        %s3317 = smul.addr %s3316, 8
        %s3318 = smul.addr %s3317, 8
        %s3319 = scalar_lea.vmem %s3, %s3318
      $region44: #{conv_norm_act.1} parent=39 // pred_fallthru
        _
    $region40: #{conv_norm_act.1} parent=5 // pred_fallthru
      _
  $region6: #{conv_norm_act.1} parent=0 // loop_footer
    %s13 = sadd.s32 1, %s9
  $region7: #{conv_norm_act.1} parent=0 // loop_footer_branch
    %8 = sbr.rel target = $region3
  $region8: #{conv_norm_act.1} parent=0 // loop_exit
    _

</llo_original>
